<compile_context>
chip_gen: v6e
topology: v6e:2x2x1
jax: 0.10.0
libtpu: 0.0.40
codegen_flags: <defaults>
</compile_context>

<pallas_src>
import functools
import math

import numpy as np
import jax
import jax.numpy as jnp
from jax.experimental import pallas as pl
from jax.experimental.pallas import tpu as pltpu

NEG_SLOPE = 0.01  # nn.LeakyReLU() default


def decoder_cnn_kernel(z_ref, wfc_ref, bfc_ref,
                       w1_ref, b1_ref, w2_ref, b2_ref, w3_ref, b3_ref,
                       out_ref, *, seq_len):
    R = z_ref.shape[0]          # rows in this block (= TB * seq_len)
    S = seq_len

    # fc + LeakyReLU  (z block is already flattened to (R, latent_dim))
    h = jnp.dot(z_ref[...], wfc_ref[...],
                preferred_element_type=jnp.float32) + bfc_ref[...]
    h = jnp.where(h > 0, h, NEG_SLOPE * h)

    # Per-row boundary masks (position of each row inside its own sequence).
    # Built once, reused by all three conv layers.  Rows whose neighbour lies
    # in a different sequence get a zero contribution == per-sequence padding.
    pos = jax.lax.broadcasted_iota(jnp.int32, (R, 1), 0) % S
    m_prev = pos >= 1          # valid left neighbour within the sequence
    m_next = pos <= S - 2      # valid right neighbour within the sequence

    def conv_k3(x, w_ref, b_ref):
        # x: (R, Cin); w_ref: (3, Cin, Cout) with w[k] = W_torch[:, :, k].T
        # Shift-after-matmul: per-row linear maps commute with row shifts/masks,
        # so this is exactly Conv1d(k=3, pad=1) applied per sequence.
        u0 = jnp.dot(x, w_ref[0], preferred_element_type=jnp.float32)
        u1 = jnp.dot(x, w_ref[1], preferred_element_type=jnp.float32)
        u2 = jnp.dot(x, w_ref[2], preferred_element_type=jnp.float32)
        y = (jnp.where(m_prev, pltpu.roll(u0, 1, axis=0), 0.0)      # x[s-1]@W0
             + u1                                                    # x[s]  @W1
             + jnp.where(m_next, pltpu.roll(u2, R - 1, axis=0), 0.0))  # x[s+1]@W2
        return y + b_ref[...]

    # Three Conv1d(k=3, pad=1) layers, no activation in between (matches forward).
    h = conv_k3(h, w1_ref, b1_ref)
    h = conv_k3(h, w2_ref, b2_ref)
    h = conv_k3(h, w3_ref, b3_ref)   # Cout zero-padded to 128 for lane-dense store

    out_ref[...] = h.astype(out_ref.dtype)


def decoder_cnn_forward(z, params, *, rows_per_block=2048):
    """z: (B, S, latent_dim) float32 -> (B, S, output_size) float32."""
    B, S, L = z.shape
    Cout = params["b3"].shape[-1]
    CP = ((Cout + 127) // 128) * 128          # lane-dense padded output width

    # Pack TB whole sequences per grid step (~rows_per_block rows/step).
    TB = max(1, min(B, rows_per_block // max(S, 1)))
    if TB >= B and B >= 2:
        TB = pl.cdiv(B, 2)                    # keep grid >= 2 for v7x's 2 TCs
    # Keep the row-block sublane-aligned: (TB*S) % 8 == 0, else use full batch.
    step = 8 // math.gcd(S, 8)
    if TB % step != 0:
        TB = (TB // step) * step or B
    nb = pl.cdiv(B, TB)
    R = TB * S

    # Host-side flatten (layout-free for a contiguous row-major array); avoids
    # per-step in-kernel relayouts when S is not a multiple of 8.
    z2 = z.reshape(B * S, L)

    # Zero-pad the last conv so the kernel's output slab is 128 lanes wide.
    w3, b3 = params["w3"], params["b3"]
    if CP != Cout:
        w3 = jnp.pad(w3, ((0, 0), (0, 0), (0, CP - Cout)))
        b3 = jnp.pad(b3, ((0, 0), (0, CP - Cout)))

    def const_spec(shape):
        nd = len(shape)
        return pl.BlockSpec(shape, lambda i, _nd=nd: (0,) * _nd)

    kernel = functools.partial(decoder_cnn_kernel, seq_len=S)

    out = pl.pallas_call(
        kernel,
        out_shape=jax.ShapeDtypeStruct((B * S, CP), jnp.float32),
        grid_spec=pltpu.PrefetchScalarGridSpec(
            num_scalar_prefetch=0,
            grid=(nb,),
            in_specs=[
                pl.BlockSpec((R, L), lambda i: (i, 0)),
                const_spec(params["wfc"].shape),
                const_spec(params["bfc"].shape),
                const_spec(params["w1"].shape),
                const_spec(params["b1"].shape),
                const_spec(params["w2"].shape),
                const_spec(params["b2"].shape),
                const_spec(w3.shape),
                const_spec(b3.shape),
            ],
            out_specs=pl.BlockSpec((R, CP), lambda i: (i, 0)),
        ),
        compiler_params=pltpu.CompilerParams(
            dimension_semantics=("parallel",)),
    )(z2, params["wfc"], params["bfc"],
      params["w1"], params["b1"], params["w2"], params["b2"], w3, b3)

    # Slice off the lane padding and restore (B, S, Cout).
    return out[:, :Cout].reshape(B, S, Cout)


def init_params(key, latent_dim, output_size):
    """Deterministic synthetic parameters (shapes match the nn.Module)."""
    ks = jax.random.split(key, 8)

    def dense_w(k, fan_in, fan_out):
        return (jax.random.normal(k, (fan_in, fan_out), jnp.float32)
                / np.sqrt(fan_in)).astype(jnp.float32)

    def conv_w(k, cin, cout):
        # stored as (3, Cin, Cout) == W_torch[:, :, k].T stacked over k
        return (jax.random.normal(k, (3, cin, cout), jnp.float32)
                / np.sqrt(3 * cin)).astype(jnp.float32)

    return {
        "wfc": dense_w(ks[0], latent_dim, 128),
        "bfc": 0.01 * jax.random.normal(ks[1], (1, 128), jnp.float32),
        "w1": conv_w(ks[2], 128, 64),
        "b1": 0.01 * jax.random.normal(ks[3], (1, 64), jnp.float32),
        "w2": conv_w(ks[4], 64, 32),
        "b2": 0.01 * jax.random.normal(ks[5], (1, 32), jnp.float32),
        "w3": conv_w(ks[6], 32, output_size),
        "b3": 0.01 * jax.random.normal(ks[7], (1, output_size), jnp.float32),
    }


def reference_forward(z, p):
    """Pure-JAX reference of the same math (channels-last), high precision."""
    hp = jax.lax.Precision.HIGHEST
    h = jnp.einsum("bsl,lc->bsc", z, p["wfc"], precision=hp) + p["bfc"][0]
    h = jnp.where(h > 0, h, NEG_SLOPE * h)

    def conv(x, w, b):
        xp = jnp.pad(x, ((0, 0), (1, 1), (0, 0)))
        y = (jnp.einsum("bsi,io->bso", xp[:, :-2], w[0], precision=hp) +
             jnp.einsum("bsi,io->bso", xp[:, 1:-1], w[1], precision=hp) +
             jnp.einsum("bsi,io->bso", xp[:, 2:], w[2], precision=hp))
        return y + b[0]

    h = conv(h, p["w1"], p["b1"])
    h = conv(h, p["w2"], p["b2"])
    h = conv(h, p["w3"], p["b3"])
    return h


if __name__ == "__main__":
    # Small demo shapes: B=50 exercises the TB-packing (TB=25, grid=(2,));
    # S=8, latent=16, output_size=8 (lane-padded to 128 inside the kernel).
    B, S, LATENT, OUT = 50, 8, 16, 8

    key = jax.random.PRNGKey(0)
    kz, kp = jax.random.split(key)
    z = jax.random.normal(kz, (B, S, LATENT), jnp.float32)
    params = init_params(kp, LATENT, OUT)

    out = jax.block_until_ready(decoder_cnn_forward(z, params))

    ref = jax.block_until_ready(reference_forward(z, params))
    assert out.shape == (B, S, OUT), out.shape
    # Tolerance accounts for the TPU MXU's default f32 matmul precision
    # (bf16-pass arithmetic) relative to the HIGHEST-precision reference.
    np.testing.assert_allclose(np.asarray(out), np.asarray(ref),
                               rtol=2e-2, atol=2e-2)

    print("KERNEL_OK")
</pallas_src>

<mosaic_0001>
module attributes {stable_mosaic.version = 11 : i64} {
  func.func @decoder_cnn_kernel(%arg0: i32, %arg1: memref<200x16xf32, #tpu.memory_space<vmem>>, %arg2: memref<16x128xf32, #tpu.memory_space<vmem>>, %arg3: memref<1x128xf32, #tpu.memory_space<vmem>>, %arg4: memref<3x128x64xf32, #tpu.memory_space<vmem>>, %arg5: memref<1x64xf32, #tpu.memory_space<vmem>>, %arg6: memref<3x64x32xf32, #tpu.memory_space<vmem>>, %arg7: memref<1x32xf32, #tpu.memory_space<vmem>>, %arg8: memref<3x32x128xf32, #tpu.memory_space<vmem>>, %arg9: memref<1x128xf32, #tpu.memory_space<vmem>>, %arg10: memref<200x128xf32, #tpu.memory_space<vmem>>) attributes {dimension_semantics = [#tpu.dimension_semantics<parallel>], iteration_bounds = array<i64: 2>, scalar_prefetch = 0 : i64, scratch_operands = 0 : i64, tpu.core_type = #tpu.core_type<tc>, window_params = [{transform_indices = @transform_0, window_bounds = array<i64: 200, 16>}, {pipeline_mode = #tpu.pipeline_mode<synchronous>, transform_indices = @transform_1, window_bounds = array<i64: 16, 128>}, {pipeline_mode = #tpu.pipeline_mode<synchronous>, transform_indices = @transform_2, window_bounds = array<i64: 1, 128>}, {pipeline_mode = #tpu.pipeline_mode<synchronous>, transform_indices = @transform_3, window_bounds = array<i64: 3, 128, 64>}, {pipeline_mode = #tpu.pipeline_mode<synchronous>, transform_indices = @transform_4, window_bounds = array<i64: 1, 64>}, {pipeline_mode = #tpu.pipeline_mode<synchronous>, transform_indices = @transform_5, window_bounds = array<i64: 3, 64, 32>}, {pipeline_mode = #tpu.pipeline_mode<synchronous>, transform_indices = @transform_6, window_bounds = array<i64: 1, 32>}, {pipeline_mode = #tpu.pipeline_mode<synchronous>, transform_indices = @transform_7, window_bounds = array<i64: 3, 32, 128>}, {pipeline_mode = #tpu.pipeline_mode<synchronous>, transform_indices = @transform_8, window_bounds = array<i64: 1, 128>}, {transform_indices = @transform_9, window_bounds = array<i64: 200, 128>}]} {
    %c0 = arith.constant 0 : index
    %c0_0 = arith.constant 0 : index
    %0 = vector.load %arg1[%c0, %c0_0] : memref<200x16xf32, #tpu.memory_space<vmem>>, vector<200x16xf32>
    %c0_1 = arith.constant 0 : index
    %c0_2 = arith.constant 0 : index
    %1 = vector.load %arg2[%c0_1, %c0_2] : memref<16x128xf32, #tpu.memory_space<vmem>>, vector<16x128xf32>
    %cst = arith.constant dense<0.000000e+00> : vector<200x128xf32>
    %2 = tpu.matmul %0, %1, %cst {dimension_numbers = #tpu.dot_dimension_numbers<[1], [0], [0], [1], [0, 0, 1, 1], [], []>} : vector<200x16xf32>, vector<16x128xf32>, vector<200x128xf32> -> vector<200x128xf32>
    %c0_3 = arith.constant 0 : index
    %c0_4 = arith.constant 0 : index
    %3 = vector.load %arg3[%c0_3, %c0_4] : memref<1x128xf32, #tpu.memory_space<vmem>>, vector<1x128xf32>
    %4 = vector.broadcast %3 : vector<1x128xf32> to vector<200x128xf32>
    %5 = arith.addf %2, %4 : vector<200x128xf32>
    %cst_5 = arith.constant 0.000000e+00 : f32
    %6 = vector.broadcast %cst_5 : f32 to vector<200x128xf32>
    %7 = arith.cmpf ogt, %5, %6 : vector<200x128xf32>
    %cst_6 = arith.constant 0.00999999977 : f32
    %8 = vector.broadcast %cst_6 : f32 to vector<200x128xf32>
    %9 = arith.mulf %8, %5 : vector<200x128xf32>
    %10 = arith.select %7, %5, %9 : vector<200x128xi1>, vector<200x128xf32>
    %11 = tpu.iota {dimensions = array<i32: 0>} : vector<200x1xi32>
    %c8_i32 = arith.constant 8 : i32
    %c0_i32 = arith.constant 0 : i32
    %12 = arith.cmpi eq, %c8_i32, %c0_i32 : i32
    %c1_i32 = arith.constant 1 : i32
    %13 = arith.select %12, %c1_i32, %c8_i32 : i32
    %14 = vector.broadcast %13 : i32 to vector<200x1xi32>
    %15 = arith.remsi %11, %14 : vector<200x1xi32>
    %c0_i32_7 = arith.constant 0 : i32
    %16 = vector.broadcast %c0_i32_7 : i32 to vector<200x1xi32>
    %17 = arith.cmpi ne, %15, %16 : vector<200x1xi32>
    %c0_i32_8 = arith.constant 0 : i32
    %18 = vector.broadcast %c0_i32_8 : i32 to vector<200x1xi32>
    %19 = arith.cmpi slt, %15, %18 : vector<200x1xi32>
    %c0_i32_9 = arith.constant 0 : i32
    %20 = arith.cmpi slt, %13, %c0_i32_9 : i32
    %21 = vector.broadcast %20 : i1 to vector<200x1xi1>
    %22 = vector.broadcast %21 : vector<200x1xi1> to vector<200x1xi1>
    %23 = arith.xori %19, %22 : vector<200x1xi1>
    %24 = arith.andi %23, %17 : vector<200x1xi1>
    %25 = vector.broadcast %13 : i32 to vector<200x1xi32>
    %26 = arith.addi %15, %25 : vector<200x1xi32>
    %27 = arith.select %24, %26, %15 : vector<200x1xi1>, vector<200x1xi32>
    %c1_i32_10 = arith.constant 1 : i32
    %28 = vector.broadcast %c1_i32_10 : i32 to vector<200x1xi32>
    %29 = arith.cmpi sge, %27, %28 : vector<200x1xi32>
    %c6_i32 = arith.constant 6 : i32
    %30 = vector.broadcast %c6_i32 : i32 to vector<200x1xi32>
    %31 = arith.cmpi sle, %27, %30 : vector<200x1xi32>
    %c0_11 = arith.constant 0 : index
    %c0_12 = arith.constant 0 : index
    %c0_13 = arith.constant 0 : index
    %32 = vector.load %arg4[%c0_11, %c0_12, %c0_13] : memref<3x128x64xf32, #tpu.memory_space<vmem>>, vector<1x128x64xf32>
    %33 = vector.shape_cast %32 : vector<1x128x64xf32> to vector<128x64xf32>
    %cst_14 = arith.constant dense<0.000000e+00> : vector<200x64xf32>
    %34 = tpu.matmul %10, %33, %cst_14 {dimension_numbers = #tpu.dot_dimension_numbers<[1], [0], [0], [1], [0, 0, 1, 1], [], []>} : vector<200x128xf32>, vector<128x64xf32>, vector<200x64xf32> -> vector<200x64xf32>
    %c1 = arith.constant 1 : index
    %c0_15 = arith.constant 0 : index
    %c0_16 = arith.constant 0 : index
    %35 = vector.load %arg4[%c1, %c0_15, %c0_16] : memref<3x128x64xf32, #tpu.memory_space<vmem>>, vector<1x128x64xf32>
    %36 = vector.shape_cast %35 : vector<1x128x64xf32> to vector<128x64xf32>
    %cst_17 = arith.constant dense<0.000000e+00> : vector<200x64xf32>
    %37 = tpu.matmul %10, %36, %cst_17 {dimension_numbers = #tpu.dot_dimension_numbers<[1], [0], [0], [1], [0, 0, 1, 1], [], []>} : vector<200x128xf32>, vector<128x64xf32>, vector<200x64xf32> -> vector<200x64xf32>
    %c2 = arith.constant 2 : index
    %c0_18 = arith.constant 0 : index
    %c0_19 = arith.constant 0 : index
    %38 = vector.load %arg4[%c2, %c0_18, %c0_19] : memref<3x128x64xf32, #tpu.memory_space<vmem>>, vector<1x128x64xf32>
    %39 = vector.shape_cast %38 : vector<1x128x64xf32> to vector<128x64xf32>
    %cst_20 = arith.constant dense<0.000000e+00> : vector<200x64xf32>
    %40 = tpu.matmul %10, %39, %cst_20 {dimension_numbers = #tpu.dot_dimension_numbers<[1], [0], [0], [1], [0, 0, 1, 1], [], []>} : vector<200x128xf32>, vector<128x64xf32>, vector<200x64xf32> -> vector<200x64xf32>
    %c1_i32_21 = arith.constant 1 : i32
    %41 = tpu.dynamic_rotate %34 by %c1_i32_21 dim 0 : vector<200x64xf32>, i32 -> vector<200x64xf32>
    %cst_22 = arith.constant 0.000000e+00 : f32
    %42 = vector.shape_cast %29 : vector<200x1xi1> to vector<200x1xi1>
    %43 = vector.broadcast %42 : vector<200x1xi1> to vector<200x64xi1>
    %44 = vector.broadcast %cst_22 : f32 to vector<200x64xf32>
    %45 = arith.select %43, %41, %44 : vector<200x64xi1>, vector<200x64xf32>
    %46 = arith.addf %45, %37 : vector<200x64xf32>
    %c199_i32 = arith.constant 199 : i32
    %47 = tpu.dynamic_rotate %40 by %c199_i32 dim 0 : vector<200x64xf32>, i32 -> vector<200x64xf32>
    %cst_23 = arith.constant 0.000000e+00 : f32
    %48 = vector.shape_cast %31 : vector<200x1xi1> to vector<200x1xi1>
    %49 = vector.broadcast %48 : vector<200x1xi1> to vector<200x64xi1>
    %50 = vector.broadcast %cst_23 : f32 to vector<200x64xf32>
    %51 = arith.select %49, %47, %50 : vector<200x64xi1>, vector<200x64xf32>
    %52 = arith.addf %46, %51 : vector<200x64xf32>
    %c0_24 = arith.constant 0 : index
    %c0_25 = arith.constant 0 : index
    %53 = vector.load %arg5[%c0_24, %c0_25] : memref<1x64xf32, #tpu.memory_space<vmem>>, vector<1x64xf32>
    %54 = vector.broadcast %53 : vector<1x64xf32> to vector<200x64xf32>
    %55 = arith.addf %52, %54 : vector<200x64xf32>
    %c0_26 = arith.constant 0 : index
    %c0_27 = arith.constant 0 : index
    %c0_28 = arith.constant 0 : index
    %56 = vector.load %arg6[%c0_26, %c0_27, %c0_28] : memref<3x64x32xf32, #tpu.memory_space<vmem>>, vector<1x64x32xf32>
    %57 = vector.shape_cast %56 : vector<1x64x32xf32> to vector<64x32xf32>
    %cst_29 = arith.constant dense<0.000000e+00> : vector<200x32xf32>
    %58 = tpu.matmul %55, %57, %cst_29 {dimension_numbers = #tpu.dot_dimension_numbers<[1], [0], [0], [1], [0, 0, 1, 1], [], []>} : vector<200x64xf32>, vector<64x32xf32>, vector<200x32xf32> -> vector<200x32xf32>
    %c1_30 = arith.constant 1 : index
    %c0_31 = arith.constant 0 : index
    %c0_32 = arith.constant 0 : index
    %59 = vector.load %arg6[%c1_30, %c0_31, %c0_32] : memref<3x64x32xf32, #tpu.memory_space<vmem>>, vector<1x64x32xf32>
    %60 = vector.shape_cast %59 : vector<1x64x32xf32> to vector<64x32xf32>
    %cst_33 = arith.constant dense<0.000000e+00> : vector<200x32xf32>
    %61 = tpu.matmul %55, %60, %cst_33 {dimension_numbers = #tpu.dot_dimension_numbers<[1], [0], [0], [1], [0, 0, 1, 1], [], []>} : vector<200x64xf32>, vector<64x32xf32>, vector<200x32xf32> -> vector<200x32xf32>
    %c2_34 = arith.constant 2 : index
    %c0_35 = arith.constant 0 : index
    %c0_36 = arith.constant 0 : index
    %62 = vector.load %arg6[%c2_34, %c0_35, %c0_36] : memref<3x64x32xf32, #tpu.memory_space<vmem>>, vector<1x64x32xf32>
    %63 = vector.shape_cast %62 : vector<1x64x32xf32> to vector<64x32xf32>
    %cst_37 = arith.constant dense<0.000000e+00> : vector<200x32xf32>
    %64 = tpu.matmul %55, %63, %cst_37 {dimension_numbers = #tpu.dot_dimension_numbers<[1], [0], [0], [1], [0, 0, 1, 1], [], []>} : vector<200x64xf32>, vector<64x32xf32>, vector<200x32xf32> -> vector<200x32xf32>
    %c1_i32_38 = arith.constant 1 : i32
    %65 = tpu.dynamic_rotate %58 by %c1_i32_38 dim 0 : vector<200x32xf32>, i32 -> vector<200x32xf32>
    %cst_39 = arith.constant 0.000000e+00 : f32
    %66 = vector.shape_cast %29 : vector<200x1xi1> to vector<200x1xi1>
    %67 = vector.broadcast %66 : vector<200x1xi1> to vector<200x32xi1>
    %68 = vector.broadcast %cst_39 : f32 to vector<200x32xf32>
    %69 = arith.select %67, %65, %68 : vector<200x32xi1>, vector<200x32xf32>
    %70 = arith.addf %69, %61 : vector<200x32xf32>
    %c199_i32_40 = arith.constant 199 : i32
    %71 = tpu.dynamic_rotate %64 by %c199_i32_40 dim 0 : vector<200x32xf32>, i32 -> vector<200x32xf32>
    %cst_41 = arith.constant 0.000000e+00 : f32
    %72 = vector.shape_cast %31 : vector<200x1xi1> to vector<200x1xi1>
    %73 = vector.broadcast %72 : vector<200x1xi1> to vector<200x32xi1>
    %74 = vector.broadcast %cst_41 : f32 to vector<200x32xf32>
    %75 = arith.select %73, %71, %74 : vector<200x32xi1>, vector<200x32xf32>
    %76 = arith.addf %70, %75 : vector<200x32xf32>
    %c0_42 = arith.constant 0 : index
    %c0_43 = arith.constant 0 : index
    %77 = vector.load %arg7[%c0_42, %c0_43] : memref<1x32xf32, #tpu.memory_space<vmem>>, vector<1x32xf32>
    %78 = vector.broadcast %77 : vector<1x32xf32> to vector<200x32xf32>
    %79 = arith.addf %76, %78 : vector<200x32xf32>
    %c0_44 = arith.constant 0 : index
    %c0_45 = arith.constant 0 : index
    %c0_46 = arith.constant 0 : index
    %80 = vector.load %arg8[%c0_44, %c0_45, %c0_46] : memref<3x32x128xf32, #tpu.memory_space<vmem>>, vector<1x32x128xf32>
    %81 = vector.shape_cast %80 : vector<1x32x128xf32> to vector<32x128xf32>
    %cst_47 = arith.constant dense<0.000000e+00> : vector<200x128xf32>
    %82 = tpu.matmul %79, %81, %cst_47 {dimension_numbers = #tpu.dot_dimension_numbers<[1], [0], [0], [1], [0, 0, 1, 1], [], []>} : vector<200x32xf32>, vector<32x128xf32>, vector<200x128xf32> -> vector<200x128xf32>
    %c1_48 = arith.constant 1 : index
    %c0_49 = arith.constant 0 : index
    %c0_50 = arith.constant 0 : index
    %83 = vector.load %arg8[%c1_48, %c0_49, %c0_50] : memref<3x32x128xf32, #tpu.memory_space<vmem>>, vector<1x32x128xf32>
    %84 = vector.shape_cast %83 : vector<1x32x128xf32> to vector<32x128xf32>
    %cst_51 = arith.constant dense<0.000000e+00> : vector<200x128xf32>
    %85 = tpu.matmul %79, %84, %cst_51 {dimension_numbers = #tpu.dot_dimension_numbers<[1], [0], [0], [1], [0, 0, 1, 1], [], []>} : vector<200x32xf32>, vector<32x128xf32>, vector<200x128xf32> -> vector<200x128xf32>
    %c2_52 = arith.constant 2 : index
    %c0_53 = arith.constant 0 : index
    %c0_54 = arith.constant 0 : index
    %86 = vector.load %arg8[%c2_52, %c0_53, %c0_54] : memref<3x32x128xf32, #tpu.memory_space<vmem>>, vector<1x32x128xf32>
    %87 = vector.shape_cast %86 : vector<1x32x128xf32> to vector<32x128xf32>
    %cst_55 = arith.constant dense<0.000000e+00> : vector<200x128xf32>
    %88 = tpu.matmul %79, %87, %cst_55 {dimension_numbers = #tpu.dot_dimension_numbers<[1], [0], [0], [1], [0, 0, 1, 1], [], []>} : vector<200x32xf32>, vector<32x128xf32>, vector<200x128xf32> -> vector<200x128xf32>
    %c1_i32_56 = arith.constant 1 : i32
    %89 = tpu.dynamic_rotate %82 by %c1_i32_56 dim 0 : vector<200x128xf32>, i32 -> vector<200x128xf32>
    %cst_57 = arith.constant 0.000000e+00 : f32
    %90 = vector.shape_cast %29 : vector<200x1xi1> to vector<200x1xi1>
    %91 = vector.broadcast %90 : vector<200x1xi1> to vector<200x128xi1>
    %92 = vector.broadcast %cst_57 : f32 to vector<200x128xf32>
    %93 = arith.select %91, %89, %92 : vector<200x128xi1>, vector<200x128xf32>
    %94 = arith.addf %93, %85 : vector<200x128xf32>
    %c199_i32_58 = arith.constant 199 : i32
    %95 = tpu.dynamic_rotate %88 by %c199_i32_58 dim 0 : vector<200x128xf32>, i32 -> vector<200x128xf32>
    %cst_59 = arith.constant 0.000000e+00 : f32
    %96 = vector.shape_cast %31 : vector<200x1xi1> to vector<200x1xi1>
    %97 = vector.broadcast %96 : vector<200x1xi1> to vector<200x128xi1>
    %98 = vector.broadcast %cst_59 : f32 to vector<200x128xf32>
    %99 = arith.select %97, %95, %98 : vector<200x128xi1>, vector<200x128xf32>
    %100 = arith.addf %94, %99 : vector<200x128xf32>
    %c0_60 = arith.constant 0 : index
    %c0_61 = arith.constant 0 : index
    %101 = vector.load %arg9[%c0_60, %c0_61] : memref<1x128xf32, #tpu.memory_space<vmem>>, vector<1x128xf32>
    %102 = vector.broadcast %101 : vector<1x128xf32> to vector<200x128xf32>
    %103 = arith.addf %100, %102 : vector<200x128xf32>
    %c0_62 = arith.constant 0 : index
    %c0_63 = arith.constant 0 : index
    %104 = vector.load %arg10[%c0_62, %c0_63] : memref<200x128xf32, #tpu.memory_space<vmem>>, vector<200x128xf32>
    tpu.vector_store %arg10[%c0_62, %c0_63], %103 {strides = array<i32>} : memref<200x128xf32, #tpu.memory_space<vmem>>, vector<200x128xf32>,
    return
  }
  func.func @transform_0(%arg0: i32) -> (i32, i32) {
    %c0_i32 = arith.constant 0 : i32
    %c0_i32_0 = arith.constant 0 : i32
    return %arg0, %c0_i32 : i32, i32
  }
  func.func @transform_1(%arg0: i32) -> (i32, i32) {
    %c0_i32 = arith.constant 0 : i32
    %c0_i32_0 = arith.constant 0 : i32
    %c0_i32_1 = arith.constant 0 : i32
    return %c0_i32, %c0_i32_0 : i32, i32
  }
  func.func @transform_2(%arg0: i32) -> (i32, i32) {
    %c0_i32 = arith.constant 0 : i32
    %c0_i32_0 = arith.constant 0 : i32
    %c0_i32_1 = arith.constant 0 : i32
    return %c0_i32, %c0_i32_0 : i32, i32
  }
  func.func @transform_3(%arg0: i32) -> (i32, i32, i32) {
    %c0_i32 = arith.constant 0 : i32
    %c0_i32_0 = arith.constant 0 : i32
    %c0_i32_1 = arith.constant 0 : i32
    %c0_i32_2 = arith.constant 0 : i32
    return %c0_i32, %c0_i32_0, %c0_i32_1 : i32, i32, i32
  }
  func.func @transform_4(%arg0: i32) -> (i32, i32) {
    %c0_i32 = arith.constant 0 : i32
    %c0_i32_0 = arith.constant 0 : i32
    %c0_i32_1 = arith.constant 0 : i32
    return %c0_i32, %c0_i32_0 : i32, i32
  }
  func.func @transform_5(%arg0: i32) -> (i32, i32, i32) {
    %c0_i32 = arith.constant 0 : i32
    %c0_i32_0 = arith.constant 0 : i32
    %c0_i32_1 = arith.constant 0 : i32
    %c0_i32_2 = arith.constant 0 : i32
    return %c0_i32, %c0_i32_0, %c0_i32_1 : i32, i32, i32
  }
  func.func @transform_6(%arg0: i32) -> (i32, i32) {
    %c0_i32 = arith.constant 0 : i32
    %c0_i32_0 = arith.constant 0 : i32
    %c0_i32_1 = arith.constant 0 : i32
    return %c0_i32, %c0_i32_0 : i32, i32
  }
  func.func @transform_7(%arg0: i32) -> (i32, i32, i32) {
    %c0_i32 = arith.constant 0 : i32
    %c0_i32_0 = arith.constant 0 : i32
    %c0_i32_1 = arith.constant 0 : i32
    %c0_i32_2 = arith.constant 0 : i32
    return %c0_i32, %c0_i32_0, %c0_i32_1 : i32, i32, i32
  }
  func.func @transform_8(%arg0: i32) -> (i32, i32) {
    %c0_i32 = arith.constant 0 : i32
    %c0_i32_0 = arith.constant 0 : i32
    %c0_i32_1 = arith.constant 0 : i32
    return %c0_i32, %c0_i32_0 : i32, i32
  }
  func.func @transform_9(%arg0: i32) -> (i32, i32) {
    %c0_i32 = arith.constant 0 : i32
    %c0_i32_0 = arith.constant 0 : i32
    return %arg0, %c0_i32 : i32, i32
  }
}

</mosaic_0001>

<llo_original>
// kernel: tpu_custom_call.1
$region0: #{tpu_custom_call.1}
  #allocation0 [shape = 'u32[]', space=smem, size = 0x4, offset = 0x4, fixed_abs, tag = 'smem constant byte address 0x4 - core index']
  #allocation1 [shape = 'u32[144,128]{1,0:T(1,128)}', space=vmem, size = 0x12000, scoped, tag = 'internal scratch']
  %s0 = inlined_call_operand.vmem [shape: f32[400,16], index: 0, kind: input, shape index: {}]
  %s1 = inlined_call_operand.vmem [shape: f32[16,128], index: 1, kind: input, shape index: {}]
  %s2 = inlined_call_operand.vmem [shape: f32[1,128], index: 2, kind: input, shape index: {}]
  %s3 = inlined_call_operand.vmem [shape: f32[3,128,64], index: 3, kind: input, shape index: {}]
  %s4 = inlined_call_operand.vmem [shape: f32[1,64], index: 4, kind: input, shape index: {}]
  %s5 = inlined_call_operand.vmem [shape: f32[3,64,32], index: 5, kind: input, shape index: {}]
  %s6 = inlined_call_operand.vmem [shape: f32[1,32], index: 6, kind: input, shape index: {}]
  %s7 = inlined_call_operand.vmem [shape: f32[3,32,128], index: 7, kind: input, shape index: {}]
  %s8 = inlined_call_operand.vmem [shape: f32[1,128], index: 8, kind: input, shape index: {}]
  %s9 = inlined_call_operand.hbm [shape: f32[400,128], index: 9, kind: output, shape index: {}]
  %s10 = sld [smem:[#allocation0]]
  $region69: #{tpu_custom_call.1} parent=0
    _
  %s12 = ssub.s32 1, %s10
  %s13 = scalar_select 0, %s12, %s10
  $region1: #{tpu_custom_call.1} parent=0
    #allocation2 [shape = 'u8[204800]{0}', space=vmem, size = 0x32000, scoped, tag = 'output window, operand 0']
    #allocation3 [shape = 's32[2]{0}', space=sflag, size = 0x8, scoped, tag = 'scoped memory for tpu_custom_call.1']
    %14 = vsyncpa [#allocation3], 0
    %s15 = scalar_lea.sflag [#allocation3], 1
    %16 = vsyncpa %s15, 0
    loop: start=0, step=1, limit=4
    $region2: #{tpu_custom_call.1} parent=1 // loop_pre_header
      _
    $region3: #{tpu_custom_call.1} parent=1 // loop_header
      %s18 = sphi 0, %s22
      %p19 = scmp.ge.s32.totalorder %s18, 4
      %s28 = sphi 0, %s30
      %s31 = sphi 0, %s28
      %s32 = sphi 0, %s31
      %s48 = sphi 0, %s32
      %s52 = sphi 0, %s52
      %s54 = sphi 0, %s52
      %s55 = sphi 0, %s54
      %s69 = sphi 0, %s55
      %s73 = sphi 0, %s73
      %s75 = sphi 0, %s73
      %s76 = sphi 0, %s75
      %s90 = sphi 0, %s76
      %s94 = sphi 0, %s94
      %s96 = sphi 0, %s94
      %s97 = sphi 0, %s96
      %s111 = sphi 0, %s97
      %s115 = sphi 0, %s115
      %s117 = sphi 0, %s115
      %s118 = sphi 0, %s117
      %s132 = sphi 0, %s118
      %s136 = sphi 0, %s136
      %s138 = sphi 0, %s136
      %s139 = sphi 0, %s138
      %s153 = sphi 0, %s139
      %s157 = sphi 0, %s157
      %s159 = sphi 0, %s157
      %s160 = sphi 0, %s159
      %s174 = sphi 0, %s160
      %s178 = sphi 0, %s178
      %s180 = sphi 0, %s178
      %s181 = sphi 0, %s180
      %s195 = sphi 0, %s181
      %s199 = sphi 0, %s199
      %s201 = sphi 0, %s199
      %s202 = sphi 0, %s201
      %s216 = sphi 0, %s202
      %s222 = sphi 0, %s224
      %s225 = sphi 0, %s222
      %s226 = sphi 0, %s225
      %s242 = sphi 0, %s226
    $region4: #{tpu_custom_call.1} parent=1 // loop_header_branch
      %21 = sbr.rel (%p19) target = $region8
    $region5: #{tpu_custom_call.1} parent=1 // loop_body
      %s23 = ssub.s32 %s18, 1
      %s24 = ssub.s32 %s18, 2
      %s25 = sadd.s32 %s18, 1
      %s26 = ssub.s32 %s18, %s25
      %p27 = scmp.eq.s32.totalorder %s26, 0
      %s29 = sadd.s32 %s28, 1
      %s30 = scalar_select %p27, %s28, %s29
      %p33 = pneg %p27
      %p34 = scmp.eq.s32.totalorder %s18, 1
      %p35 = por %p33, %p34
      %p36 = scmp.ne.s32.totalorder %s28, %s31
      %p37 = scmp.eq.s32.totalorder %s18, 0
      %p38 = por %p36, %p37
      %p39 = scmp.ne.s32.totalorder %s28, %s31
      %p40 = scmp.eq.s32.totalorder %s23, 1
      %p41 = por %p39, %p40
      %p42 = scmp.ne.s32.totalorder %s31, %s32
      %p43 = scmp.eq.s32.totalorder %s23, 0
      %p44 = por %p42, %p43
      %p45 = scmp.ne.s32.totalorder %s31, %s32
      %p46 = scmp.eq.s32.totalorder %s24, 1
      %p47 = por %p45, %p46
      %p49 = scmp.ne.s32.totalorder %s32, %s48
      %p50 = scmp.eq.s32.totalorder %s24, 0
      %p51 = por %p49, %p50
      %s53 = sadd.s32 %s52, 1
      %p56 = scmp.eq.s32.totalorder %s18, 1
      %p57 = scmp.ne.s32.totalorder %s52, %s54
      %p58 = scmp.eq.s32.totalorder %s18, 0
      %p59 = por %p57, %p58
      %p60 = scmp.ne.s32.totalorder %s52, %s54
      %p61 = scmp.eq.s32.totalorder %s23, 1
      %p62 = por %p60, %p61
      %p63 = scmp.ne.s32.totalorder %s54, %s55
      %p64 = scmp.eq.s32.totalorder %s23, 0
      %p65 = por %p63, %p64
      %p66 = scmp.ne.s32.totalorder %s54, %s55
      %p67 = scmp.eq.s32.totalorder %s24, 1
      %p68 = por %p66, %p67
      %p70 = scmp.ne.s32.totalorder %s55, %s69
      %p71 = scmp.eq.s32.totalorder %s24, 0
      %p72 = por %p70, %p71
      %s74 = sadd.s32 %s73, 1
      %p77 = scmp.eq.s32.totalorder %s18, 1
      %p78 = scmp.ne.s32.totalorder %s73, %s75
      %p79 = scmp.eq.s32.totalorder %s18, 0
      %p80 = por %p78, %p79
      %p81 = scmp.ne.s32.totalorder %s73, %s75
      %p82 = scmp.eq.s32.totalorder %s23, 1
      %p83 = por %p81, %p82
      %p84 = scmp.ne.s32.totalorder %s75, %s76
      %p85 = scmp.eq.s32.totalorder %s23, 0
      %p86 = por %p84, %p85
      %p87 = scmp.ne.s32.totalorder %s75, %s76
      %p88 = scmp.eq.s32.totalorder %s24, 1
      %p89 = por %p87, %p88
      %p91 = scmp.ne.s32.totalorder %s76, %s90
      %p92 = scmp.eq.s32.totalorder %s24, 0
      %p93 = por %p91, %p92
      %s95 = sadd.s32 %s94, 1
      %p98 = scmp.eq.s32.totalorder %s18, 1
      %p99 = scmp.ne.s32.totalorder %s94, %s96
      %p100 = scmp.eq.s32.totalorder %s18, 0
      %p101 = por %p99, %p100
      %p102 = scmp.ne.s32.totalorder %s94, %s96
      %p103 = scmp.eq.s32.totalorder %s23, 1
      %p104 = por %p102, %p103
      %p105 = scmp.ne.s32.totalorder %s96, %s97
      %p106 = scmp.eq.s32.totalorder %s23, 0
      %p107 = por %p105, %p106
      %p108 = scmp.ne.s32.totalorder %s96, %s97
      %p109 = scmp.eq.s32.totalorder %s24, 1
      %p110 = por %p108, %p109
      %p112 = scmp.ne.s32.totalorder %s97, %s111
      %p113 = scmp.eq.s32.totalorder %s24, 0
      %p114 = por %p112, %p113
      %s116 = sadd.s32 %s115, 1
      %p119 = scmp.eq.s32.totalorder %s18, 1
      %p120 = scmp.ne.s32.totalorder %s115, %s117
      %p121 = scmp.eq.s32.totalorder %s18, 0
      %p122 = por %p120, %p121
      %p123 = scmp.ne.s32.totalorder %s115, %s117
      %p124 = scmp.eq.s32.totalorder %s23, 1
      %p125 = por %p123, %p124
      %p126 = scmp.ne.s32.totalorder %s117, %s118
      %p127 = scmp.eq.s32.totalorder %s23, 0
      %p128 = por %p126, %p127
      %p129 = scmp.ne.s32.totalorder %s117, %s118
      %p130 = scmp.eq.s32.totalorder %s24, 1
      %p131 = por %p129, %p130
      %p133 = scmp.ne.s32.totalorder %s118, %s132
      %p134 = scmp.eq.s32.totalorder %s24, 0
      %p135 = por %p133, %p134
      %s137 = sadd.s32 %s136, 1
      %p140 = scmp.eq.s32.totalorder %s18, 1
      %p141 = scmp.ne.s32.totalorder %s136, %s138
      %p142 = scmp.eq.s32.totalorder %s18, 0
      %p143 = por %p141, %p142
      %p144 = scmp.ne.s32.totalorder %s136, %s138
      %p145 = scmp.eq.s32.totalorder %s23, 1
      %p146 = por %p144, %p145
      %p147 = scmp.ne.s32.totalorder %s138, %s139
      %p148 = scmp.eq.s32.totalorder %s23, 0
      %p149 = por %p147, %p148
      %p150 = scmp.ne.s32.totalorder %s138, %s139
      %p151 = scmp.eq.s32.totalorder %s24, 1
      %p152 = por %p150, %p151
      %p154 = scmp.ne.s32.totalorder %s139, %s153
      %p155 = scmp.eq.s32.totalorder %s24, 0
      %p156 = por %p154, %p155
      %s158 = sadd.s32 %s157, 1
      %p161 = scmp.eq.s32.totalorder %s18, 1
      %p162 = scmp.ne.s32.totalorder %s157, %s159
      %p163 = scmp.eq.s32.totalorder %s18, 0
      %p164 = por %p162, %p163
      %p165 = scmp.ne.s32.totalorder %s157, %s159
      %p166 = scmp.eq.s32.totalorder %s23, 1
      %p167 = por %p165, %p166
      %p168 = scmp.ne.s32.totalorder %s159, %s160
      %p169 = scmp.eq.s32.totalorder %s23, 0
      %p170 = por %p168, %p169
      %p171 = scmp.ne.s32.totalorder %s159, %s160
      %p172 = scmp.eq.s32.totalorder %s24, 1
      %p173 = por %p171, %p172
      %p175 = scmp.ne.s32.totalorder %s160, %s174
      %p176 = scmp.eq.s32.totalorder %s24, 0
      %p177 = por %p175, %p176
      %s179 = sadd.s32 %s178, 1
      %p182 = scmp.eq.s32.totalorder %s18, 1
      %p183 = scmp.ne.s32.totalorder %s178, %s180
      %p184 = scmp.eq.s32.totalorder %s18, 0
      %p185 = por %p183, %p184
      %p186 = scmp.ne.s32.totalorder %s178, %s180
      %p187 = scmp.eq.s32.totalorder %s23, 1
      %p188 = por %p186, %p187
      %p189 = scmp.ne.s32.totalorder %s180, %s181
      %p190 = scmp.eq.s32.totalorder %s23, 0
      %p191 = por %p189, %p190
      %p192 = scmp.ne.s32.totalorder %s180, %s181
      %p193 = scmp.eq.s32.totalorder %s24, 1
      %p194 = por %p192, %p193
      %p196 = scmp.ne.s32.totalorder %s181, %s195
      %p197 = scmp.eq.s32.totalorder %s24, 0
      %p198 = por %p196, %p197
      %s200 = sadd.s32 %s199, 1
      %p203 = scmp.eq.s32.totalorder %s18, 1
      %p204 = scmp.ne.s32.totalorder %s199, %s201
      %p205 = scmp.eq.s32.totalorder %s18, 0
      %p206 = por %p204, %p205
      %p207 = scmp.ne.s32.totalorder %s199, %s201
      %p208 = scmp.eq.s32.totalorder %s23, 1
      %p209 = por %p207, %p208
      %p210 = scmp.ne.s32.totalorder %s201, %s202
      %p211 = scmp.eq.s32.totalorder %s23, 0
      %p212 = por %p210, %p211
      %p213 = scmp.ne.s32.totalorder %s201, %s202
      %p214 = scmp.eq.s32.totalorder %s24, 1
      %p215 = por %p213, %p214
      %p217 = scmp.ne.s32.totalorder %s202, %s216
      %p218 = scmp.eq.s32.totalorder %s24, 0
      %p219 = por %p217, %p218
      %s220 = ssub.s32 %s18, %s25
      %p221 = scmp.eq.s32.totalorder %s220, 0
      %s223 = sadd.s32 %s222, 1
      %s224 = scalar_select %p221, %s222, %s223
      %p227 = pneg %p221
      %p228 = scmp.eq.s32.totalorder %s18, 1
      %p229 = por %p227, %p228
      %p230 = scmp.ne.s32.totalorder %s222, %s225
      %p231 = scmp.eq.s32.totalorder %s18, 0
      %p232 = por %p230, %p231
      %p233 = scmp.ne.s32.totalorder %s222, %s225
      %p234 = scmp.eq.s32.totalorder %s23, 1
      %p235 = por %p233, %p234
      %p236 = scmp.ne.s32.totalorder %s225, %s226
      %p237 = scmp.eq.s32.totalorder %s23, 0
      %p238 = por %p236, %p237
      %p239 = scmp.ne.s32.totalorder %s225, %s226
      %p240 = scmp.eq.s32.totalorder %s24, 1
      %p241 = por %p239, %p240
      %p243 = scmp.ne.s32.totalorder %s226, %s242
      %p244 = scmp.eq.s32.totalorder %s24, 0
      %p245 = por %p243, %p244
      %p246 = scmp.le.s32.totalorder 1, %s18
      %p247 = scmp.lt.s32.totalorder %s18, 3
      %p248 = pnand %p246, %p247
      %p249 = pneg %p248
      // Predicated region
      $region9: #{tpu_custom_call.1} parent=5 // pred_check
        _
      $region10: #{tpu_custom_call.1} parent=5 // pred_check_branch
        %251 = sbr.rel (%p248) target = $region12
      $region11: #{tpu_custom_call.1} parent=5 // pred_region
        %s252 = ssub.s32 %s18, 1
        // Predicated region
        $region13: #{tpu_custom_call.1} parent=11 // pred_check
          %p253 = pneg %p65
        $region14: #{tpu_custom_call.1} parent=11 // pred_check_branch
          %255 = sbr.rel (%p253) target = $region16
        $region15: #{tpu_custom_call.1} parent=11 // pred_region
          _
        $region16: #{tpu_custom_call.1} parent=11 // pred_fallthru
          _
        // Predicated region
        $region17: #{tpu_custom_call.1} parent=11 // pred_check
          %p256 = pneg %p86
        $region18: #{tpu_custom_call.1} parent=11 // pred_check_branch
          %258 = sbr.rel (%p256) target = $region20
        $region19: #{tpu_custom_call.1} parent=11 // pred_region
          _
        $region20: #{tpu_custom_call.1} parent=11 // pred_fallthru
          _
        // Predicated region
        $region21: #{tpu_custom_call.1} parent=11 // pred_check
          %p259 = pneg %p107
        $region22: #{tpu_custom_call.1} parent=11 // pred_check_branch
          %261 = sbr.rel (%p259) target = $region24
        $region23: #{tpu_custom_call.1} parent=11 // pred_region
          _
        $region24: #{tpu_custom_call.1} parent=11 // pred_fallthru
          _
        // Predicated region
        $region25: #{tpu_custom_call.1} parent=11 // pred_check
          %p262 = pneg %p128
        $region26: #{tpu_custom_call.1} parent=11 // pred_check_branch
          %264 = sbr.rel (%p262) target = $region28
        $region27: #{tpu_custom_call.1} parent=11 // pred_region
          _
        $region28: #{tpu_custom_call.1} parent=11 // pred_fallthru
          _
        // Predicated region
        $region29: #{tpu_custom_call.1} parent=11 // pred_check
          %p265 = pneg %p149
        $region30: #{tpu_custom_call.1} parent=11 // pred_check_branch
          %267 = sbr.rel (%p265) target = $region32
        $region31: #{tpu_custom_call.1} parent=11 // pred_region
          _
        $region32: #{tpu_custom_call.1} parent=11 // pred_fallthru
          _
        // Predicated region
        $region33: #{tpu_custom_call.1} parent=11 // pred_check
          %p268 = pneg %p170
        $region34: #{tpu_custom_call.1} parent=11 // pred_check_branch
          %270 = sbr.rel (%p268) target = $region36
        $region35: #{tpu_custom_call.1} parent=11 // pred_region
          _
        $region36: #{tpu_custom_call.1} parent=11 // pred_fallthru
          _
        // Predicated region
        $region37: #{tpu_custom_call.1} parent=11 // pred_check
          %p271 = pneg %p191
        $region38: #{tpu_custom_call.1} parent=11 // pred_check_branch
          %273 = sbr.rel (%p271) target = $region40
        $region39: #{tpu_custom_call.1} parent=11 // pred_region
          _
        $region40: #{tpu_custom_call.1} parent=11 // pred_fallthru
          _
        // Predicated region
        $region41: #{tpu_custom_call.1} parent=11 // pred_check
          %p274 = pneg %p212
        $region42: #{tpu_custom_call.1} parent=11 // pred_check_branch
          %276 = sbr.rel (%p274) target = $region44
        $region43: #{tpu_custom_call.1} parent=11 // pred_region
          _
        $region44: #{tpu_custom_call.1} parent=11 // pred_fallthru
          _
      $region12: #{tpu_custom_call.1} parent=5 // pred_fallthru
        _
      %p277 = scmp.lt.s32.totalorder %s18, 2
      // Predicated region
      $region45: #{tpu_custom_call.1} parent=5 // pred_check
        %p278 = pneg %p277
      $region46: #{tpu_custom_call.1} parent=5 // pred_check_branch
        %280 = sbr.rel (%p278) target = $region48
      $region47: #{tpu_custom_call.1} parent=5 // pred_region
        // Predicated region
        $region49: #{tpu_custom_call.1} parent=47 // pred_check
          %p281 = pneg %p38
        $region50: #{tpu_custom_call.1} parent=47 // pred_check_branch
          %283 = sbr.rel (%p281) target = $region52
        $region51: #{tpu_custom_call.1} parent=47 // pred_region
          %s284 = smul.u32 25, %s18
          %p285 = scmp.lt.s32.totalorder %s284, 49
          %s286 = scalar_select %p285, %s284, 49
          %s287 = smul.addr %s286, 8
          %s288 = scalar_lea.vmem %s0, %s287
          %s289 = smul.u32 25, %s18
        $region52: #{tpu_custom_call.1} parent=47 // pred_fallthru
          _
      $region48: #{tpu_custom_call.1} parent=5 // pred_fallthru
        _
      %p290 = scmp.le.s32.totalorder 1, %s18
      %p291 = scmp.lt.s32.totalorder %s18, 3
      %p292 = pnand %p290, %p291
      %p293 = pneg %p292
      // Predicated region
      $region53: #{tpu_custom_call.1} parent=5 // pred_check
        _
      $region54: #{tpu_custom_call.1} parent=5 // pred_check_branch
        %295 = sbr.rel (%p292) target = $region56
      $region55: #{tpu_custom_call.1} parent=5 // pred_region
        %s296 = ssub.s32 %s18, 1
        %s297 = smul.u32 25, %s23
        %p298 = scmp.lt.s32.totalorder %s297, 49
        %s299 = scalar_select %p298, %s297, 49
        %s300 = smul.addr %s299, 8
        %s301 = scalar_lea.vmem %s0, %s300
        %p302 = pneg %p44
        %p303 = pneg %p41
        %p304 = pneg %p65
        %p305 = pneg %p62
        %p306 = pneg %p86
        %p307 = pneg %p83
        %p308 = pneg %p107
        %p309 = pneg %p104
        %p310 = pneg %p128
        %p311 = pneg %p125
        %p312 = pneg %p149
        %p313 = pneg %p146
        %p314 = pneg %p170
        %p315 = pneg %p167
        %p316 = pneg %p191
        %p317 = pneg %p188
        %p318 = pneg %p212
        %p319 = pneg %p209
        %p320 = pneg %p238
        %p321 = pneg %p235
        %s322 = sand.u32 %s225, 1
        %s323 = scalar_lea.sflag [#allocation3], %s322
        %s324 = sand.u32 %s225, 1
        %s325 = smul.addr %s324, 200
        %s326 = scalar_lea.vmem [#allocation2], %s325
        %s327 = smul.u32 25, %s23
        %p328 = scmp.lt.s32.totalorder %s327, 49
        %s329 = scalar_select %p328, %s327, 49
        %s330 = smul.addr %s329, 8
        %s331 = scalar_lea.vmem %s0, %s330
        %s332 = smul.u32 25, %s23
        %s333 = smul.u32 25, %s23
        %v334 = vld [vmem:[%s331] sm:$0xff]
        %v335 = vld [vmem:[%s331 + $0x8] sm:$0xff]
        %v336 = vld [vmem:[%s331 + $0x10] sm:$0xff]
        %v337 = vld [vmem:[%s331 + $0x18] sm:$0xff]
        %v338 = vld [vmem:[%s331 + $0x20] sm:$0xff]
        %v339 = vld [vmem:[%s331 + $0x28] sm:$0xff]
        %v340 = vld [vmem:[%s331 + $0x30] sm:$0xff]
        %v341 = vld [vmem:[%s331 + $0x38] sm:$0xff]
        %v342 = vld [vmem:[%s331 + $0x40] sm:$0xff]
        %v343 = vld [vmem:[%s331 + $0x48] sm:$0xff]
        %v344 = vld [vmem:[%s331 + $0x50] sm:$0xff]
        %v345 = vld [vmem:[%s331 + $0x58] sm:$0xff]
        %v346 = vld [vmem:[%s331 + $0x60] sm:$0xff]
        %v347 = vld [vmem:[%s331 + $0x68] sm:$0xff]
        %v348 = vld [vmem:[%s331 + $0x70] sm:$0xff]
        %v349 = vld [vmem:[%s331 + $0x78] sm:$0xff]
        %v350 = vld [vmem:[%s331 + $0x80] sm:$0xff]
        %v351 = vld [vmem:[%s331 + $0x88] sm:$0xff]
        %v352 = vld [vmem:[%s331 + $0x90] sm:$0xff]
        %v353 = vld [vmem:[%s331 + $0x98] sm:$0xff]
        %v354 = vld [vmem:[%s331 + $0xa0] sm:$0xff]
        %v355 = vld [vmem:[%s331 + $0xa8] sm:$0xff]
        %v356 = vld [vmem:[%s331 + $0xb0] sm:$0xff]
        %v357 = vld [vmem:[%s331 + $0xb8] sm:$0xff]
        %v358 = vld [vmem:[%s331 + $0xc0] sm:$0xff]
        %v359 = vld [vmem:[%s1] sm:$0xff]
        %v360 = vld [vmem:[%s1 + $0x8] sm:$0xff]
        %v361 = vld [vmem:[%s2] sm:$0x1]
        %v363 = vlaneseq
        %v364 = vshrl.u32 %v363, 7
        %v365 = vsub.s32 0, %v364
        %v366 = vrot.slane %v361, %v365
        %vm368 = vcmask 130048
        %v370 = vsel %vm368, %v334, 0
        %v373 = vsel %vm368, %v335, 0
        %v376 = vsel %vm368, %v336, 0
        %v379 = vsel %vm368, %v337, 0
        %v382 = vsel %vm368, %v338, 0
        %v385 = vsel %vm368, %v339, 0
        %v388 = vsel %vm368, %v340, 0
        %v391 = vsel %vm368, %v341, 0
        %v394 = vsel %vm368, %v342, 0
        %v397 = vsel %vm368, %v343, 0
        %v400 = vsel %vm368, %v344, 0
        %v403 = vsel %vm368, %v345, 0
        %v406 = vsel %vm368, %v346, 0
        %v409 = vsel %vm368, %v347, 0
        %v412 = vsel %vm368, %v348, 0
        %v415 = vsel %vm368, %v349, 0
        %v418 = vsel %vm368, %v350, 0
        %v421 = vsel %vm368, %v351, 0
        %v424 = vsel %vm368, %v352, 0
        %v427 = vsel %vm368, %v353, 0
        %v430 = vsel %vm368, %v354, 0
        %v433 = vsel %vm368, %v355, 0
        %v436 = vsel %vm368, %v356, 0
        %v439 = vsel %vm368, %v357, 0
        %v442 = vsel %vm368, %v358, 0
        %444 = vmatprep.subr.mxu0 0.0
        %445 = vmatpush1.msra.mxu0 0.0
        %446 = vmatprep.subr.mxu0 0.0
        %447 = vmatpush1.msra.mxu0 0.0
        %448 = vmatprep.subr.mxu0 0.0
        %449 = vmatpush1.msra.mxu0 0.0
        %450 = vmatprep.subr.mxu0 0.0
        %451 = vmatpush1.msra.mxu0 0.0
        %452 = vmatprep.subr.mxu0 0.0
        %453 = vmatpush1.msra.mxu0 0.0
        %454 = vmatprep.subr.mxu0 0.0
        %455 = vmatpush1.msra.mxu0 0.0
        %456 = vmatprep.subr.mxu0 0.0
        %457 = vmatpush1.msra.mxu0 0.0
        %458 = vmatprep.subr.mxu0 0.0
        %459 = vmatpush1.msra.mxu0 0.0
        %460 = vmatprep.subr.mxu0 0.0
        %461 = vmatpush1.msra.mxu0 0.0
        %462 = vmatprep.subr.mxu0 0.0
        %463 = vmatpush1.msra.mxu0 0.0
        %464 = vmatprep.subr.mxu0 0.0
        %465 = vmatpush1.msra.mxu0 0.0
        %466 = vmatprep.subr.mxu0 0.0
        %467 = vmatpush1.msra.mxu0 0.0
        %468 = vmatprep.subr.mxu0 0.0
        %469 = vmatpush1.msra.mxu0 0.0
        %470 = vmatprep.subr.mxu0 0.0
        %471 = vmatpush1.msra.mxu0 0.0
        %472 = vmatprep.subr.mxu0 0.0
        %473 = vmatpush1.msra.mxu0 %v360
        %474 = vmatprep.subr.mxu0 0.0
        %475 = vmatpush1.msra.mxu0 %v359
        %476 = vmatprep.subr.mxu0 0.0
        %477 = vmatpush2.msra.mxu0 0.0
        %478 = vmatprep.subr.mxu0 0.0
        %479 = vmatpush2.msra.mxu0 0.0
        %480 = vmatprep.subr.mxu0 0.0
        %481 = vmatpush2.msra.mxu0 0.0
        %482 = vmatprep.subr.mxu0 0.0
        %483 = vmatpush2.msra.mxu0 0.0
        %484 = vmatprep.subr.mxu0 0.0
        %485 = vmatpush2.msra.mxu0 0.0
        %486 = vmatprep.subr.mxu0 0.0
        %487 = vmatpush2.msra.mxu0 0.0
        %488 = vmatprep.subr.mxu0 0.0
        %489 = vmatpush2.msra.mxu0 0.0
        %490 = vmatprep.subr.mxu0 0.0
        %491 = vmatpush2.msra.mxu0 0.0
        %492 = vmatprep.subr.mxu0 0.0
        %493 = vmatpush2.msra.mxu0 0.0
        %494 = vmatprep.subr.mxu0 0.0
        %495 = vmatpush2.msra.mxu0 0.0
        %496 = vmatprep.subr.mxu0 0.0
        %497 = vmatpush2.msra.mxu0 0.0
        %498 = vmatprep.subr.mxu0 0.0
        %499 = vmatpush2.msra.mxu0 0.0
        %500 = vmatprep.subr.mxu0 0.0
        %501 = vmatpush2.msra.mxu0 0.0
        %502 = vmatprep.subr.mxu0 0.0
        %503 = vmatpush2.msra.mxu0 0.0
        %504 = vmatprep.subr.mxu0 0.0
        %505 = vmatpush2.msra.mxu0 0.0
        %506 = vmatprep.subr.mxu0 0.0
        %507 = vmatpush2.msra.mxu0 0.0
        %508 = vmatprep.mubr.f32.mxu0 0.0
        %509 = vmatmul.mubr.f32.gmra.mxu0 %v370
        %v510 = vpop.f32.mrf.mxu0
        %v511 = vadd.f32 %v366, %v510
        %v512 = vpop.f32.mrf.mxu0
        %513 = vmatprep.mubr.f32.mxu0 0.0
        %514 = vmatmul.mubr.f32.gmra.mxu0 %v373
        %v515 = vpop.f32.mrf.mxu0
        %v516 = vadd.f32 %v366, %v515
        %v517 = vpop.f32.mrf.mxu0
        %518 = vmatprep.mubr.f32.mxu0 0.0
        %519 = vmatmul.mubr.f32.gmra.mxu0 %v376
        %v520 = vpop.f32.mrf.mxu0
        %v521 = vadd.f32 %v366, %v520
        %v522 = vpop.f32.mrf.mxu0
        %523 = vmatprep.mubr.f32.mxu0 0.0
        %524 = vmatmul.mubr.f32.gmra.mxu0 %v379
        %v525 = vpop.f32.mrf.mxu0
        %v526 = vadd.f32 %v366, %v525
        %v527 = vpop.f32.mrf.mxu0
        %528 = vmatprep.mubr.f32.mxu0 0.0
        %529 = vmatmul.mubr.f32.gmra.mxu0 %v382
        %v530 = vpop.f32.mrf.mxu0
        %v531 = vadd.f32 %v366, %v530
        %v532 = vpop.f32.mrf.mxu0
        %533 = vmatprep.mubr.f32.mxu0 0.0
        %534 = vmatmul.mubr.f32.gmra.mxu0 %v385
        %v535 = vpop.f32.mrf.mxu0
        %v536 = vadd.f32 %v366, %v535
        %v537 = vpop.f32.mrf.mxu0
        %538 = vmatprep.mubr.f32.mxu0 0.0
        %539 = vmatmul.mubr.f32.gmra.mxu0 %v388
        %v540 = vpop.f32.mrf.mxu0
        %v541 = vadd.f32 %v366, %v540
        %v542 = vpop.f32.mrf.mxu0
        %543 = vmatprep.mubr.f32.mxu0 0.0
        %544 = vmatmul.mubr.f32.gmra.mxu0 %v391
        %v545 = vpop.f32.mrf.mxu0
        %v546 = vadd.f32 %v366, %v545
        %v547 = vpop.f32.mrf.mxu0
        %548 = vmatprep.mubr.f32.mxu0 0.0
        %549 = vmatmul.mubr.f32.gmra.mxu0 %v394
        %v550 = vpop.f32.mrf.mxu0
        %v551 = vadd.f32 %v366, %v550
        %v552 = vpop.f32.mrf.mxu0
        %553 = vmatprep.mubr.f32.mxu0 0.0
        %554 = vmatmul.mubr.f32.gmra.mxu0 %v397
        %v555 = vpop.f32.mrf.mxu0
        %v556 = vadd.f32 %v366, %v555
        %v557 = vpop.f32.mrf.mxu0
        %558 = vmatprep.mubr.f32.mxu0 0.0
        %559 = vmatmul.mubr.f32.gmra.mxu0 %v400
        %v560 = vpop.f32.mrf.mxu0
        %v561 = vadd.f32 %v366, %v560
        %v562 = vpop.f32.mrf.mxu0
        %563 = vmatprep.mubr.f32.mxu0 0.0
        %564 = vmatmul.mubr.f32.gmra.mxu0 %v403
        %v565 = vpop.f32.mrf.mxu0
        %v566 = vadd.f32 %v366, %v565
        %v567 = vpop.f32.mrf.mxu0
        %568 = vmatprep.mubr.f32.mxu0 0.0
        %569 = vmatmul.mubr.f32.gmra.mxu0 %v406
        %v570 = vpop.f32.mrf.mxu0
        %v571 = vadd.f32 %v366, %v570
        %v572 = vpop.f32.mrf.mxu0
        %573 = vmatprep.mubr.f32.mxu0 0.0
        %574 = vmatmul.mubr.f32.gmra.mxu0 %v409
        %v575 = vpop.f32.mrf.mxu0
        %v576 = vadd.f32 %v366, %v575
        %v577 = vpop.f32.mrf.mxu0
        %578 = vmatprep.mubr.f32.mxu0 0.0
        %579 = vmatmul.mubr.f32.gmra.mxu0 %v412
        %v580 = vpop.f32.mrf.mxu0
        %v581 = vadd.f32 %v366, %v580
        %v582 = vpop.f32.mrf.mxu0
        %583 = vmatprep.mubr.f32.mxu0 0.0
        %584 = vmatmul.mubr.f32.gmra.mxu0 %v415
        %v585 = vpop.f32.mrf.mxu0
        %v586 = vadd.f32 %v366, %v585
        %v587 = vpop.f32.mrf.mxu0
        %588 = vmatprep.mubr.f32.mxu0 0.0
        %589 = vmatmul.mubr.f32.gmra.mxu0 %v418
        %v590 = vpop.f32.mrf.mxu0
        %v591 = vadd.f32 %v366, %v590
        %v592 = vpop.f32.mrf.mxu0
        %593 = vmatprep.mubr.f32.mxu0 0.0
        %594 = vmatmul.mubr.f32.gmra.mxu0 %v421
        %v595 = vpop.f32.mrf.mxu0
        %v596 = vadd.f32 %v366, %v595
        %v597 = vpop.f32.mrf.mxu0
        %598 = vmatprep.mubr.f32.mxu0 0.0
        %599 = vmatmul.mubr.f32.gmra.mxu0 %v424
        %v600 = vpop.f32.mrf.mxu0
        %v601 = vadd.f32 %v366, %v600
        %v602 = vpop.f32.mrf.mxu0
        %603 = vmatprep.mubr.f32.mxu0 0.0
        %604 = vmatmul.mubr.f32.gmra.mxu0 %v427
        %v605 = vpop.f32.mrf.mxu0
        %v606 = vadd.f32 %v366, %v605
        %v607 = vpop.f32.mrf.mxu0
        %608 = vmatprep.mubr.f32.mxu0 0.0
        %609 = vmatmul.mubr.f32.gmra.mxu0 %v430
        %v610 = vpop.f32.mrf.mxu0
        %v611 = vadd.f32 %v366, %v610
        %v612 = vpop.f32.mrf.mxu0
        %613 = vmatprep.mubr.f32.mxu0 0.0
        %614 = vmatmul.mubr.f32.gmra.mxu0 %v433
        %v615 = vpop.f32.mrf.mxu0
        %v616 = vadd.f32 %v366, %v615
        %v617 = vpop.f32.mrf.mxu0
        %618 = vmatprep.mubr.f32.mxu0 0.0
        %619 = vmatmul.mubr.f32.gmra.mxu0 %v436
        %v620 = vpop.f32.mrf.mxu0
        %v621 = vadd.f32 %v366, %v620
        %v622 = vpop.f32.mrf.mxu0
        %623 = vmatprep.mubr.f32.mxu0 0.0
        %624 = vmatmul.mubr.f32.gmra.mxu0 %v439
        %v625 = vpop.f32.mrf.mxu0
        %v626 = vadd.f32 %v366, %v625
        %v627 = vpop.f32.mrf.mxu0
        %628 = vmatprep.mubr.f32.mxu0 0.0
        %629 = vmatmul.mubr.f32.gmra.mxu0 %v442
        %v630 = vpop.f32.mrf.mxu0
        %v631 = vadd.f32 %v366, %v630
        %v632 = vpop.f32.mrf.mxu0
        %633 = vdwg.mxu0
        %vm634 = vcmp.gt.f32.partialorder %v511, 0.0
        %vm635 = vcmp.gt.f32.partialorder %v516, 0.0
        %vm636 = vcmp.gt.f32.partialorder %v521, 0.0
        %vm637 = vcmp.gt.f32.partialorder %v526, 0.0
        %vm638 = vcmp.gt.f32.partialorder %v531, 0.0
        %vm639 = vcmp.gt.f32.partialorder %v536, 0.0
        %vm640 = vcmp.gt.f32.partialorder %v541, 0.0
        %vm641 = vcmp.gt.f32.partialorder %v546, 0.0
        %vm642 = vcmp.gt.f32.partialorder %v551, 0.0
        %vm643 = vcmp.gt.f32.partialorder %v556, 0.0
        %vm644 = vcmp.gt.f32.partialorder %v561, 0.0
        %vm645 = vcmp.gt.f32.partialorder %v566, 0.0
        %vm646 = vcmp.gt.f32.partialorder %v571, 0.0
        %vm647 = vcmp.gt.f32.partialorder %v576, 0.0
        %vm648 = vcmp.gt.f32.partialorder %v581, 0.0
        %vm649 = vcmp.gt.f32.partialorder %v586, 0.0
        %vm650 = vcmp.gt.f32.partialorder %v591, 0.0
        %vm651 = vcmp.gt.f32.partialorder %v596, 0.0
        %vm652 = vcmp.gt.f32.partialorder %v601, 0.0
        %vm653 = vcmp.gt.f32.partialorder %v606, 0.0
        %vm654 = vcmp.gt.f32.partialorder %v611, 0.0
        %vm655 = vcmp.gt.f32.partialorder %v616, 0.0
        %vm656 = vcmp.gt.f32.partialorder %v621, 0.0
        %vm657 = vcmp.gt.f32.partialorder %v626, 0.0
        %vm658 = vcmp.gt.f32.partialorder %v631, 0.0
        %v659 = vmul.f32 %v511, 0.01
        %v660 = vmul.f32 %v516, 0.01
        %v661 = vmul.f32 %v521, 0.01
        %v662 = vmul.f32 %v526, 0.01
        %v663 = vmul.f32 %v531, 0.01
        %v664 = vmul.f32 %v536, 0.01
        %v665 = vmul.f32 %v541, 0.01
        %v666 = vmul.f32 %v546, 0.01
        %v667 = vmul.f32 %v551, 0.01
        %v668 = vmul.f32 %v556, 0.01
        %v669 = vmul.f32 %v561, 0.01
        %v670 = vmul.f32 %v566, 0.01
        %v671 = vmul.f32 %v571, 0.01
        %v672 = vmul.f32 %v576, 0.01
        %v673 = vmul.f32 %v581, 0.01
        %v674 = vmul.f32 %v586, 0.01
        %v675 = vmul.f32 %v591, 0.01
        %v676 = vmul.f32 %v596, 0.01
        %v677 = vmul.f32 %v601, 0.01
        %v678 = vmul.f32 %v606, 0.01
        %v679 = vmul.f32 %v611, 0.01
        %v680 = vmul.f32 %v616, 0.01
        %v681 = vmul.f32 %v621, 0.01
        %v682 = vmul.f32 %v626, 0.01
        %v683 = vmul.f32 %v631, 0.01
        %v684 = vsel %vm634, %v511, %v659
        %v685 = vsel %vm635, %v516, %v660
        %v686 = vsel %vm636, %v521, %v661
        %v687 = vsel %vm637, %v526, %v662
        %v688 = vsel %vm638, %v531, %v663
        %v689 = vsel %vm639, %v536, %v664
        %v690 = vsel %vm640, %v541, %v665
        %v691 = vsel %vm641, %v546, %v666
        %v692 = vsel %vm642, %v551, %v667
        %v693 = vsel %vm643, %v556, %v668
        %v694 = vsel %vm644, %v561, %v669
        %v695 = vsel %vm645, %v566, %v670
        %v696 = vsel %vm646, %v571, %v671
        %v697 = vsel %vm647, %v576, %v672
        %v698 = vsel %vm648, %v581, %v673
        %v699 = vsel %vm649, %v586, %v674
        %v700 = vsel %vm650, %v591, %v675
        %v701 = vsel %vm651, %v596, %v676
        %v702 = vsel %vm652, %v601, %v677
        %v703 = vsel %vm653, %v606, %v678
        %v704 = vsel %vm654, %v611, %v679
        %v705 = vsel %vm655, %v616, %v680
        %v706 = vsel %vm656, %v621, %v681
        %v707 = vsel %vm657, %v626, %v682
        %v708 = vsel %vm658, %v631, %v683
        %v709 = vlaneseq
        %v710 = vshrl.u32 %v709, 7
        %v711 = vadd.s32 %v710, 8
        %v712 = vadd.s32 %v710, 16
        %v713 = vadd.s32 %v710, 24
        %v714 = vadd.s32 %v710, 32
        %v715 = vadd.s32 %v710, 40
        %v716 = vadd.s32 %v710, 48
        %v717 = vadd.s32 %v710, 56
        %v718 = vadd.s32 %v710, 64
        %v719 = vadd.s32 %v710, 72
        %v720 = vadd.s32 %v710, 80
        %v721 = vadd.s32 %v710, 88
        %v722 = vadd.s32 %v710, 96
        %v723 = vadd.s32 %v710, 104
        %v724 = vadd.s32 %v710, 112
        %v725 = vadd.s32 %v710, 120
        %v726 = vadd.s32 %v710, 128
        %v727 = vadd.s32 %v710, 136
        %v728 = vadd.s32 %v710, 144
        %v729 = vadd.s32 %v710, 152
        %v730 = vadd.s32 %v710, 160
        %v731 = vadd.s32 %v710, 168
        %v732 = vadd.s32 %v710, 176
        %v733 = vadd.s32 %v710, 184
        %v734 = vadd.s32 %v710, 192
        %vm735 = vcmp.lt.s32.totalorder %v710, 0
        %v736 = vsub.s32 0, %v710
        %v737 = vsel %vm735, %v736, %v710
        %v738 = vshrl.u32 %v737, 3
        %v739 = vand.u32 %v737, 7
        %v740 = vsub.s32 0, %v739
        %v741 = vsel %vm735, %v740, %v739
        %vm742 = vcmp.lt.s32.totalorder %v711, 0
        %v743 = vsub.s32 0, %v711
        %v744 = vsel %vm742, %v743, %v711
        %v745 = vshrl.u32 %v744, 3
        %v746 = vand.u32 %v744, 7
        %v747 = vsub.s32 0, %v746
        %v748 = vsel %vm742, %v747, %v746
        %vm749 = vcmp.lt.s32.totalorder %v712, 0
        %v750 = vsub.s32 0, %v712
        %v751 = vsel %vm749, %v750, %v712
        %v752 = vshrl.u32 %v751, 3
        %v753 = vand.u32 %v751, 7
        %v754 = vsub.s32 0, %v753
        %v755 = vsel %vm749, %v754, %v753
        %vm756 = vcmp.lt.s32.totalorder %v713, 0
        %v757 = vsub.s32 0, %v713
        %v758 = vsel %vm756, %v757, %v713
        %v759 = vshrl.u32 %v758, 3
        %v760 = vand.u32 %v758, 7
        %v761 = vsub.s32 0, %v760
        %v762 = vsel %vm756, %v761, %v760
        %vm763 = vcmp.lt.s32.totalorder %v714, 0
        %v764 = vsub.s32 0, %v714
        %v765 = vsel %vm763, %v764, %v714
        %v766 = vshrl.u32 %v765, 3
        %v767 = vand.u32 %v765, 7
        %v768 = vsub.s32 0, %v767
        %v769 = vsel %vm763, %v768, %v767
        %vm770 = vcmp.lt.s32.totalorder %v715, 0
        %v771 = vsub.s32 0, %v715
        %v772 = vsel %vm770, %v771, %v715
        %v773 = vshrl.u32 %v772, 3
        %v774 = vand.u32 %v772, 7
        %v775 = vsub.s32 0, %v774
        %v776 = vsel %vm770, %v775, %v774
        %vm777 = vcmp.lt.s32.totalorder %v716, 0
        %v778 = vsub.s32 0, %v716
        %v779 = vsel %vm777, %v778, %v716
        %v780 = vshrl.u32 %v779, 3
        %v781 = vand.u32 %v779, 7
        %v782 = vsub.s32 0, %v781
        %v783 = vsel %vm777, %v782, %v781
        %vm784 = vcmp.lt.s32.totalorder %v717, 0
        %v785 = vsub.s32 0, %v717
        %v786 = vsel %vm784, %v785, %v717
        %v787 = vshrl.u32 %v786, 3
        %v788 = vand.u32 %v786, 7
        %v789 = vsub.s32 0, %v788
        %v790 = vsel %vm784, %v789, %v788
        %vm791 = vcmp.lt.s32.totalorder %v718, 0
        %v792 = vsub.s32 0, %v718
        %v793 = vsel %vm791, %v792, %v718
        %v794 = vshrl.u32 %v793, 3
        %v795 = vand.u32 %v793, 7
        %v796 = vsub.s32 0, %v795
        %v797 = vsel %vm791, %v796, %v795
        %vm798 = vcmp.lt.s32.totalorder %v719, 0
        %v799 = vsub.s32 0, %v719
        %v800 = vsel %vm798, %v799, %v719
        %v801 = vshrl.u32 %v800, 3
        %v802 = vand.u32 %v800, 7
        %v803 = vsub.s32 0, %v802
        %v804 = vsel %vm798, %v803, %v802
        %vm805 = vcmp.lt.s32.totalorder %v720, 0
        %v806 = vsub.s32 0, %v720
        %v807 = vsel %vm805, %v806, %v720
        %v808 = vshrl.u32 %v807, 3
        %v809 = vand.u32 %v807, 7
        %v810 = vsub.s32 0, %v809
        %v811 = vsel %vm805, %v810, %v809
        %vm812 = vcmp.lt.s32.totalorder %v721, 0
        %v813 = vsub.s32 0, %v721
        %v814 = vsel %vm812, %v813, %v721
        %v815 = vshrl.u32 %v814, 3
        %v816 = vand.u32 %v814, 7
        %v817 = vsub.s32 0, %v816
        %v818 = vsel %vm812, %v817, %v816
        %vm819 = vcmp.lt.s32.totalorder %v722, 0
        %v820 = vsub.s32 0, %v722
        %v821 = vsel %vm819, %v820, %v722
        %v822 = vshrl.u32 %v821, 3
        %v823 = vand.u32 %v821, 7
        %v824 = vsub.s32 0, %v823
        %v825 = vsel %vm819, %v824, %v823
        %vm826 = vcmp.lt.s32.totalorder %v723, 0
        %v827 = vsub.s32 0, %v723
        %v828 = vsel %vm826, %v827, %v723
        %v829 = vshrl.u32 %v828, 3
        %v830 = vand.u32 %v828, 7
        %v831 = vsub.s32 0, %v830
        %v832 = vsel %vm826, %v831, %v830
        %vm833 = vcmp.lt.s32.totalorder %v724, 0
        %v834 = vsub.s32 0, %v724
        %v835 = vsel %vm833, %v834, %v724
        %v836 = vshrl.u32 %v835, 3
        %v837 = vand.u32 %v835, 7
        %v838 = vsub.s32 0, %v837
        %v839 = vsel %vm833, %v838, %v837
        %vm840 = vcmp.lt.s32.totalorder %v725, 0
        %v841 = vsub.s32 0, %v725
        %v842 = vsel %vm840, %v841, %v725
        %v843 = vshrl.u32 %v842, 3
        %v844 = vand.u32 %v842, 7
        %v845 = vsub.s32 0, %v844
        %v846 = vsel %vm840, %v845, %v844
        %vm847 = vcmp.lt.s32.totalorder %v726, 0
        %v848 = vsub.s32 0, %v726
        %v849 = vsel %vm847, %v848, %v726
        %v850 = vshrl.u32 %v849, 3
        %v851 = vand.u32 %v849, 7
        %v852 = vsub.s32 0, %v851
        %v853 = vsel %vm847, %v852, %v851
        %vm854 = vcmp.lt.s32.totalorder %v727, 0
        %v855 = vsub.s32 0, %v727
        %v856 = vsel %vm854, %v855, %v727
        %v857 = vshrl.u32 %v856, 3
        %v858 = vand.u32 %v856, 7
        %v859 = vsub.s32 0, %v858
        %v860 = vsel %vm854, %v859, %v858
        %vm861 = vcmp.lt.s32.totalorder %v728, 0
        %v862 = vsub.s32 0, %v728
        %v863 = vsel %vm861, %v862, %v728
        %v864 = vshrl.u32 %v863, 3
        %v865 = vand.u32 %v863, 7
        %v866 = vsub.s32 0, %v865
        %v867 = vsel %vm861, %v866, %v865
        %vm868 = vcmp.lt.s32.totalorder %v729, 0
        %v869 = vsub.s32 0, %v729
        %v870 = vsel %vm868, %v869, %v729
        %v871 = vshrl.u32 %v870, 3
        %v872 = vand.u32 %v870, 7
        %v873 = vsub.s32 0, %v872
        %v874 = vsel %vm868, %v873, %v872
        %vm875 = vcmp.lt.s32.totalorder %v730, 0
        %v876 = vsub.s32 0, %v730
        %v877 = vsel %vm875, %v876, %v730
        %v878 = vshrl.u32 %v877, 3
        %v879 = vand.u32 %v877, 7
        %v880 = vsub.s32 0, %v879
        %v881 = vsel %vm875, %v880, %v879
        %vm882 = vcmp.lt.s32.totalorder %v731, 0
        %v883 = vsub.s32 0, %v731
        %v884 = vsel %vm882, %v883, %v731
        %v885 = vshrl.u32 %v884, 3
        %v886 = vand.u32 %v884, 7
        %v887 = vsub.s32 0, %v886
        %v888 = vsel %vm882, %v887, %v886
        %vm889 = vcmp.lt.s32.totalorder %v732, 0
        %v890 = vsub.s32 0, %v732
        %v891 = vsel %vm889, %v890, %v732
        %v892 = vshrl.u32 %v891, 3
        %v893 = vand.u32 %v891, 7
        %v894 = vsub.s32 0, %v893
        %v895 = vsel %vm889, %v894, %v893
        %vm896 = vcmp.lt.s32.totalorder %v733, 0
        %v897 = vsub.s32 0, %v733
        %v898 = vsel %vm896, %v897, %v733
        %v899 = vshrl.u32 %v898, 3
        %v900 = vand.u32 %v898, 7
        %v901 = vsub.s32 0, %v900
        %v902 = vsel %vm896, %v901, %v900
        %vm903 = vcmp.lt.s32.totalorder %v734, 0
        %v904 = vsub.s32 0, %v734
        %v905 = vsel %vm903, %v904, %v734
        %v906 = vshrl.u32 %v905, 3
        %v907 = vand.u32 %v905, 7
        %v908 = vsub.s32 0, %v907
        %v909 = vsel %vm903, %v908, %v907
        %vm910 = vcmp.ne.s32.totalorder %v741, 0
        %vm911 = vcmp.ne.s32.totalorder %v748, 0
        %vm912 = vcmp.ne.s32.totalorder %v755, 0
        %vm913 = vcmp.ne.s32.totalorder %v762, 0
        %vm914 = vcmp.ne.s32.totalorder %v769, 0
        %vm915 = vcmp.ne.s32.totalorder %v776, 0
        %vm916 = vcmp.ne.s32.totalorder %v783, 0
        %vm917 = vcmp.ne.s32.totalorder %v790, 0
        %vm918 = vcmp.ne.s32.totalorder %v797, 0
        %vm919 = vcmp.ne.s32.totalorder %v804, 0
        %vm920 = vcmp.ne.s32.totalorder %v811, 0
        %vm921 = vcmp.ne.s32.totalorder %v818, 0
        %vm922 = vcmp.ne.s32.totalorder %v825, 0
        %vm923 = vcmp.ne.s32.totalorder %v832, 0
        %vm924 = vcmp.ne.s32.totalorder %v839, 0
        %vm925 = vcmp.ne.s32.totalorder %v846, 0
        %vm926 = vcmp.ne.s32.totalorder %v853, 0
        %vm927 = vcmp.ne.s32.totalorder %v860, 0
        %vm928 = vcmp.ne.s32.totalorder %v867, 0
        %vm929 = vcmp.ne.s32.totalorder %v874, 0
        %vm930 = vcmp.ne.s32.totalorder %v881, 0
        %vm931 = vcmp.ne.s32.totalorder %v888, 0
        %vm932 = vcmp.ne.s32.totalorder %v895, 0
        %vm933 = vcmp.ne.s32.totalorder %v902, 0
        %vm934 = vcmp.ne.s32.totalorder %v909, 0
        %vm935 = vcmp.lt.s32.totalorder %v741, 0
        %vm936 = vcmp.lt.s32.totalorder %v748, 0
        %vm937 = vcmp.lt.s32.totalorder %v755, 0
        %vm938 = vcmp.lt.s32.totalorder %v762, 0
        %vm939 = vcmp.lt.s32.totalorder %v769, 0
        %vm940 = vcmp.lt.s32.totalorder %v776, 0
        %vm941 = vcmp.lt.s32.totalorder %v783, 0
        %vm942 = vcmp.lt.s32.totalorder %v790, 0
        %vm943 = vcmp.lt.s32.totalorder %v797, 0
        %vm944 = vcmp.lt.s32.totalorder %v804, 0
        %vm945 = vcmp.lt.s32.totalorder %v811, 0
        %vm946 = vcmp.lt.s32.totalorder %v818, 0
        %vm947 = vcmp.lt.s32.totalorder %v825, 0
        %vm948 = vcmp.lt.s32.totalorder %v832, 0
        %vm949 = vcmp.lt.s32.totalorder %v839, 0
        %vm950 = vcmp.lt.s32.totalorder %v846, 0
        %vm951 = vcmp.lt.s32.totalorder %v853, 0
        %vm952 = vcmp.lt.s32.totalorder %v860, 0
        %vm953 = vcmp.lt.s32.totalorder %v867, 0
        %vm954 = vcmp.lt.s32.totalorder %v874, 0
        %vm955 = vcmp.lt.s32.totalorder %v881, 0
        %vm956 = vcmp.lt.s32.totalorder %v888, 0
        %vm957 = vcmp.lt.s32.totalorder %v895, 0
        %vm958 = vcmp.lt.s32.totalorder %v902, 0
        %vm959 = vcmp.lt.s32.totalorder %v909, 0
        %vm960 = vmand %vm935, %vm910
        %vm961 = vmand %vm936, %vm911
        %vm962 = vmand %vm937, %vm912
        %vm963 = vmand %vm938, %vm913
        %vm964 = vmand %vm939, %vm914
        %vm965 = vmand %vm940, %vm915
        %vm966 = vmand %vm941, %vm916
        %vm967 = vmand %vm942, %vm917
        %vm968 = vmand %vm943, %vm918
        %vm969 = vmand %vm944, %vm919
        %vm970 = vmand %vm945, %vm920
        %vm971 = vmand %vm946, %vm921
        %vm972 = vmand %vm947, %vm922
        %vm973 = vmand %vm948, %vm923
        %vm974 = vmand %vm949, %vm924
        %vm975 = vmand %vm950, %vm925
        %vm976 = vmand %vm951, %vm926
        %vm977 = vmand %vm952, %vm927
        %vm978 = vmand %vm953, %vm928
        %vm979 = vmand %vm954, %vm929
        %vm980 = vmand %vm955, %vm930
        %vm981 = vmand %vm956, %vm931
        %vm982 = vmand %vm957, %vm932
        %vm983 = vmand %vm958, %vm933
        %vm984 = vmand %vm959, %vm934
        %v985 = vadd.s32 %v741, 8
        %v986 = vadd.s32 %v748, 8
        %v987 = vadd.s32 %v755, 8
        %v988 = vadd.s32 %v762, 8
        %v989 = vadd.s32 %v769, 8
        %v990 = vadd.s32 %v776, 8
        %v991 = vadd.s32 %v783, 8
        %v992 = vadd.s32 %v790, 8
        %v993 = vadd.s32 %v797, 8
        %v994 = vadd.s32 %v804, 8
        %v995 = vadd.s32 %v811, 8
        %v996 = vadd.s32 %v818, 8
        %v997 = vadd.s32 %v825, 8
        %v998 = vadd.s32 %v832, 8
        %v999 = vadd.s32 %v839, 8
        %v1000 = vadd.s32 %v846, 8
        %v1001 = vadd.s32 %v853, 8
        %v1002 = vadd.s32 %v860, 8
        %v1003 = vadd.s32 %v867, 8
        %v1004 = vadd.s32 %v874, 8
        %v1005 = vadd.s32 %v881, 8
        %v1006 = vadd.s32 %v888, 8
        %v1007 = vadd.s32 %v895, 8
        %v1008 = vadd.s32 %v902, 8
        %v1009 = vadd.s32 %v909, 8
        %v1010 = vsel %vm960, %v985, %v741
        %v1011 = vsel %vm961, %v986, %v748
        %v1012 = vsel %vm962, %v987, %v755
        %v1013 = vsel %vm963, %v988, %v762
        %v1014 = vsel %vm964, %v989, %v769
        %v1015 = vsel %vm965, %v990, %v776
        %v1016 = vsel %vm966, %v991, %v783
        %v1017 = vsel %vm967, %v992, %v790
        %v1018 = vsel %vm968, %v993, %v797
        %v1019 = vsel %vm969, %v994, %v804
        %v1020 = vsel %vm970, %v995, %v811
        %v1021 = vsel %vm971, %v996, %v818
        %v1022 = vsel %vm972, %v997, %v825
        %v1023 = vsel %vm973, %v998, %v832
        %v1024 = vsel %vm974, %v999, %v839
        %v1025 = vsel %vm975, %v1000, %v846
        %v1026 = vsel %vm976, %v1001, %v853
        %v1027 = vsel %vm977, %v1002, %v860
        %v1028 = vsel %vm978, %v1003, %v867
        %v1029 = vsel %vm979, %v1004, %v874
        %v1030 = vsel %vm980, %v1005, %v881
        %v1031 = vsel %vm981, %v1006, %v888
        %v1032 = vsel %vm982, %v1007, %v895
        %v1033 = vsel %vm983, %v1008, %v902
        %v1034 = vsel %vm984, %v1009, %v909
        %vm1035 = vcmp.ge.s32.totalorder %v1010, 1
        %vm1036 = vcmp.ge.s32.totalorder %v1011, 1
        %vm1037 = vcmp.ge.s32.totalorder %v1012, 1
        %vm1038 = vcmp.ge.s32.totalorder %v1013, 1
        %vm1039 = vcmp.ge.s32.totalorder %v1014, 1
        %vm1040 = vcmp.ge.s32.totalorder %v1015, 1
        %vm1041 = vcmp.ge.s32.totalorder %v1016, 1
        %vm1042 = vcmp.ge.s32.totalorder %v1017, 1
        %vm1043 = vcmp.ge.s32.totalorder %v1018, 1
        %vm1044 = vcmp.ge.s32.totalorder %v1019, 1
        %vm1045 = vcmp.ge.s32.totalorder %v1020, 1
        %vm1046 = vcmp.ge.s32.totalorder %v1021, 1
        %vm1047 = vcmp.ge.s32.totalorder %v1022, 1
        %vm1048 = vcmp.ge.s32.totalorder %v1023, 1
        %vm1049 = vcmp.ge.s32.totalorder %v1024, 1
        %vm1050 = vcmp.ge.s32.totalorder %v1025, 1
        %vm1051 = vcmp.ge.s32.totalorder %v1026, 1
        %vm1052 = vcmp.ge.s32.totalorder %v1027, 1
        %vm1053 = vcmp.ge.s32.totalorder %v1028, 1
        %vm1054 = vcmp.ge.s32.totalorder %v1029, 1
        %vm1055 = vcmp.ge.s32.totalorder %v1030, 1
        %vm1056 = vcmp.ge.s32.totalorder %v1031, 1
        %vm1057 = vcmp.ge.s32.totalorder %v1032, 1
        %vm1058 = vcmp.ge.s32.totalorder %v1033, 1
        %vm1059 = vcmp.ge.s32.totalorder %v1034, 1
        %vm1060 = vcmp.le.s32.totalorder %v1010, 6
        %vm1061 = vcmp.le.s32.totalorder %v1011, 6
        %vm1062 = vcmp.le.s32.totalorder %v1012, 6
        %vm1063 = vcmp.le.s32.totalorder %v1013, 6
        %vm1064 = vcmp.le.s32.totalorder %v1014, 6
        %vm1065 = vcmp.le.s32.totalorder %v1015, 6
        %vm1066 = vcmp.le.s32.totalorder %v1016, 6
        %vm1067 = vcmp.le.s32.totalorder %v1017, 6
        %vm1068 = vcmp.le.s32.totalorder %v1018, 6
        %vm1069 = vcmp.le.s32.totalorder %v1019, 6
        %vm1070 = vcmp.le.s32.totalorder %v1020, 6
        %vm1071 = vcmp.le.s32.totalorder %v1021, 6
        %vm1072 = vcmp.le.s32.totalorder %v1022, 6
        %vm1073 = vcmp.le.s32.totalorder %v1023, 6
        %vm1074 = vcmp.le.s32.totalorder %v1024, 6
        %vm1075 = vcmp.le.s32.totalorder %v1025, 6
        %vm1076 = vcmp.le.s32.totalorder %v1026, 6
        %vm1077 = vcmp.le.s32.totalorder %v1027, 6
        %vm1078 = vcmp.le.s32.totalorder %v1028, 6
        %vm1079 = vcmp.le.s32.totalorder %v1029, 6
        %vm1080 = vcmp.le.s32.totalorder %v1030, 6
        %vm1081 = vcmp.le.s32.totalorder %v1031, 6
        %vm1082 = vcmp.le.s32.totalorder %v1032, 6
        %vm1083 = vcmp.le.s32.totalorder %v1033, 6
        %vm1084 = vcmp.le.s32.totalorder %v1034, 6
        %v1085 = vld [vmem:[%s3] sm:$0xff]
        %v1086 = vld [vmem:[%s3 + $0x8] sm:$0xff]
        %v1087 = vld [vmem:[%s3 + $0x10] sm:$0xff]
        %v1088 = vld [vmem:[%s3 + $0x18] sm:$0xff]
        %v1089 = vld [vmem:[%s3 + $0x20] sm:$0xff]
        %v1090 = vld [vmem:[%s3 + $0x28] sm:$0xff]
        %v1091 = vld [vmem:[%s3 + $0x30] sm:$0xff]
        %v1092 = vld [vmem:[%s3 + $0x38] sm:$0xff]
        %v1093 = vld [vmem:[%s3 + $0x40] sm:$0xff]
        %v1094 = vld [vmem:[%s3 + $0x48] sm:$0xff]
        %v1095 = vld [vmem:[%s3 + $0x50] sm:$0xff]
        %v1096 = vld [vmem:[%s3 + $0x58] sm:$0xff]
        %v1097 = vld [vmem:[%s3 + $0x60] sm:$0xff]
        %v1098 = vld [vmem:[%s3 + $0x68] sm:$0xff]
        %v1099 = vld [vmem:[%s3 + $0x70] sm:$0xff]
        %v1100 = vld [vmem:[%s3 + $0x78] sm:$0xff]
        %1101 = vmatprep.subr.mxu0 0.0
        %1102 = vmatpush1.msra.mxu0 %v1100
        %1103 = vmatprep.subr.mxu0 0.0
        %1104 = vmatpush1.msra.mxu0 %v1099
        %1105 = vmatprep.subr.mxu0 0.0
        %1106 = vmatpush1.msra.mxu0 %v1098
        %1107 = vmatprep.subr.mxu0 0.0
        %1108 = vmatpush1.msra.mxu0 %v1097
        %1109 = vmatprep.subr.mxu0 0.0
        %1110 = vmatpush1.msra.mxu0 %v1096
        %1111 = vmatprep.subr.mxu0 0.0
        %1112 = vmatpush1.msra.mxu0 %v1095
        %1113 = vmatprep.subr.mxu0 0.0
        %1114 = vmatpush1.msra.mxu0 %v1094
        %1115 = vmatprep.subr.mxu0 0.0
        %1116 = vmatpush1.msra.mxu0 %v1093
        %1117 = vmatprep.subr.mxu0 0.0
        %1118 = vmatpush1.msra.mxu0 %v1092
        %1119 = vmatprep.subr.mxu0 0.0
        %1120 = vmatpush1.msra.mxu0 %v1091
        %1121 = vmatprep.subr.mxu0 0.0
        %1122 = vmatpush1.msra.mxu0 %v1090
        %1123 = vmatprep.subr.mxu0 0.0
        %1124 = vmatpush1.msra.mxu0 %v1089
        %1125 = vmatprep.subr.mxu0 0.0
        %1126 = vmatpush1.msra.mxu0 %v1088
        %1127 = vmatprep.subr.mxu0 0.0
        %1128 = vmatpush1.msra.mxu0 %v1087
        %1129 = vmatprep.subr.mxu0 0.0
        %1130 = vmatpush1.msra.mxu0 %v1086
        %1131 = vmatprep.subr.mxu0 0.0
        %1132 = vmatpush1.msra.mxu0 %v1085
        %1133 = vmatprep.subr.mxu0 0.0
        %1134 = vmatpush2.msra.mxu0 0.0
        %1135 = vmatprep.subr.mxu0 0.0
        %1136 = vmatpush2.msra.mxu0 0.0
        %1137 = vmatprep.subr.mxu0 0.0
        %1138 = vmatpush2.msra.mxu0 0.0
        %1139 = vmatprep.subr.mxu0 0.0
        %1140 = vmatpush2.msra.mxu0 0.0
        %1141 = vmatprep.subr.mxu0 0.0
        %1142 = vmatpush2.msra.mxu0 0.0
        %1143 = vmatprep.subr.mxu0 0.0
        %1144 = vmatpush2.msra.mxu0 0.0
        %1145 = vmatprep.subr.mxu0 0.0
        %1146 = vmatpush2.msra.mxu0 0.0
        %1147 = vmatprep.subr.mxu0 0.0
        %1148 = vmatpush2.msra.mxu0 0.0
        %1149 = vmatprep.subr.mxu0 0.0
        %1150 = vmatpush2.msra.mxu0 0.0
        %1151 = vmatprep.subr.mxu0 0.0
        %1152 = vmatpush2.msra.mxu0 0.0
        %1153 = vmatprep.subr.mxu0 0.0
        %1154 = vmatpush2.msra.mxu0 0.0
        %1155 = vmatprep.subr.mxu0 0.0
        %1156 = vmatpush2.msra.mxu0 0.0
        %1157 = vmatprep.subr.mxu0 0.0
        %1158 = vmatpush2.msra.mxu0 0.0
        %1159 = vmatprep.subr.mxu0 0.0
        %1160 = vmatpush2.msra.mxu0 0.0
        %1161 = vmatprep.subr.mxu0 0.0
        %1162 = vmatpush2.msra.mxu0 0.0
        %1163 = vmatprep.subr.mxu0 0.0
        %1164 = vmatpush2.msra.mxu0 0.0
        %1165 = vmatprep.mubr.f32.mxu0 0.0
        %1166 = vmatmul.mubr.f32.gmra.mxu0 %v684
        %v1167 = vpop.f32.mrf.mxu0
        %v1168 = vadd.f32 0.0, %v1167
        %v1169 = vpop.f32.mrf.mxu0
        %1170 = vmatprep.mubr.f32.mxu0 0.0
        %1171 = vmatmul.mubr.f32.gmra.mxu0 %v685
        %v1172 = vpop.f32.mrf.mxu0
        %v1173 = vadd.f32 0.0, %v1172
        %v1174 = vpop.f32.mrf.mxu0
        %1175 = vmatprep.mubr.f32.mxu0 0.0
        %1176 = vmatmul.mubr.f32.gmra.mxu0 %v686
        %v1177 = vpop.f32.mrf.mxu0
        %v1178 = vadd.f32 0.0, %v1177
        %v1179 = vpop.f32.mrf.mxu0
        %1180 = vmatprep.mubr.f32.mxu0 0.0
        %1181 = vmatmul.mubr.f32.gmra.mxu0 %v687
        %v1182 = vpop.f32.mrf.mxu0
        %v1183 = vadd.f32 0.0, %v1182
        %v1184 = vpop.f32.mrf.mxu0
        %1185 = vmatprep.mubr.f32.mxu0 0.0
        %1186 = vmatmul.mubr.f32.gmra.mxu0 %v688
        %v1187 = vpop.f32.mrf.mxu0
        %v1188 = vadd.f32 0.0, %v1187
        %v1189 = vpop.f32.mrf.mxu0
        %1190 = vmatprep.mubr.f32.mxu0 0.0
        %1191 = vmatmul.mubr.f32.gmra.mxu0 %v689
        %v1192 = vpop.f32.mrf.mxu0
        %v1193 = vadd.f32 0.0, %v1192
        %v1194 = vpop.f32.mrf.mxu0
        %1195 = vmatprep.mubr.f32.mxu0 0.0
        %1196 = vmatmul.mubr.f32.gmra.mxu0 %v690
        %v1197 = vpop.f32.mrf.mxu0
        %v1198 = vadd.f32 0.0, %v1197
        %v1199 = vpop.f32.mrf.mxu0
        %1200 = vmatprep.mubr.f32.mxu0 0.0
        %1201 = vmatmul.mubr.f32.gmra.mxu0 %v691
        %v1202 = vpop.f32.mrf.mxu0
        %v1203 = vadd.f32 0.0, %v1202
        %v1204 = vpop.f32.mrf.mxu0
        %1205 = vmatprep.mubr.f32.mxu0 0.0
        %1206 = vmatmul.mubr.f32.gmra.mxu0 %v692
        %v1207 = vpop.f32.mrf.mxu0
        %v1208 = vadd.f32 0.0, %v1207
        %v1209 = vpop.f32.mrf.mxu0
        %1210 = vmatprep.mubr.f32.mxu0 0.0
        %1211 = vmatmul.mubr.f32.gmra.mxu0 %v693
        %v1212 = vpop.f32.mrf.mxu0
        %v1213 = vadd.f32 0.0, %v1212
        %v1214 = vpop.f32.mrf.mxu0
        %1215 = vmatprep.mubr.f32.mxu0 0.0
        %1216 = vmatmul.mubr.f32.gmra.mxu0 %v694
        %v1217 = vpop.f32.mrf.mxu0
        %v1218 = vadd.f32 0.0, %v1217
        %v1219 = vpop.f32.mrf.mxu0
        %1220 = vmatprep.mubr.f32.mxu0 0.0
        %1221 = vmatmul.mubr.f32.gmra.mxu0 %v695
        %v1222 = vpop.f32.mrf.mxu0
        %v1223 = vadd.f32 0.0, %v1222
        %v1224 = vpop.f32.mrf.mxu0
        %1225 = vmatprep.mubr.f32.mxu0 0.0
        %1226 = vmatmul.mubr.f32.gmra.mxu0 %v696
        %v1227 = vpop.f32.mrf.mxu0
        %v1228 = vadd.f32 0.0, %v1227
        %v1229 = vpop.f32.mrf.mxu0
        %1230 = vmatprep.mubr.f32.mxu0 0.0
        %1231 = vmatmul.mubr.f32.gmra.mxu0 %v697
        %v1232 = vpop.f32.mrf.mxu0
        %v1233 = vadd.f32 0.0, %v1232
        %v1234 = vpop.f32.mrf.mxu0
        %1235 = vmatprep.mubr.f32.mxu0 0.0
        %1236 = vmatmul.mubr.f32.gmra.mxu0 %v698
        %v1237 = vpop.f32.mrf.mxu0
        %v1238 = vadd.f32 0.0, %v1237
        %v1239 = vpop.f32.mrf.mxu0
        %1240 = vmatprep.mubr.f32.mxu0 0.0
        %1241 = vmatmul.mubr.f32.gmra.mxu0 %v699
        %v1242 = vpop.f32.mrf.mxu0
        %v1243 = vadd.f32 0.0, %v1242
        %v1244 = vpop.f32.mrf.mxu0
        %1245 = vmatprep.mubr.f32.mxu0 0.0
        %1246 = vmatmul.mubr.f32.gmra.mxu0 %v700
        %v1247 = vpop.f32.mrf.mxu0
        %v1248 = vadd.f32 0.0, %v1247
        %v1249 = vpop.f32.mrf.mxu0
        %1250 = vmatprep.mubr.f32.mxu0 0.0
        %1251 = vmatmul.mubr.f32.gmra.mxu0 %v701
        %v1252 = vpop.f32.mrf.mxu0
        %v1253 = vadd.f32 0.0, %v1252
        %v1254 = vpop.f32.mrf.mxu0
        %1255 = vmatprep.mubr.f32.mxu0 0.0
        %1256 = vmatmul.mubr.f32.gmra.mxu0 %v702
        %v1257 = vpop.f32.mrf.mxu0
        %v1258 = vadd.f32 0.0, %v1257
        %v1259 = vpop.f32.mrf.mxu0
        %1260 = vmatprep.mubr.f32.mxu0 0.0
        %1261 = vmatmul.mubr.f32.gmra.mxu0 %v703
        %v1262 = vpop.f32.mrf.mxu0
        %v1263 = vadd.f32 0.0, %v1262
        %v1264 = vpop.f32.mrf.mxu0
        %1265 = vmatprep.mubr.f32.mxu0 0.0
        %1266 = vmatmul.mubr.f32.gmra.mxu0 %v704
        %v1267 = vpop.f32.mrf.mxu0
        %v1268 = vadd.f32 0.0, %v1267
        %v1269 = vpop.f32.mrf.mxu0
        %1270 = vmatprep.mubr.f32.mxu0 0.0
        %1271 = vmatmul.mubr.f32.gmra.mxu0 %v705
        %v1272 = vpop.f32.mrf.mxu0
        %v1273 = vadd.f32 0.0, %v1272
        %v1274 = vpop.f32.mrf.mxu0
        %1275 = vmatprep.mubr.f32.mxu0 0.0
        %1276 = vmatmul.mubr.f32.gmra.mxu0 %v706
        %v1277 = vpop.f32.mrf.mxu0
        %v1278 = vadd.f32 0.0, %v1277
        %v1279 = vpop.f32.mrf.mxu0
        %1280 = vmatprep.mubr.f32.mxu0 0.0
        %1281 = vmatmul.mubr.f32.gmra.mxu0 %v707
        %v1282 = vpop.f32.mrf.mxu0
        %v1283 = vadd.f32 0.0, %v1282
        %v1284 = vpop.f32.mrf.mxu0
        %1285 = vmatprep.mubr.f32.mxu0 0.0
        %1286 = vmatmul.mubr.f32.gmra.mxu0 %v708
        %v1287 = vpop.f32.mrf.mxu0
        %v1288 = vadd.f32 0.0, %v1287
        %v1289 = vpop.f32.mrf.mxu0
        %1290 = vdwg.mxu0
        %s1291 = scalar_lea.vmem %s3, 128
        %v1292 = vld [vmem:[%s1291] sm:$0xff]
        %v1293 = vld [vmem:[%s1291 + $0x8] sm:$0xff]
        %v1294 = vld [vmem:[%s1291 + $0x10] sm:$0xff]
        %v1295 = vld [vmem:[%s1291 + $0x18] sm:$0xff]
        %v1296 = vld [vmem:[%s1291 + $0x20] sm:$0xff]
        %v1297 = vld [vmem:[%s1291 + $0x28] sm:$0xff]
        %v1298 = vld [vmem:[%s1291 + $0x30] sm:$0xff]
        %v1299 = vld [vmem:[%s1291 + $0x38] sm:$0xff]
        %v1300 = vld [vmem:[%s1291 + $0x40] sm:$0xff]
        %v1301 = vld [vmem:[%s1291 + $0x48] sm:$0xff]
        %v1302 = vld [vmem:[%s1291 + $0x50] sm:$0xff]
        %v1303 = vld [vmem:[%s1291 + $0x58] sm:$0xff]
        %v1304 = vld [vmem:[%s1291 + $0x60] sm:$0xff]
        %v1305 = vld [vmem:[%s1291 + $0x68] sm:$0xff]
        %v1306 = vld [vmem:[%s1291 + $0x70] sm:$0xff]
        %v1307 = vld [vmem:[%s1291 + $0x78] sm:$0xff]
        %1308 = vmatprep.subr.mxu0 0.0
        %1309 = vmatpush1.msra.mxu0 %v1307
        %1310 = vmatprep.subr.mxu0 0.0
        %1311 = vmatpush1.msra.mxu0 %v1306
        %1312 = vmatprep.subr.mxu0 0.0
        %1313 = vmatpush1.msra.mxu0 %v1305
        %1314 = vmatprep.subr.mxu0 0.0
        %1315 = vmatpush1.msra.mxu0 %v1304
        %1316 = vmatprep.subr.mxu0 0.0
        %1317 = vmatpush1.msra.mxu0 %v1303
        %1318 = vmatprep.subr.mxu0 0.0
        %1319 = vmatpush1.msra.mxu0 %v1302
        %1320 = vmatprep.subr.mxu0 0.0
        %1321 = vmatpush1.msra.mxu0 %v1301
        %1322 = vmatprep.subr.mxu0 0.0
        %1323 = vmatpush1.msra.mxu0 %v1300
        %1324 = vmatprep.subr.mxu0 0.0
        %1325 = vmatpush1.msra.mxu0 %v1299
        %1326 = vmatprep.subr.mxu0 0.0
        %1327 = vmatpush1.msra.mxu0 %v1298
        %1328 = vmatprep.subr.mxu0 0.0
        %1329 = vmatpush1.msra.mxu0 %v1297
        %1330 = vmatprep.subr.mxu0 0.0
        %1331 = vmatpush1.msra.mxu0 %v1296
        %1332 = vmatprep.subr.mxu0 0.0
        %1333 = vmatpush1.msra.mxu0 %v1295
        %1334 = vmatprep.subr.mxu0 0.0
        %1335 = vmatpush1.msra.mxu0 %v1294
        %1336 = vmatprep.subr.mxu0 0.0
        %1337 = vmatpush1.msra.mxu0 %v1293
        %1338 = vmatprep.subr.mxu0 0.0
        %1339 = vmatpush1.msra.mxu0 %v1292
        %1340 = vmatprep.subr.mxu0 0.0
        %1341 = vmatpush2.msra.mxu0 0.0
        %1342 = vmatprep.subr.mxu0 0.0
        %1343 = vmatpush2.msra.mxu0 0.0
        %1344 = vmatprep.subr.mxu0 0.0
        %1345 = vmatpush2.msra.mxu0 0.0
        %1346 = vmatprep.subr.mxu0 0.0
        %1347 = vmatpush2.msra.mxu0 0.0
        %1348 = vmatprep.subr.mxu0 0.0
        %1349 = vmatpush2.msra.mxu0 0.0
        %1350 = vmatprep.subr.mxu0 0.0
        %1351 = vmatpush2.msra.mxu0 0.0
        %1352 = vmatprep.subr.mxu0 0.0
        %1353 = vmatpush2.msra.mxu0 0.0
        %1354 = vmatprep.subr.mxu0 0.0
        %1355 = vmatpush2.msra.mxu0 0.0
        %1356 = vmatprep.subr.mxu0 0.0
        %1357 = vmatpush2.msra.mxu0 0.0
        %1358 = vmatprep.subr.mxu0 0.0
        %1359 = vmatpush2.msra.mxu0 0.0
        %1360 = vmatprep.subr.mxu0 0.0
        %1361 = vmatpush2.msra.mxu0 0.0
        %1362 = vmatprep.subr.mxu0 0.0
        %1363 = vmatpush2.msra.mxu0 0.0
        %1364 = vmatprep.subr.mxu0 0.0
        %1365 = vmatpush2.msra.mxu0 0.0
        %1366 = vmatprep.subr.mxu0 0.0
        %1367 = vmatpush2.msra.mxu0 0.0
        %1368 = vmatprep.subr.mxu0 0.0
        %1369 = vmatpush2.msra.mxu0 0.0
        %1370 = vmatprep.subr.mxu0 0.0
        %1371 = vmatpush2.msra.mxu0 0.0
        %1372 = vmatprep.mubr.f32.mxu0 0.0
        %1373 = vmatmul.mubr.f32.gmra.mxu0 %v684
        %v1374 = vpop.f32.mrf.mxu0
        %v1375 = vadd.f32 0.0, %v1374
        %v1376 = vpop.f32.mrf.mxu0
        %1377 = vmatprep.mubr.f32.mxu0 0.0
        %1378 = vmatmul.mubr.f32.gmra.mxu0 %v685
        %v1379 = vpop.f32.mrf.mxu0
        %v1380 = vadd.f32 0.0, %v1379
        %v1381 = vpop.f32.mrf.mxu0
        %1382 = vmatprep.mubr.f32.mxu0 0.0
        %1383 = vmatmul.mubr.f32.gmra.mxu0 %v686
        %v1384 = vpop.f32.mrf.mxu0
        %v1385 = vadd.f32 0.0, %v1384
        %v1386 = vpop.f32.mrf.mxu0
        %1387 = vmatprep.mubr.f32.mxu0 0.0
        %1388 = vmatmul.mubr.f32.gmra.mxu0 %v687
        %v1389 = vpop.f32.mrf.mxu0
        %v1390 = vadd.f32 0.0, %v1389
        %v1391 = vpop.f32.mrf.mxu0
        %1392 = vmatprep.mubr.f32.mxu0 0.0
        %1393 = vmatmul.mubr.f32.gmra.mxu0 %v688
        %v1394 = vpop.f32.mrf.mxu0
        %v1395 = vadd.f32 0.0, %v1394
        %v1396 = vpop.f32.mrf.mxu0
        %1397 = vmatprep.mubr.f32.mxu0 0.0
        %1398 = vmatmul.mubr.f32.gmra.mxu0 %v689
        %v1399 = vpop.f32.mrf.mxu0
        %v1400 = vadd.f32 0.0, %v1399
        %v1401 = vpop.f32.mrf.mxu0
        %1402 = vmatprep.mubr.f32.mxu0 0.0
        %1403 = vmatmul.mubr.f32.gmra.mxu0 %v690
        %v1404 = vpop.f32.mrf.mxu0
        %v1405 = vadd.f32 0.0, %v1404
        %v1406 = vpop.f32.mrf.mxu0
        %1407 = vmatprep.mubr.f32.mxu0 0.0
        %1408 = vmatmul.mubr.f32.gmra.mxu0 %v691
        %v1409 = vpop.f32.mrf.mxu0
        %v1410 = vadd.f32 0.0, %v1409
        %v1411 = vpop.f32.mrf.mxu0
        %1412 = vmatprep.mubr.f32.mxu0 0.0
        %1413 = vmatmul.mubr.f32.gmra.mxu0 %v692
        %v1414 = vpop.f32.mrf.mxu0
        %v1415 = vadd.f32 0.0, %v1414
        %v1416 = vpop.f32.mrf.mxu0
        %1417 = vmatprep.mubr.f32.mxu0 0.0
        %1418 = vmatmul.mubr.f32.gmra.mxu0 %v693
        %v1419 = vpop.f32.mrf.mxu0
        %v1420 = vadd.f32 0.0, %v1419
        %v1421 = vpop.f32.mrf.mxu0
        %1422 = vmatprep.mubr.f32.mxu0 0.0
        %1423 = vmatmul.mubr.f32.gmra.mxu0 %v694
        %v1424 = vpop.f32.mrf.mxu0
        %v1425 = vadd.f32 0.0, %v1424
        %v1426 = vpop.f32.mrf.mxu0
        %1427 = vmatprep.mubr.f32.mxu0 0.0
        %1428 = vmatmul.mubr.f32.gmra.mxu0 %v695
        %v1429 = vpop.f32.mrf.mxu0
        %v1430 = vadd.f32 0.0, %v1429
        %v1431 = vpop.f32.mrf.mxu0
        %1432 = vmatprep.mubr.f32.mxu0 0.0
        %1433 = vmatmul.mubr.f32.gmra.mxu0 %v696
        %v1434 = vpop.f32.mrf.mxu0
        %v1435 = vadd.f32 0.0, %v1434
        %v1436 = vpop.f32.mrf.mxu0
        %1437 = vmatprep.mubr.f32.mxu0 0.0
        %1438 = vmatmul.mubr.f32.gmra.mxu0 %v697
        %v1439 = vpop.f32.mrf.mxu0
        %v1440 = vadd.f32 0.0, %v1439
        %v1441 = vpop.f32.mrf.mxu0
        %1442 = vmatprep.mubr.f32.mxu0 0.0
        %1443 = vmatmul.mubr.f32.gmra.mxu0 %v698
        %v1444 = vpop.f32.mrf.mxu0
        %v1445 = vadd.f32 0.0, %v1444
        %v1446 = vpop.f32.mrf.mxu0
        %1447 = vmatprep.mubr.f32.mxu0 0.0
        %1448 = vmatmul.mubr.f32.gmra.mxu0 %v699
        %v1449 = vpop.f32.mrf.mxu0
        %v1450 = vadd.f32 0.0, %v1449
        %v1451 = vpop.f32.mrf.mxu0
        %1452 = vmatprep.mubr.f32.mxu0 0.0
        %1453 = vmatmul.mubr.f32.gmra.mxu0 %v700
        %v1454 = vpop.f32.mrf.mxu0
        %v1455 = vadd.f32 0.0, %v1454
        %v1456 = vpop.f32.mrf.mxu0
        %1457 = vmatprep.mubr.f32.mxu0 0.0
        %1458 = vmatmul.mubr.f32.gmra.mxu0 %v701
        %v1459 = vpop.f32.mrf.mxu0
        %v1460 = vadd.f32 0.0, %v1459
        %v1461 = vpop.f32.mrf.mxu0
        %1462 = vmatprep.mubr.f32.mxu0 0.0
        %1463 = vmatmul.mubr.f32.gmra.mxu0 %v702
        %v1464 = vpop.f32.mrf.mxu0
        %v1465 = vadd.f32 0.0, %v1464
        %v1466 = vpop.f32.mrf.mxu0
        %1467 = vmatprep.mubr.f32.mxu0 0.0
        %1468 = vmatmul.mubr.f32.gmra.mxu0 %v703
        %v1469 = vpop.f32.mrf.mxu0
        %v1470 = vadd.f32 0.0, %v1469
        %v1471 = vpop.f32.mrf.mxu0
        %1472 = vmatprep.mubr.f32.mxu0 0.0
        %1473 = vmatmul.mubr.f32.gmra.mxu0 %v704
        %v1474 = vpop.f32.mrf.mxu0
        %v1475 = vadd.f32 0.0, %v1474
        %v1476 = vpop.f32.mrf.mxu0
        %1477 = vmatprep.mubr.f32.mxu0 0.0
        %1478 = vmatmul.mubr.f32.gmra.mxu0 %v705
        %v1479 = vpop.f32.mrf.mxu0
        %v1480 = vadd.f32 0.0, %v1479
        %v1481 = vpop.f32.mrf.mxu0
        %1482 = vmatprep.mubr.f32.mxu0 0.0
        %1483 = vmatmul.mubr.f32.gmra.mxu0 %v706
        %v1484 = vpop.f32.mrf.mxu0
        %v1485 = vadd.f32 0.0, %v1484
        %v1486 = vpop.f32.mrf.mxu0
        %1487 = vmatprep.mubr.f32.mxu0 0.0
        %1488 = vmatmul.mubr.f32.gmra.mxu0 %v707
        %v1489 = vpop.f32.mrf.mxu0
        %v1490 = vadd.f32 0.0, %v1489
        %v1491 = vpop.f32.mrf.mxu0
        %1492 = vmatprep.mubr.f32.mxu0 0.0
        %1493 = vmatmul.mubr.f32.gmra.mxu0 %v708
        %v1494 = vpop.f32.mrf.mxu0
        %v1495 = vadd.f32 0.0, %v1494
        %v1496 = vpop.f32.mrf.mxu0
        %1497 = vdwg.mxu0
        %s1498 = scalar_lea.vmem %s3, 256
        %v1499 = vld [vmem:[%s1498] sm:$0xff]
        %v1500 = vld [vmem:[%s1498 + $0x8] sm:$0xff]
        %v1501 = vld [vmem:[%s1498 + $0x10] sm:$0xff]
        %v1502 = vld [vmem:[%s1498 + $0x18] sm:$0xff]
        %v1503 = vld [vmem:[%s1498 + $0x20] sm:$0xff]
        %v1504 = vld [vmem:[%s1498 + $0x28] sm:$0xff]
        %v1505 = vld [vmem:[%s1498 + $0x30] sm:$0xff]
        %v1506 = vld [vmem:[%s1498 + $0x38] sm:$0xff]
        %v1507 = vld [vmem:[%s1498 + $0x40] sm:$0xff]
        %v1508 = vld [vmem:[%s1498 + $0x48] sm:$0xff]
        %v1509 = vld [vmem:[%s1498 + $0x50] sm:$0xff]
        %v1510 = vld [vmem:[%s1498 + $0x58] sm:$0xff]
        %v1511 = vld [vmem:[%s1498 + $0x60] sm:$0xff]
        %v1512 = vld [vmem:[%s1498 + $0x68] sm:$0xff]
        %v1513 = vld [vmem:[%s1498 + $0x70] sm:$0xff]
        %v1514 = vld [vmem:[%s1498 + $0x78] sm:$0xff]
        %1515 = vmatprep.subr.mxu0 0.0
        %1516 = vmatpush1.msra.mxu0 %v1514
        %1517 = vmatprep.subr.mxu0 0.0
        %1518 = vmatpush1.msra.mxu0 %v1513
        %1519 = vmatprep.subr.mxu0 0.0
        %1520 = vmatpush1.msra.mxu0 %v1512
        %1521 = vmatprep.subr.mxu0 0.0
        %1522 = vmatpush1.msra.mxu0 %v1511
        %1523 = vmatprep.subr.mxu0 0.0
        %1524 = vmatpush1.msra.mxu0 %v1510
        %1525 = vmatprep.subr.mxu0 0.0
        %1526 = vmatpush1.msra.mxu0 %v1509
        %1527 = vmatprep.subr.mxu0 0.0
        %1528 = vmatpush1.msra.mxu0 %v1508
        %1529 = vmatprep.subr.mxu0 0.0
        %1530 = vmatpush1.msra.mxu0 %v1507
        %1531 = vmatprep.subr.mxu0 0.0
        %1532 = vmatpush1.msra.mxu0 %v1506
        %1533 = vmatprep.subr.mxu0 0.0
        %1534 = vmatpush1.msra.mxu0 %v1505
        %1535 = vmatprep.subr.mxu0 0.0
        %1536 = vmatpush1.msra.mxu0 %v1504
        %1537 = vmatprep.subr.mxu0 0.0
        %1538 = vmatpush1.msra.mxu0 %v1503
        %1539 = vmatprep.subr.mxu0 0.0
        %1540 = vmatpush1.msra.mxu0 %v1502
        %1541 = vmatprep.subr.mxu0 0.0
        %1542 = vmatpush1.msra.mxu0 %v1501
        %1543 = vmatprep.subr.mxu0 0.0
        %1544 = vmatpush1.msra.mxu0 %v1500
        %1545 = vmatprep.subr.mxu0 0.0
        %1546 = vmatpush1.msra.mxu0 %v1499
        %1547 = vmatprep.subr.mxu0 0.0
        %1548 = vmatpush2.msra.mxu0 0.0
        %1549 = vmatprep.subr.mxu0 0.0
        %1550 = vmatpush2.msra.mxu0 0.0
        %1551 = vmatprep.subr.mxu0 0.0
        %1552 = vmatpush2.msra.mxu0 0.0
        %1553 = vmatprep.subr.mxu0 0.0
        %1554 = vmatpush2.msra.mxu0 0.0
        %1555 = vmatprep.subr.mxu0 0.0
        %1556 = vmatpush2.msra.mxu0 0.0
        %1557 = vmatprep.subr.mxu0 0.0
        %1558 = vmatpush2.msra.mxu0 0.0
        %1559 = vmatprep.subr.mxu0 0.0
        %1560 = vmatpush2.msra.mxu0 0.0
        %1561 = vmatprep.subr.mxu0 0.0
        %1562 = vmatpush2.msra.mxu0 0.0
        %1563 = vmatprep.subr.mxu0 0.0
        %1564 = vmatpush2.msra.mxu0 0.0
        %1565 = vmatprep.subr.mxu0 0.0
        %1566 = vmatpush2.msra.mxu0 0.0
        %1567 = vmatprep.subr.mxu0 0.0
        %1568 = vmatpush2.msra.mxu0 0.0
        %1569 = vmatprep.subr.mxu0 0.0
        %1570 = vmatpush2.msra.mxu0 0.0
        %1571 = vmatprep.subr.mxu0 0.0
        %1572 = vmatpush2.msra.mxu0 0.0
        %1573 = vmatprep.subr.mxu0 0.0
        %1574 = vmatpush2.msra.mxu0 0.0
        %1575 = vmatprep.subr.mxu0 0.0
        %1576 = vmatpush2.msra.mxu0 0.0
        %1577 = vmatprep.subr.mxu0 0.0
        %1578 = vmatpush2.msra.mxu0 0.0
        %1579 = vmatprep.mubr.f32.mxu0 0.0
        %1580 = vmatmul.mubr.f32.gmra.mxu0 %v684
        %v1581 = vpop.f32.mrf.mxu0
        %v1582 = vadd.f32 0.0, %v1581
        %v1583 = vpop.f32.mrf.mxu0
        %1584 = vmatprep.mubr.f32.mxu0 0.0
        %1585 = vmatmul.mubr.f32.gmra.mxu0 %v685
        %v1586 = vpop.f32.mrf.mxu0
        %v1587 = vadd.f32 0.0, %v1586
        %v1588 = vpop.f32.mrf.mxu0
        %1589 = vmatprep.mubr.f32.mxu0 0.0
        %1590 = vmatmul.mubr.f32.gmra.mxu0 %v686
        %v1591 = vpop.f32.mrf.mxu0
        %v1592 = vadd.f32 0.0, %v1591
        %v1593 = vpop.f32.mrf.mxu0
        %1594 = vmatprep.mubr.f32.mxu0 0.0
        %1595 = vmatmul.mubr.f32.gmra.mxu0 %v687
        %v1596 = vpop.f32.mrf.mxu0
        %v1597 = vadd.f32 0.0, %v1596
        %v1598 = vpop.f32.mrf.mxu0
        %1599 = vmatprep.mubr.f32.mxu0 0.0
        %1600 = vmatmul.mubr.f32.gmra.mxu0 %v688
        %v1601 = vpop.f32.mrf.mxu0
        %v1602 = vadd.f32 0.0, %v1601
        %v1603 = vpop.f32.mrf.mxu0
        %1604 = vmatprep.mubr.f32.mxu0 0.0
        %1605 = vmatmul.mubr.f32.gmra.mxu0 %v689
        %v1606 = vpop.f32.mrf.mxu0
        %v1607 = vadd.f32 0.0, %v1606
        %v1608 = vpop.f32.mrf.mxu0
        %1609 = vmatprep.mubr.f32.mxu0 0.0
        %1610 = vmatmul.mubr.f32.gmra.mxu0 %v690
        %v1611 = vpop.f32.mrf.mxu0
        %v1612 = vadd.f32 0.0, %v1611
        %v1613 = vpop.f32.mrf.mxu0
        %1614 = vmatprep.mubr.f32.mxu0 0.0
        %1615 = vmatmul.mubr.f32.gmra.mxu0 %v691
        %v1616 = vpop.f32.mrf.mxu0
        %v1617 = vadd.f32 0.0, %v1616
        %v1618 = vpop.f32.mrf.mxu0
        %1619 = vmatprep.mubr.f32.mxu0 0.0
        %1620 = vmatmul.mubr.f32.gmra.mxu0 %v692
        %v1621 = vpop.f32.mrf.mxu0
        %v1622 = vadd.f32 0.0, %v1621
        %v1623 = vpop.f32.mrf.mxu0
        %1624 = vmatprep.mubr.f32.mxu0 0.0
        %1625 = vmatmul.mubr.f32.gmra.mxu0 %v693
        %v1626 = vpop.f32.mrf.mxu0
        %v1627 = vadd.f32 0.0, %v1626
        %v1628 = vpop.f32.mrf.mxu0
        %1629 = vmatprep.mubr.f32.mxu0 0.0
        %1630 = vmatmul.mubr.f32.gmra.mxu0 %v694
        %v1631 = vpop.f32.mrf.mxu0
        %v1632 = vadd.f32 0.0, %v1631
        %v1633 = vpop.f32.mrf.mxu0
        %1634 = vmatprep.mubr.f32.mxu0 0.0
        %1635 = vmatmul.mubr.f32.gmra.mxu0 %v695
        %v1636 = vpop.f32.mrf.mxu0
        %v1637 = vadd.f32 0.0, %v1636
        %v1638 = vpop.f32.mrf.mxu0
        %1639 = vmatprep.mubr.f32.mxu0 0.0
        %1640 = vmatmul.mubr.f32.gmra.mxu0 %v696
        %v1641 = vpop.f32.mrf.mxu0
        %v1642 = vadd.f32 0.0, %v1641
        %v1643 = vpop.f32.mrf.mxu0
        %1644 = vmatprep.mubr.f32.mxu0 0.0
        %1645 = vmatmul.mubr.f32.gmra.mxu0 %v697
        %v1646 = vpop.f32.mrf.mxu0
        %v1647 = vadd.f32 0.0, %v1646
        %v1648 = vpop.f32.mrf.mxu0
        %1649 = vmatprep.mubr.f32.mxu0 0.0
        %1650 = vmatmul.mubr.f32.gmra.mxu0 %v698
        %v1651 = vpop.f32.mrf.mxu0
        %v1652 = vadd.f32 0.0, %v1651
        %v1653 = vpop.f32.mrf.mxu0
        %1654 = vmatprep.mubr.f32.mxu0 0.0
        %1655 = vmatmul.mubr.f32.gmra.mxu0 %v699
        %v1656 = vpop.f32.mrf.mxu0
        %v1657 = vadd.f32 0.0, %v1656
        %v1658 = vpop.f32.mrf.mxu0
        %1659 = vmatprep.mubr.f32.mxu0 0.0
        %1660 = vmatmul.mubr.f32.gmra.mxu0 %v700
        %v1661 = vpop.f32.mrf.mxu0
        %v1662 = vadd.f32 0.0, %v1661
        %v1663 = vpop.f32.mrf.mxu0
        %1664 = vmatprep.mubr.f32.mxu0 0.0
        %1665 = vmatmul.mubr.f32.gmra.mxu0 %v701
        %v1666 = vpop.f32.mrf.mxu0
        %v1667 = vadd.f32 0.0, %v1666
        %v1668 = vpop.f32.mrf.mxu0
        %1669 = vmatprep.mubr.f32.mxu0 0.0
        %1670 = vmatmul.mubr.f32.gmra.mxu0 %v702
        %v1671 = vpop.f32.mrf.mxu0
        %v1672 = vadd.f32 0.0, %v1671
        %v1673 = vpop.f32.mrf.mxu0
        %1674 = vmatprep.mubr.f32.mxu0 0.0
        %1675 = vmatmul.mubr.f32.gmra.mxu0 %v703
        %v1676 = vpop.f32.mrf.mxu0
        %v1677 = vadd.f32 0.0, %v1676
        %v1678 = vpop.f32.mrf.mxu0
        %1679 = vmatprep.mubr.f32.mxu0 0.0
        %1680 = vmatmul.mubr.f32.gmra.mxu0 %v704
        %v1681 = vpop.f32.mrf.mxu0
        %v1682 = vadd.f32 0.0, %v1681
        %v1683 = vpop.f32.mrf.mxu0
        %1684 = vmatprep.mubr.f32.mxu0 0.0
        %1685 = vmatmul.mubr.f32.gmra.mxu0 %v705
        %v1686 = vpop.f32.mrf.mxu0
        %v1687 = vadd.f32 0.0, %v1686
        %v1688 = vpop.f32.mrf.mxu0
        %1689 = vmatprep.mubr.f32.mxu0 0.0
        %1690 = vmatmul.mubr.f32.gmra.mxu0 %v706
        %v1691 = vpop.f32.mrf.mxu0
        %v1692 = vadd.f32 0.0, %v1691
        %v1693 = vpop.f32.mrf.mxu0
        %1694 = vmatprep.mubr.f32.mxu0 0.0
        %1695 = vmatmul.mubr.f32.gmra.mxu0 %v707
        %v1696 = vpop.f32.mrf.mxu0
        %v1697 = vadd.f32 0.0, %v1696
        %v1698 = vpop.f32.mrf.mxu0
        %1699 = vmatprep.mubr.f32.mxu0 0.0
        %1700 = vmatmul.mubr.f32.gmra.mxu0 %v708
        %v1701 = vpop.f32.mrf.mxu0
        %v1702 = vadd.f32 0.0, %v1701
        %v1703 = vpop.f32.mrf.mxu0
        %1704 = vdwg.mxu0
        %v1705 = vrot.slane %v1168, 7
        %v1706 = vrot.slane %v1173, 7
        %v1707 = vrot.slane %v1178, 7
        %v1708 = vrot.slane %v1183, 7
        %v1709 = vrot.slane %v1188, 7
        %v1710 = vrot.slane %v1193, 7
        %v1711 = vrot.slane %v1198, 7
        %v1712 = vrot.slane %v1203, 7
        %v1713 = vrot.slane %v1208, 7
        %v1714 = vrot.slane %v1213, 7
        %v1715 = vrot.slane %v1218, 7
        %v1716 = vrot.slane %v1223, 7
        %v1717 = vrot.slane %v1228, 7
        %v1718 = vrot.slane %v1233, 7
        %v1719 = vrot.slane %v1238, 7
        %v1720 = vrot.slane %v1243, 7
        %v1721 = vrot.slane %v1248, 7
        %v1722 = vrot.slane %v1253, 7
        %v1723 = vrot.slane %v1258, 7
        %v1724 = vrot.slane %v1263, 7
        %v1725 = vrot.slane %v1268, 7
        %v1726 = vrot.slane %v1273, 7
        %v1727 = vrot.slane %v1278, 7
        %v1728 = vrot.slane %v1283, 7
        %v1729 = vrot.slane %v1288, 7
        %vm1730 = vcmp.lt.s32.totalorder %v710, 1
        %v1731 = vsel %vm1730, %v1728, %v1729
        %v1732 = vsel %vm1730, %v1727, %v1728
        %v1733 = vsel %vm1730, %v1726, %v1727
        %v1734 = vsel %vm1730, %v1725, %v1726
        %v1735 = vsel %vm1730, %v1724, %v1725
        %v1736 = vsel %vm1730, %v1723, %v1724
        %v1737 = vsel %vm1730, %v1722, %v1723
        %v1738 = vsel %vm1730, %v1721, %v1722
        %v1739 = vsel %vm1730, %v1720, %v1721
        %v1740 = vsel %vm1730, %v1719, %v1720
        %v1741 = vsel %vm1730, %v1718, %v1719
        %v1742 = vsel %vm1730, %v1717, %v1718
        %v1743 = vsel %vm1730, %v1716, %v1717
        %v1744 = vsel %vm1730, %v1715, %v1716
        %v1745 = vsel %vm1730, %v1714, %v1715
        %v1746 = vsel %vm1730, %v1713, %v1714
        %v1747 = vsel %vm1730, %v1712, %v1713
        %v1748 = vsel %vm1730, %v1711, %v1712
        %v1749 = vsel %vm1730, %v1710, %v1711
        %v1750 = vsel %vm1730, %v1709, %v1710
        %v1751 = vsel %vm1730, %v1708, %v1709
        %v1752 = vsel %vm1730, %v1707, %v1708
        %v1753 = vsel %vm1730, %v1706, %v1707
        %v1754 = vsel %vm1730, %v1705, %v1706
        %v1755 = vsel %vm1730, %v1729, %v1705
        %v1756 = vsel %vm1035, 1, 0
        %v1757 = vsel %vm1036, 1, 0
        %v1758 = vsel %vm1037, 1, 0
        %v1759 = vsel %vm1038, 1, 0
        %v1760 = vsel %vm1039, 1, 0
        %v1761 = vsel %vm1040, 1, 0
        %v1762 = vsel %vm1041, 1, 0
        %v1763 = vsel %vm1042, 1, 0
        %v1764 = vsel %vm1043, 1, 0
        %v1765 = vsel %vm1044, 1, 0
        %v1766 = vsel %vm1045, 1, 0
        %v1767 = vsel %vm1046, 1, 0
        %v1768 = vsel %vm1047, 1, 0
        %v1769 = vsel %vm1048, 1, 0
        %v1770 = vsel %vm1049, 1, 0
        %v1771 = vsel %vm1050, 1, 0
        %v1772 = vsel %vm1051, 1, 0
        %v1773 = vsel %vm1052, 1, 0
        %v1774 = vsel %vm1053, 1, 0
        %v1775 = vsel %vm1054, 1, 0
        %v1776 = vsel %vm1055, 1, 0
        %v1777 = vsel %vm1056, 1, 0
        %v1778 = vsel %vm1057, 1, 0
        %v1779 = vsel %vm1058, 1, 0
        %v1780 = vsel %vm1059, 1, 0
        %vm1781 = vcmp.eq.s32.totalorder %v1756, 1
        %vm1782 = vcmp.eq.s32.totalorder %v1757, 1
        %vm1783 = vcmp.eq.s32.totalorder %v1758, 1
        %vm1784 = vcmp.eq.s32.totalorder %v1759, 1
        %vm1785 = vcmp.eq.s32.totalorder %v1760, 1
        %vm1786 = vcmp.eq.s32.totalorder %v1761, 1
        %vm1787 = vcmp.eq.s32.totalorder %v1762, 1
        %vm1788 = vcmp.eq.s32.totalorder %v1763, 1
        %vm1789 = vcmp.eq.s32.totalorder %v1764, 1
        %vm1790 = vcmp.eq.s32.totalorder %v1765, 1
        %vm1791 = vcmp.eq.s32.totalorder %v1766, 1
        %vm1792 = vcmp.eq.s32.totalorder %v1767, 1
        %vm1793 = vcmp.eq.s32.totalorder %v1768, 1
        %vm1794 = vcmp.eq.s32.totalorder %v1769, 1
        %vm1795 = vcmp.eq.s32.totalorder %v1770, 1
        %vm1796 = vcmp.eq.s32.totalorder %v1771, 1
        %vm1797 = vcmp.eq.s32.totalorder %v1772, 1
        %vm1798 = vcmp.eq.s32.totalorder %v1773, 1
        %vm1799 = vcmp.eq.s32.totalorder %v1774, 1
        %vm1800 = vcmp.eq.s32.totalorder %v1775, 1
        %vm1801 = vcmp.eq.s32.totalorder %v1776, 1
        %vm1802 = vcmp.eq.s32.totalorder %v1777, 1
        %vm1803 = vcmp.eq.s32.totalorder %v1778, 1
        %vm1804 = vcmp.eq.s32.totalorder %v1779, 1
        %vm1805 = vcmp.eq.s32.totalorder %v1780, 1
        %v1806 = vsel %vm1781, %v1755, 0.0
        %v1807 = vsel %vm1782, %v1754, 0.0
        %v1808 = vsel %vm1783, %v1753, 0.0
        %v1809 = vsel %vm1784, %v1752, 0.0
        %v1810 = vsel %vm1785, %v1751, 0.0
        %v1811 = vsel %vm1786, %v1750, 0.0
        %v1812 = vsel %vm1787, %v1749, 0.0
        %v1813 = vsel %vm1788, %v1748, 0.0
        %v1814 = vsel %vm1789, %v1747, 0.0
        %v1815 = vsel %vm1790, %v1746, 0.0
        %v1816 = vsel %vm1791, %v1745, 0.0
        %v1817 = vsel %vm1792, %v1744, 0.0
        %v1818 = vsel %vm1793, %v1743, 0.0
        %v1819 = vsel %vm1794, %v1742, 0.0
        %v1820 = vsel %vm1795, %v1741, 0.0
        %v1821 = vsel %vm1796, %v1740, 0.0
        %v1822 = vsel %vm1797, %v1739, 0.0
        %v1823 = vsel %vm1798, %v1738, 0.0
        %v1824 = vsel %vm1799, %v1737, 0.0
        %v1825 = vsel %vm1800, %v1736, 0.0
        %v1826 = vsel %vm1801, %v1735, 0.0
        %v1827 = vsel %vm1802, %v1734, 0.0
        %v1828 = vsel %vm1803, %v1733, 0.0
        %v1829 = vsel %vm1804, %v1732, 0.0
        %v1830 = vsel %vm1805, %v1731, 0.0
        %v1831 = vadd.f32 %v1806, %v1375
        %v1832 = vadd.f32 %v1807, %v1380
        %v1833 = vadd.f32 %v1808, %v1385
        %v1834 = vadd.f32 %v1809, %v1390
        %v1835 = vadd.f32 %v1810, %v1395
        %v1836 = vadd.f32 %v1811, %v1400
        %v1837 = vadd.f32 %v1812, %v1405
        %v1838 = vadd.f32 %v1813, %v1410
        %v1839 = vadd.f32 %v1814, %v1415
        %v1840 = vadd.f32 %v1815, %v1420
        %v1841 = vadd.f32 %v1816, %v1425
        %v1842 = vadd.f32 %v1817, %v1430
        %v1843 = vadd.f32 %v1818, %v1435
        %v1844 = vadd.f32 %v1819, %v1440
        %v1845 = vadd.f32 %v1820, %v1445
        %v1846 = vadd.f32 %v1821, %v1450
        %v1847 = vadd.f32 %v1822, %v1455
        %v1848 = vadd.f32 %v1823, %v1460
        %v1849 = vadd.f32 %v1824, %v1465
        %v1850 = vadd.f32 %v1825, %v1470
        %v1851 = vadd.f32 %v1826, %v1475
        %v1852 = vadd.f32 %v1827, %v1480
        %v1853 = vadd.f32 %v1828, %v1485
        %v1854 = vadd.f32 %v1829, %v1490
        %v1855 = vadd.f32 %v1830, %v1495
        %v1856 = vrot.slane %v1582, 1
        %v1857 = vrot.slane %v1587, 1
        %v1858 = vrot.slane %v1592, 1
        %v1859 = vrot.slane %v1597, 1
        %v1860 = vrot.slane %v1602, 1
        %v1861 = vrot.slane %v1607, 1
        %v1862 = vrot.slane %v1612, 1
        %v1863 = vrot.slane %v1617, 1
        %v1864 = vrot.slane %v1622, 1
        %v1865 = vrot.slane %v1627, 1
        %v1866 = vrot.slane %v1632, 1
        %v1867 = vrot.slane %v1637, 1
        %v1868 = vrot.slane %v1642, 1
        %v1869 = vrot.slane %v1647, 1
        %v1870 = vrot.slane %v1652, 1
        %v1871 = vrot.slane %v1657, 1
        %v1872 = vrot.slane %v1662, 1
        %v1873 = vrot.slane %v1667, 1
        %v1874 = vrot.slane %v1672, 1
        %v1875 = vrot.slane %v1677, 1
        %v1876 = vrot.slane %v1682, 1
        %v1877 = vrot.slane %v1687, 1
        %v1878 = vrot.slane %v1692, 1
        %v1879 = vrot.slane %v1697, 1
        %v1880 = vrot.slane %v1702, 1
        %vm1881 = vcmp.lt.s32.totalorder %v710, 7
        %v1882 = vsel %vm1881, %v1879, %v1880
        %v1883 = vsel %vm1881, %v1878, %v1879
        %v1884 = vsel %vm1881, %v1877, %v1878
        %v1885 = vsel %vm1881, %v1876, %v1877
        %v1886 = vsel %vm1881, %v1875, %v1876
        %v1887 = vsel %vm1881, %v1874, %v1875
        %v1888 = vsel %vm1881, %v1873, %v1874
        %v1889 = vsel %vm1881, %v1872, %v1873
        %v1890 = vsel %vm1881, %v1871, %v1872
        %v1891 = vsel %vm1881, %v1870, %v1871
        %v1892 = vsel %vm1881, %v1869, %v1870
        %v1893 = vsel %vm1881, %v1868, %v1869
        %v1894 = vsel %vm1881, %v1867, %v1868
        %v1895 = vsel %vm1881, %v1866, %v1867
        %v1896 = vsel %vm1881, %v1865, %v1866
        %v1897 = vsel %vm1881, %v1864, %v1865
        %v1898 = vsel %vm1881, %v1863, %v1864
        %v1899 = vsel %vm1881, %v1862, %v1863
        %v1900 = vsel %vm1881, %v1861, %v1862
        %v1901 = vsel %vm1881, %v1860, %v1861
        %v1902 = vsel %vm1881, %v1859, %v1860
        %v1903 = vsel %vm1881, %v1858, %v1859
        %v1904 = vsel %vm1881, %v1857, %v1858
        %v1905 = vsel %vm1881, %v1856, %v1857
        %v1906 = vsel %vm1881, %v1880, %v1856
        %v1907 = vsel %vm1060, 1, 0
        %v1908 = vsel %vm1061, 1, 0
        %v1909 = vsel %vm1062, 1, 0
        %v1910 = vsel %vm1063, 1, 0
        %v1911 = vsel %vm1064, 1, 0
        %v1912 = vsel %vm1065, 1, 0
        %v1913 = vsel %vm1066, 1, 0
        %v1914 = vsel %vm1067, 1, 0
        %v1915 = vsel %vm1068, 1, 0
        %v1916 = vsel %vm1069, 1, 0
        %v1917 = vsel %vm1070, 1, 0
        %v1918 = vsel %vm1071, 1, 0
        %v1919 = vsel %vm1072, 1, 0
        %v1920 = vsel %vm1073, 1, 0
        %v1921 = vsel %vm1074, 1, 0
        %v1922 = vsel %vm1075, 1, 0
        %v1923 = vsel %vm1076, 1, 0
        %v1924 = vsel %vm1077, 1, 0
        %v1925 = vsel %vm1078, 1, 0
        %v1926 = vsel %vm1079, 1, 0
        %v1927 = vsel %vm1080, 1, 0
        %v1928 = vsel %vm1081, 1, 0
        %v1929 = vsel %vm1082, 1, 0
        %v1930 = vsel %vm1083, 1, 0
        %v1931 = vsel %vm1084, 1, 0
        %vm1932 = vcmp.eq.s32.totalorder %v1907, 1
        %vm1933 = vcmp.eq.s32.totalorder %v1908, 1
        %vm1934 = vcmp.eq.s32.totalorder %v1909, 1
        %vm1935 = vcmp.eq.s32.totalorder %v1910, 1
        %vm1936 = vcmp.eq.s32.totalorder %v1911, 1
        %vm1937 = vcmp.eq.s32.totalorder %v1912, 1
        %vm1938 = vcmp.eq.s32.totalorder %v1913, 1
        %vm1939 = vcmp.eq.s32.totalorder %v1914, 1
        %vm1940 = vcmp.eq.s32.totalorder %v1915, 1
        %vm1941 = vcmp.eq.s32.totalorder %v1916, 1
        %vm1942 = vcmp.eq.s32.totalorder %v1917, 1
        %vm1943 = vcmp.eq.s32.totalorder %v1918, 1
        %vm1944 = vcmp.eq.s32.totalorder %v1919, 1
        %vm1945 = vcmp.eq.s32.totalorder %v1920, 1
        %vm1946 = vcmp.eq.s32.totalorder %v1921, 1
        %vm1947 = vcmp.eq.s32.totalorder %v1922, 1
        %vm1948 = vcmp.eq.s32.totalorder %v1923, 1
        %vm1949 = vcmp.eq.s32.totalorder %v1924, 1
        %vm1950 = vcmp.eq.s32.totalorder %v1925, 1
        %vm1951 = vcmp.eq.s32.totalorder %v1926, 1
        %vm1952 = vcmp.eq.s32.totalorder %v1927, 1
        %vm1953 = vcmp.eq.s32.totalorder %v1928, 1
        %vm1954 = vcmp.eq.s32.totalorder %v1929, 1
        %vm1955 = vcmp.eq.s32.totalorder %v1930, 1
        %vm1956 = vcmp.eq.s32.totalorder %v1931, 1
        %v1957 = vsel %vm1932, %v1905, 0.0
        %v1958 = vsel %vm1933, %v1904, 0.0
        %v1959 = vsel %vm1934, %v1903, 0.0
        %v1960 = vsel %vm1935, %v1902, 0.0
        %v1961 = vsel %vm1936, %v1901, 0.0
        %v1962 = vsel %vm1937, %v1900, 0.0
        %v1963 = vsel %vm1938, %v1899, 0.0
        %v1964 = vsel %vm1939, %v1898, 0.0
        %v1965 = vsel %vm1940, %v1897, 0.0
        %v1966 = vsel %vm1941, %v1896, 0.0
        %v1967 = vsel %vm1942, %v1895, 0.0
        %v1968 = vsel %vm1943, %v1894, 0.0
        %v1969 = vsel %vm1944, %v1893, 0.0
        %v1970 = vsel %vm1945, %v1892, 0.0
        %v1971 = vsel %vm1946, %v1891, 0.0
        %v1972 = vsel %vm1947, %v1890, 0.0
        %v1973 = vsel %vm1948, %v1889, 0.0
        %v1974 = vsel %vm1949, %v1888, 0.0
        %v1975 = vsel %vm1950, %v1887, 0.0
        %v1976 = vsel %vm1951, %v1886, 0.0
        %v1977 = vsel %vm1952, %v1885, 0.0
        %v1978 = vsel %vm1953, %v1884, 0.0
        %v1979 = vsel %vm1954, %v1883, 0.0
        %v1980 = vsel %vm1955, %v1882, 0.0
        %v1981 = vsel %vm1956, %v1906, 0.0
        %v1982 = vadd.f32 %v1831, %v1957
        %v1983 = vadd.f32 %v1832, %v1958
        %v1984 = vadd.f32 %v1833, %v1959
        %v1985 = vadd.f32 %v1834, %v1960
        %v1986 = vadd.f32 %v1835, %v1961
        %v1987 = vadd.f32 %v1836, %v1962
        %v1988 = vadd.f32 %v1837, %v1963
        %v1989 = vadd.f32 %v1838, %v1964
        %v1990 = vadd.f32 %v1839, %v1965
        %v1991 = vadd.f32 %v1840, %v1966
        %v1992 = vadd.f32 %v1841, %v1967
        %v1993 = vadd.f32 %v1842, %v1968
        %v1994 = vadd.f32 %v1843, %v1969
        %v1995 = vadd.f32 %v1844, %v1970
        %v1996 = vadd.f32 %v1845, %v1971
        %v1997 = vadd.f32 %v1846, %v1972
        %v1998 = vadd.f32 %v1847, %v1973
        %v1999 = vadd.f32 %v1848, %v1974
        %v2000 = vadd.f32 %v1849, %v1975
        %v2001 = vadd.f32 %v1850, %v1976
        %v2002 = vadd.f32 %v1851, %v1977
        %v2003 = vadd.f32 %v1852, %v1978
        %v2004 = vadd.f32 %v1853, %v1979
        %v2005 = vadd.f32 %v1854, %v1980
        %v2006 = vadd.f32 %v1855, %v1981
        %v2007 = vld [vmem:[%s4] sm:$0x1]
        %v2009 = vlaneseq
        %v2010 = vshrl.u32 %v2009, 7
        %v2011 = vsub.s32 0, %v2010
        %v2012 = vrot.slane %v2007, %v2011
        %v2014 = vadd.f32 %v1982, %v2012
        %v2015 = vadd.f32 %v1983, %v2012
        %v2016 = vadd.f32 %v1984, %v2012
        %v2017 = vadd.f32 %v1985, %v2012
        %v2018 = vadd.f32 %v1986, %v2012
        %v2019 = vadd.f32 %v1987, %v2012
        %v2020 = vadd.f32 %v1988, %v2012
        %v2021 = vadd.f32 %v1989, %v2012
        %v2022 = vadd.f32 %v1990, %v2012
        %v2023 = vadd.f32 %v1991, %v2012
        %v2024 = vadd.f32 %v1992, %v2012
        %v2025 = vadd.f32 %v1993, %v2012
        %v2026 = vadd.f32 %v1994, %v2012
        %v2027 = vadd.f32 %v1995, %v2012
        %v2028 = vadd.f32 %v1996, %v2012
        %v2029 = vadd.f32 %v1997, %v2012
        %v2030 = vadd.f32 %v1998, %v2012
        %v2031 = vadd.f32 %v1999, %v2012
        %v2032 = vadd.f32 %v2000, %v2012
        %v2033 = vadd.f32 %v2001, %v2012
        %v2034 = vadd.f32 %v2002, %v2012
        %v2035 = vadd.f32 %v2003, %v2012
        %v2036 = vadd.f32 %v2004, %v2012
        %v2037 = vadd.f32 %v2005, %v2012
        %v2038 = vadd.f32 %v2006, %v2012
        %v2039 = vld [vmem:[%s5] sm:$0xff]
        %v2040 = vld [vmem:[%s5 + $0x8] sm:$0xff]
        %v2041 = vld [vmem:[%s5 + $0x10] sm:$0xff]
        %v2042 = vld [vmem:[%s5 + $0x18] sm:$0xff]
        %v2043 = vld [vmem:[%s5 + $0x20] sm:$0xff]
        %v2044 = vld [vmem:[%s5 + $0x28] sm:$0xff]
        %v2045 = vld [vmem:[%s5 + $0x30] sm:$0xff]
        %v2046 = vld [vmem:[%s5 + $0x38] sm:$0xff]
        %vm2047 = vcmask 523264
        %v2049 = vsel %vm2047, %v2014, 0
        %v2052 = vsel %vm2047, %v2015, 0
        %v2055 = vsel %vm2047, %v2016, 0
        %v2058 = vsel %vm2047, %v2017, 0
        %v2061 = vsel %vm2047, %v2018, 0
        %v2064 = vsel %vm2047, %v2019, 0
        %v2067 = vsel %vm2047, %v2020, 0
        %v2070 = vsel %vm2047, %v2021, 0
        %v2073 = vsel %vm2047, %v2022, 0
        %v2076 = vsel %vm2047, %v2023, 0
        %v2079 = vsel %vm2047, %v2024, 0
        %v2082 = vsel %vm2047, %v2025, 0
        %v2085 = vsel %vm2047, %v2026, 0
        %v2088 = vsel %vm2047, %v2027, 0
        %v2091 = vsel %vm2047, %v2028, 0
        %v2094 = vsel %vm2047, %v2029, 0
        %v2097 = vsel %vm2047, %v2030, 0
        %v2100 = vsel %vm2047, %v2031, 0
        %v2103 = vsel %vm2047, %v2032, 0
        %v2106 = vsel %vm2047, %v2033, 0
        %v2109 = vsel %vm2047, %v2034, 0
        %v2112 = vsel %vm2047, %v2035, 0
        %v2115 = vsel %vm2047, %v2036, 0
        %v2118 = vsel %vm2047, %v2037, 0
        %v2121 = vsel %vm2047, %v2038, 0
        %2123 = vmatprep.subr.mxu0 0.0
        %2124 = vmatpush1.msra.mxu0 0.0
        %2125 = vmatprep.subr.mxu0 0.0
        %2126 = vmatpush1.msra.mxu0 0.0
        %2127 = vmatprep.subr.mxu0 0.0
        %2128 = vmatpush1.msra.mxu0 0.0
        %2129 = vmatprep.subr.mxu0 0.0
        %2130 = vmatpush1.msra.mxu0 0.0
        %2131 = vmatprep.subr.mxu0 0.0
        %2132 = vmatpush1.msra.mxu0 0.0
        %2133 = vmatprep.subr.mxu0 0.0
        %2134 = vmatpush1.msra.mxu0 0.0
        %2135 = vmatprep.subr.mxu0 0.0
        %2136 = vmatpush1.msra.mxu0 0.0
        %2137 = vmatprep.subr.mxu0 0.0
        %2138 = vmatpush1.msra.mxu0 0.0
        %2139 = vmatprep.subr.mxu0 0.0
        %2140 = vmatpush1.msra.mxu0 %v2046
        %2141 = vmatprep.subr.mxu0 0.0
        %2142 = vmatpush1.msra.mxu0 %v2045
        %2143 = vmatprep.subr.mxu0 0.0
        %2144 = vmatpush1.msra.mxu0 %v2044
        %2145 = vmatprep.subr.mxu0 0.0
        %2146 = vmatpush1.msra.mxu0 %v2043
        %2147 = vmatprep.subr.mxu0 0.0
        %2148 = vmatpush1.msra.mxu0 %v2042
        %2149 = vmatprep.subr.mxu0 0.0
        %2150 = vmatpush1.msra.mxu0 %v2041
        %2151 = vmatprep.subr.mxu0 0.0
        %2152 = vmatpush1.msra.mxu0 %v2040
        %2153 = vmatprep.subr.mxu0 0.0
        %2154 = vmatpush1.msra.mxu0 %v2039
        %2155 = vmatprep.subr.mxu0 0.0
        %2156 = vmatpush2.msra.mxu0 0.0
        %2157 = vmatprep.subr.mxu0 0.0
        %2158 = vmatpush2.msra.mxu0 0.0
        %2159 = vmatprep.subr.mxu0 0.0
        %2160 = vmatpush2.msra.mxu0 0.0
        %2161 = vmatprep.subr.mxu0 0.0
        %2162 = vmatpush2.msra.mxu0 0.0
        %2163 = vmatprep.subr.mxu0 0.0
        %2164 = vmatpush2.msra.mxu0 0.0
        %2165 = vmatprep.subr.mxu0 0.0
        %2166 = vmatpush2.msra.mxu0 0.0
        %2167 = vmatprep.subr.mxu0 0.0
        %2168 = vmatpush2.msra.mxu0 0.0
        %2169 = vmatprep.subr.mxu0 0.0
        %2170 = vmatpush2.msra.mxu0 0.0
        %2171 = vmatprep.subr.mxu0 0.0
        %2172 = vmatpush2.msra.mxu0 0.0
        %2173 = vmatprep.subr.mxu0 0.0
        %2174 = vmatpush2.msra.mxu0 0.0
        %2175 = vmatprep.subr.mxu0 0.0
        %2176 = vmatpush2.msra.mxu0 0.0
        %2177 = vmatprep.subr.mxu0 0.0
        %2178 = vmatpush2.msra.mxu0 0.0
        %2179 = vmatprep.subr.mxu0 0.0
        %2180 = vmatpush2.msra.mxu0 0.0
        %2181 = vmatprep.subr.mxu0 0.0
        %2182 = vmatpush2.msra.mxu0 0.0
        %2183 = vmatprep.subr.mxu0 0.0
        %2184 = vmatpush2.msra.mxu0 0.0
        %2185 = vmatprep.subr.mxu0 0.0
        %2186 = vmatpush2.msra.mxu0 0.0
        %2187 = vmatprep.mubr.f32.mxu0 0.0
        %2188 = vmatmul.mubr.f32.gmra.mxu0 %v2049
        %v2189 = vpop.f32.mrf.mxu0
        %v2190 = vadd.f32 0.0, %v2189
        %v2191 = vpop.f32.mrf.mxu0
        %2192 = vmatprep.mubr.f32.mxu0 0.0
        %2193 = vmatmul.mubr.f32.gmra.mxu0 %v2052
        %v2194 = vpop.f32.mrf.mxu0
        %v2195 = vadd.f32 0.0, %v2194
        %v2196 = vpop.f32.mrf.mxu0
        %2197 = vmatprep.mubr.f32.mxu0 0.0
        %2198 = vmatmul.mubr.f32.gmra.mxu0 %v2055
        %v2199 = vpop.f32.mrf.mxu0
        %v2200 = vadd.f32 0.0, %v2199
        %v2201 = vpop.f32.mrf.mxu0
        %2202 = vmatprep.mubr.f32.mxu0 0.0
        %2203 = vmatmul.mubr.f32.gmra.mxu0 %v2058
        %v2204 = vpop.f32.mrf.mxu0
        %v2205 = vadd.f32 0.0, %v2204
        %v2206 = vpop.f32.mrf.mxu0
        %2207 = vmatprep.mubr.f32.mxu0 0.0
        %2208 = vmatmul.mubr.f32.gmra.mxu0 %v2061
        %v2209 = vpop.f32.mrf.mxu0
        %v2210 = vadd.f32 0.0, %v2209
        %v2211 = vpop.f32.mrf.mxu0
        %2212 = vmatprep.mubr.f32.mxu0 0.0
        %2213 = vmatmul.mubr.f32.gmra.mxu0 %v2064
        %v2214 = vpop.f32.mrf.mxu0
        %v2215 = vadd.f32 0.0, %v2214
        %v2216 = vpop.f32.mrf.mxu0
        %2217 = vmatprep.mubr.f32.mxu0 0.0
        %2218 = vmatmul.mubr.f32.gmra.mxu0 %v2067
        %v2219 = vpop.f32.mrf.mxu0
        %v2220 = vadd.f32 0.0, %v2219
        %v2221 = vpop.f32.mrf.mxu0
        %2222 = vmatprep.mubr.f32.mxu0 0.0
        %2223 = vmatmul.mubr.f32.gmra.mxu0 %v2070
        %v2224 = vpop.f32.mrf.mxu0
        %v2225 = vadd.f32 0.0, %v2224
        %v2226 = vpop.f32.mrf.mxu0
        %2227 = vmatprep.mubr.f32.mxu0 0.0
        %2228 = vmatmul.mubr.f32.gmra.mxu0 %v2073
        %v2229 = vpop.f32.mrf.mxu0
        %v2230 = vadd.f32 0.0, %v2229
        %v2231 = vpop.f32.mrf.mxu0
        %2232 = vmatprep.mubr.f32.mxu0 0.0
        %2233 = vmatmul.mubr.f32.gmra.mxu0 %v2076
        %v2234 = vpop.f32.mrf.mxu0
        %v2235 = vadd.f32 0.0, %v2234
        %v2236 = vpop.f32.mrf.mxu0
        %2237 = vmatprep.mubr.f32.mxu0 0.0
        %2238 = vmatmul.mubr.f32.gmra.mxu0 %v2079
        %v2239 = vpop.f32.mrf.mxu0
        %v2240 = vadd.f32 0.0, %v2239
        %v2241 = vpop.f32.mrf.mxu0
        %2242 = vmatprep.mubr.f32.mxu0 0.0
        %2243 = vmatmul.mubr.f32.gmra.mxu0 %v2082
        %v2244 = vpop.f32.mrf.mxu0
        %v2245 = vadd.f32 0.0, %v2244
        %v2246 = vpop.f32.mrf.mxu0
        %2247 = vmatprep.mubr.f32.mxu0 0.0
        %2248 = vmatmul.mubr.f32.gmra.mxu0 %v2085
        %v2249 = vpop.f32.mrf.mxu0
        %v2250 = vadd.f32 0.0, %v2249
        %v2251 = vpop.f32.mrf.mxu0
        %2252 = vmatprep.mubr.f32.mxu0 0.0
        %2253 = vmatmul.mubr.f32.gmra.mxu0 %v2088
        %v2254 = vpop.f32.mrf.mxu0
        %v2255 = vadd.f32 0.0, %v2254
        %v2256 = vpop.f32.mrf.mxu0
        %2257 = vmatprep.mubr.f32.mxu0 0.0
        %2258 = vmatmul.mubr.f32.gmra.mxu0 %v2091
        %v2259 = vpop.f32.mrf.mxu0
        %v2260 = vadd.f32 0.0, %v2259
        %v2261 = vpop.f32.mrf.mxu0
        %2262 = vmatprep.mubr.f32.mxu0 0.0
        %2263 = vmatmul.mubr.f32.gmra.mxu0 %v2094
        %v2264 = vpop.f32.mrf.mxu0
        %v2265 = vadd.f32 0.0, %v2264
        %v2266 = vpop.f32.mrf.mxu0
        %2267 = vmatprep.mubr.f32.mxu0 0.0
        %2268 = vmatmul.mubr.f32.gmra.mxu0 %v2097
        %v2269 = vpop.f32.mrf.mxu0
        %v2270 = vadd.f32 0.0, %v2269
        %v2271 = vpop.f32.mrf.mxu0
        %2272 = vmatprep.mubr.f32.mxu0 0.0
        %2273 = vmatmul.mubr.f32.gmra.mxu0 %v2100
        %v2274 = vpop.f32.mrf.mxu0
        %v2275 = vadd.f32 0.0, %v2274
        %v2276 = vpop.f32.mrf.mxu0
        %2277 = vmatprep.mubr.f32.mxu0 0.0
        %2278 = vmatmul.mubr.f32.gmra.mxu0 %v2103
        %v2279 = vpop.f32.mrf.mxu0
        %v2280 = vadd.f32 0.0, %v2279
        %v2281 = vpop.f32.mrf.mxu0
        %2282 = vmatprep.mubr.f32.mxu0 0.0
        %2283 = vmatmul.mubr.f32.gmra.mxu0 %v2106
        %v2284 = vpop.f32.mrf.mxu0
        %v2285 = vadd.f32 0.0, %v2284
        %v2286 = vpop.f32.mrf.mxu0
        %2287 = vmatprep.mubr.f32.mxu0 0.0
        %2288 = vmatmul.mubr.f32.gmra.mxu0 %v2109
        %v2289 = vpop.f32.mrf.mxu0
        %v2290 = vadd.f32 0.0, %v2289
        %v2291 = vpop.f32.mrf.mxu0
        %2292 = vmatprep.mubr.f32.mxu0 0.0
        %2293 = vmatmul.mubr.f32.gmra.mxu0 %v2112
        %v2294 = vpop.f32.mrf.mxu0
        %v2295 = vadd.f32 0.0, %v2294
        %v2296 = vpop.f32.mrf.mxu0
        %2297 = vmatprep.mubr.f32.mxu0 0.0
        %2298 = vmatmul.mubr.f32.gmra.mxu0 %v2115
        %v2299 = vpop.f32.mrf.mxu0
        %v2300 = vadd.f32 0.0, %v2299
        %v2301 = vpop.f32.mrf.mxu0
        %2302 = vmatprep.mubr.f32.mxu0 0.0
        %2303 = vmatmul.mubr.f32.gmra.mxu0 %v2118
        %v2304 = vpop.f32.mrf.mxu0
        %v2305 = vadd.f32 0.0, %v2304
        %v2306 = vpop.f32.mrf.mxu0
        %2307 = vmatprep.mubr.f32.mxu0 0.0
        %2308 = vmatmul.mubr.f32.gmra.mxu0 %v2121
        %v2309 = vpop.f32.mrf.mxu0
        %v2310 = vadd.f32 0.0, %v2309
        %v2311 = vpop.f32.mrf.mxu0
        %2312 = vdwg.mxu0
        %s2313 = scalar_lea.vmem %s5, 64
        %v2314 = vld [vmem:[%s2313] sm:$0xff]
        %v2315 = vld [vmem:[%s2313 + $0x8] sm:$0xff]
        %v2316 = vld [vmem:[%s2313 + $0x10] sm:$0xff]
        %v2317 = vld [vmem:[%s2313 + $0x18] sm:$0xff]
        %v2318 = vld [vmem:[%s2313 + $0x20] sm:$0xff]
        %v2319 = vld [vmem:[%s2313 + $0x28] sm:$0xff]
        %v2320 = vld [vmem:[%s2313 + $0x30] sm:$0xff]
        %v2321 = vld [vmem:[%s2313 + $0x38] sm:$0xff]
        %2322 = vmatprep.subr.mxu0 0.0
        %2323 = vmatpush1.msra.mxu0 0.0
        %2324 = vmatprep.subr.mxu0 0.0
        %2325 = vmatpush1.msra.mxu0 0.0
        %2326 = vmatprep.subr.mxu0 0.0
        %2327 = vmatpush1.msra.mxu0 0.0
        %2328 = vmatprep.subr.mxu0 0.0
        %2329 = vmatpush1.msra.mxu0 0.0
        %2330 = vmatprep.subr.mxu0 0.0
        %2331 = vmatpush1.msra.mxu0 0.0
        %2332 = vmatprep.subr.mxu0 0.0
        %2333 = vmatpush1.msra.mxu0 0.0
        %2334 = vmatprep.subr.mxu0 0.0
        %2335 = vmatpush1.msra.mxu0 0.0
        %2336 = vmatprep.subr.mxu0 0.0
        %2337 = vmatpush1.msra.mxu0 0.0
        %2338 = vmatprep.subr.mxu0 0.0
        %2339 = vmatpush1.msra.mxu0 %v2321
        %2340 = vmatprep.subr.mxu0 0.0
        %2341 = vmatpush1.msra.mxu0 %v2320
        %2342 = vmatprep.subr.mxu0 0.0
        %2343 = vmatpush1.msra.mxu0 %v2319
        %2344 = vmatprep.subr.mxu0 0.0
        %2345 = vmatpush1.msra.mxu0 %v2318
        %2346 = vmatprep.subr.mxu0 0.0
        %2347 = vmatpush1.msra.mxu0 %v2317
        %2348 = vmatprep.subr.mxu0 0.0
        %2349 = vmatpush1.msra.mxu0 %v2316
        %2350 = vmatprep.subr.mxu0 0.0
        %2351 = vmatpush1.msra.mxu0 %v2315
        %2352 = vmatprep.subr.mxu0 0.0
        %2353 = vmatpush1.msra.mxu0 %v2314
        %2354 = vmatprep.subr.mxu0 0.0
        %2355 = vmatpush2.msra.mxu0 0.0
        %2356 = vmatprep.subr.mxu0 0.0
        %2357 = vmatpush2.msra.mxu0 0.0
        %2358 = vmatprep.subr.mxu0 0.0
        %2359 = vmatpush2.msra.mxu0 0.0
        %2360 = vmatprep.subr.mxu0 0.0
        %2361 = vmatpush2.msra.mxu0 0.0
        %2362 = vmatprep.subr.mxu0 0.0
        %2363 = vmatpush2.msra.mxu0 0.0
        %2364 = vmatprep.subr.mxu0 0.0
        %2365 = vmatpush2.msra.mxu0 0.0
        %2366 = vmatprep.subr.mxu0 0.0
        %2367 = vmatpush2.msra.mxu0 0.0
        %2368 = vmatprep.subr.mxu0 0.0
        %2369 = vmatpush2.msra.mxu0 0.0
        %2370 = vmatprep.subr.mxu0 0.0
        %2371 = vmatpush2.msra.mxu0 0.0
        %2372 = vmatprep.subr.mxu0 0.0
        %2373 = vmatpush2.msra.mxu0 0.0
        %2374 = vmatprep.subr.mxu0 0.0
        %2375 = vmatpush2.msra.mxu0 0.0
        %2376 = vmatprep.subr.mxu0 0.0
        %2377 = vmatpush2.msra.mxu0 0.0
        %2378 = vmatprep.subr.mxu0 0.0
        %2379 = vmatpush2.msra.mxu0 0.0
        %2380 = vmatprep.subr.mxu0 0.0
        %2381 = vmatpush2.msra.mxu0 0.0
        %2382 = vmatprep.subr.mxu0 0.0
        %2383 = vmatpush2.msra.mxu0 0.0
        %2384 = vmatprep.subr.mxu0 0.0
        %2385 = vmatpush2.msra.mxu0 0.0
        %2386 = vmatprep.mubr.f32.mxu0 0.0
        %2387 = vmatmul.mubr.f32.gmra.mxu0 %v2049
        %v2388 = vpop.f32.mrf.mxu0
        %v2389 = vadd.f32 0.0, %v2388
        %v2390 = vpop.f32.mrf.mxu0
        %2391 = vmatprep.mubr.f32.mxu0 0.0
        %2392 = vmatmul.mubr.f32.gmra.mxu0 %v2052
        %v2393 = vpop.f32.mrf.mxu0
        %v2394 = vadd.f32 0.0, %v2393
        %v2395 = vpop.f32.mrf.mxu0
        %2396 = vmatprep.mubr.f32.mxu0 0.0
        %2397 = vmatmul.mubr.f32.gmra.mxu0 %v2055
        %v2398 = vpop.f32.mrf.mxu0
        %v2399 = vadd.f32 0.0, %v2398
        %v2400 = vpop.f32.mrf.mxu0
        %2401 = vmatprep.mubr.f32.mxu0 0.0
        %2402 = vmatmul.mubr.f32.gmra.mxu0 %v2058
        %v2403 = vpop.f32.mrf.mxu0
        %v2404 = vadd.f32 0.0, %v2403
        %v2405 = vpop.f32.mrf.mxu0
        %2406 = vmatprep.mubr.f32.mxu0 0.0
        %2407 = vmatmul.mubr.f32.gmra.mxu0 %v2061
        %v2408 = vpop.f32.mrf.mxu0
        %v2409 = vadd.f32 0.0, %v2408
        %v2410 = vpop.f32.mrf.mxu0
        %2411 = vmatprep.mubr.f32.mxu0 0.0
        %2412 = vmatmul.mubr.f32.gmra.mxu0 %v2064
        %v2413 = vpop.f32.mrf.mxu0
        %v2414 = vadd.f32 0.0, %v2413
        %v2415 = vpop.f32.mrf.mxu0
        %2416 = vmatprep.mubr.f32.mxu0 0.0
        %2417 = vmatmul.mubr.f32.gmra.mxu0 %v2067
        %v2418 = vpop.f32.mrf.mxu0
        %v2419 = vadd.f32 0.0, %v2418
        %v2420 = vpop.f32.mrf.mxu0
        %2421 = vmatprep.mubr.f32.mxu0 0.0
        %2422 = vmatmul.mubr.f32.gmra.mxu0 %v2070
        %v2423 = vpop.f32.mrf.mxu0
        %v2424 = vadd.f32 0.0, %v2423
        %v2425 = vpop.f32.mrf.mxu0
        %2426 = vmatprep.mubr.f32.mxu0 0.0
        %2427 = vmatmul.mubr.f32.gmra.mxu0 %v2073
        %v2428 = vpop.f32.mrf.mxu0
        %v2429 = vadd.f32 0.0, %v2428
        %v2430 = vpop.f32.mrf.mxu0
        %2431 = vmatprep.mubr.f32.mxu0 0.0
        %2432 = vmatmul.mubr.f32.gmra.mxu0 %v2076
        %v2433 = vpop.f32.mrf.mxu0
        %v2434 = vadd.f32 0.0, %v2433
        %v2435 = vpop.f32.mrf.mxu0
        %2436 = vmatprep.mubr.f32.mxu0 0.0
        %2437 = vmatmul.mubr.f32.gmra.mxu0 %v2079
        %v2438 = vpop.f32.mrf.mxu0
        %v2439 = vadd.f32 0.0, %v2438
        %v2440 = vpop.f32.mrf.mxu0
        %2441 = vmatprep.mubr.f32.mxu0 0.0
        %2442 = vmatmul.mubr.f32.gmra.mxu0 %v2082
        %v2443 = vpop.f32.mrf.mxu0
        %v2444 = vadd.f32 0.0, %v2443
        %v2445 = vpop.f32.mrf.mxu0
        %2446 = vmatprep.mubr.f32.mxu0 0.0
        %2447 = vmatmul.mubr.f32.gmra.mxu0 %v2085
        %v2448 = vpop.f32.mrf.mxu0
        %v2449 = vadd.f32 0.0, %v2448
        %v2450 = vpop.f32.mrf.mxu0
        %2451 = vmatprep.mubr.f32.mxu0 0.0
        %2452 = vmatmul.mubr.f32.gmra.mxu0 %v2088
        %v2453 = vpop.f32.mrf.mxu0
        %v2454 = vadd.f32 0.0, %v2453
        %v2455 = vpop.f32.mrf.mxu0
        %2456 = vmatprep.mubr.f32.mxu0 0.0
        %2457 = vmatmul.mubr.f32.gmra.mxu0 %v2091
        %v2458 = vpop.f32.mrf.mxu0
        %v2459 = vadd.f32 0.0, %v2458
        %v2460 = vpop.f32.mrf.mxu0
        %2461 = vmatprep.mubr.f32.mxu0 0.0
        %2462 = vmatmul.mubr.f32.gmra.mxu0 %v2094
        %v2463 = vpop.f32.mrf.mxu0
        %v2464 = vadd.f32 0.0, %v2463
        %v2465 = vpop.f32.mrf.mxu0
        %2466 = vmatprep.mubr.f32.mxu0 0.0
        %2467 = vmatmul.mubr.f32.gmra.mxu0 %v2097
        %v2468 = vpop.f32.mrf.mxu0
        %v2469 = vadd.f32 0.0, %v2468
        %v2470 = vpop.f32.mrf.mxu0
        %2471 = vmatprep.mubr.f32.mxu0 0.0
        %2472 = vmatmul.mubr.f32.gmra.mxu0 %v2100
        %v2473 = vpop.f32.mrf.mxu0
        %v2474 = vadd.f32 0.0, %v2473
        %v2475 = vpop.f32.mrf.mxu0
        %2476 = vmatprep.mubr.f32.mxu0 0.0
        %2477 = vmatmul.mubr.f32.gmra.mxu0 %v2103
        %v2478 = vpop.f32.mrf.mxu0
        %v2479 = vadd.f32 0.0, %v2478
        %v2480 = vpop.f32.mrf.mxu0
        %2481 = vmatprep.mubr.f32.mxu0 0.0
        %2482 = vmatmul.mubr.f32.gmra.mxu0 %v2106
        %v2483 = vpop.f32.mrf.mxu0
        %v2484 = vadd.f32 0.0, %v2483
        %v2485 = vpop.f32.mrf.mxu0
        %2486 = vmatprep.mubr.f32.mxu0 0.0
        %2487 = vmatmul.mubr.f32.gmra.mxu0 %v2109
        %v2488 = vpop.f32.mrf.mxu0
        %v2489 = vadd.f32 0.0, %v2488
        %v2490 = vpop.f32.mrf.mxu0
        %2491 = vmatprep.mubr.f32.mxu0 0.0
        %2492 = vmatmul.mubr.f32.gmra.mxu0 %v2112
        %v2493 = vpop.f32.mrf.mxu0
        %v2494 = vadd.f32 0.0, %v2493
        %v2495 = vpop.f32.mrf.mxu0
        %2496 = vmatprep.mubr.f32.mxu0 0.0
        %2497 = vmatmul.mubr.f32.gmra.mxu0 %v2115
        %v2498 = vpop.f32.mrf.mxu0
        %v2499 = vadd.f32 0.0, %v2498
        %v2500 = vpop.f32.mrf.mxu0
        %2501 = vmatprep.mubr.f32.mxu0 0.0
        %2502 = vmatmul.mubr.f32.gmra.mxu0 %v2118
        %v2503 = vpop.f32.mrf.mxu0
        %v2504 = vadd.f32 0.0, %v2503
        %v2505 = vpop.f32.mrf.mxu0
        %2506 = vmatprep.mubr.f32.mxu0 0.0
        %2507 = vmatmul.mubr.f32.gmra.mxu0 %v2121
        %v2508 = vpop.f32.mrf.mxu0
        %v2509 = vadd.f32 0.0, %v2508
        %v2510 = vpop.f32.mrf.mxu0
        %2511 = vdwg.mxu0
        %s2512 = scalar_lea.vmem %s5, 128
        %v2513 = vld [vmem:[%s2512] sm:$0xff]
        %v2514 = vld [vmem:[%s2512 + $0x8] sm:$0xff]
        %v2515 = vld [vmem:[%s2512 + $0x10] sm:$0xff]
        %v2516 = vld [vmem:[%s2512 + $0x18] sm:$0xff]
        %v2517 = vld [vmem:[%s2512 + $0x20] sm:$0xff]
        %v2518 = vld [vmem:[%s2512 + $0x28] sm:$0xff]
        %v2519 = vld [vmem:[%s2512 + $0x30] sm:$0xff]
        %v2520 = vld [vmem:[%s2512 + $0x38] sm:$0xff]
        %2521 = vmatprep.subr.mxu0 0.0
        %2522 = vmatpush1.msra.mxu0 0.0
        %2523 = vmatprep.subr.mxu0 0.0
        %2524 = vmatpush1.msra.mxu0 0.0
        %2525 = vmatprep.subr.mxu0 0.0
        %2526 = vmatpush1.msra.mxu0 0.0
        %2527 = vmatprep.subr.mxu0 0.0
        %2528 = vmatpush1.msra.mxu0 0.0
        %2529 = vmatprep.subr.mxu0 0.0
        %2530 = vmatpush1.msra.mxu0 0.0
        %2531 = vmatprep.subr.mxu0 0.0
        %2532 = vmatpush1.msra.mxu0 0.0
        %2533 = vmatprep.subr.mxu0 0.0
        %2534 = vmatpush1.msra.mxu0 0.0
        %2535 = vmatprep.subr.mxu0 0.0
        %2536 = vmatpush1.msra.mxu0 0.0
        %2537 = vmatprep.subr.mxu0 0.0
        %2538 = vmatpush1.msra.mxu0 %v2520
        %2539 = vmatprep.subr.mxu0 0.0
        %2540 = vmatpush1.msra.mxu0 %v2519
        %2541 = vmatprep.subr.mxu0 0.0
        %2542 = vmatpush1.msra.mxu0 %v2518
        %2543 = vmatprep.subr.mxu0 0.0
        %2544 = vmatpush1.msra.mxu0 %v2517
        %2545 = vmatprep.subr.mxu0 0.0
        %2546 = vmatpush1.msra.mxu0 %v2516
        %2547 = vmatprep.subr.mxu0 0.0
        %2548 = vmatpush1.msra.mxu0 %v2515
        %2549 = vmatprep.subr.mxu0 0.0
        %2550 = vmatpush1.msra.mxu0 %v2514
        %2551 = vmatprep.subr.mxu0 0.0
        %2552 = vmatpush1.msra.mxu0 %v2513
        %2553 = vmatprep.subr.mxu0 0.0
        %2554 = vmatpush2.msra.mxu0 0.0
        %2555 = vmatprep.subr.mxu0 0.0
        %2556 = vmatpush2.msra.mxu0 0.0
        %2557 = vmatprep.subr.mxu0 0.0
        %2558 = vmatpush2.msra.mxu0 0.0
        %2559 = vmatprep.subr.mxu0 0.0
        %2560 = vmatpush2.msra.mxu0 0.0
        %2561 = vmatprep.subr.mxu0 0.0
        %2562 = vmatpush2.msra.mxu0 0.0
        %2563 = vmatprep.subr.mxu0 0.0
        %2564 = vmatpush2.msra.mxu0 0.0
        %2565 = vmatprep.subr.mxu0 0.0
        %2566 = vmatpush2.msra.mxu0 0.0
        %2567 = vmatprep.subr.mxu0 0.0
        %2568 = vmatpush2.msra.mxu0 0.0
        %2569 = vmatprep.subr.mxu0 0.0
        %2570 = vmatpush2.msra.mxu0 0.0
        %2571 = vmatprep.subr.mxu0 0.0
        %2572 = vmatpush2.msra.mxu0 0.0
        %2573 = vmatprep.subr.mxu0 0.0
        %2574 = vmatpush2.msra.mxu0 0.0
        %2575 = vmatprep.subr.mxu0 0.0
        %2576 = vmatpush2.msra.mxu0 0.0
        %2577 = vmatprep.subr.mxu0 0.0
        %2578 = vmatpush2.msra.mxu0 0.0
        %2579 = vmatprep.subr.mxu0 0.0
        %2580 = vmatpush2.msra.mxu0 0.0
        %2581 = vmatprep.subr.mxu0 0.0
        %2582 = vmatpush2.msra.mxu0 0.0
        %2583 = vmatprep.subr.mxu0 0.0
        %2584 = vmatpush2.msra.mxu0 0.0
        %2585 = vmatprep.mubr.f32.mxu0 0.0
        %2586 = vmatmul.mubr.f32.gmra.mxu0 %v2049
        %v2587 = vpop.f32.mrf.mxu0
        %v2588 = vadd.f32 0.0, %v2587
        %v2589 = vpop.f32.mrf.mxu0
        %2590 = vmatprep.mubr.f32.mxu0 0.0
        %2591 = vmatmul.mubr.f32.gmra.mxu0 %v2052
        %v2592 = vpop.f32.mrf.mxu0
        %v2593 = vadd.f32 0.0, %v2592
        %v2594 = vpop.f32.mrf.mxu0
        %2595 = vmatprep.mubr.f32.mxu0 0.0
        %2596 = vmatmul.mubr.f32.gmra.mxu0 %v2055
        %v2597 = vpop.f32.mrf.mxu0
        %v2598 = vadd.f32 0.0, %v2597
        %v2599 = vpop.f32.mrf.mxu0
        %2600 = vmatprep.mubr.f32.mxu0 0.0
        %2601 = vmatmul.mubr.f32.gmra.mxu0 %v2058
        %v2602 = vpop.f32.mrf.mxu0
        %v2603 = vadd.f32 0.0, %v2602
        %v2604 = vpop.f32.mrf.mxu0
        %2605 = vmatprep.mubr.f32.mxu0 0.0
        %2606 = vmatmul.mubr.f32.gmra.mxu0 %v2061
        %v2607 = vpop.f32.mrf.mxu0
        %v2608 = vadd.f32 0.0, %v2607
        %v2609 = vpop.f32.mrf.mxu0
        %2610 = vmatprep.mubr.f32.mxu0 0.0
        %2611 = vmatmul.mubr.f32.gmra.mxu0 %v2064
        %v2612 = vpop.f32.mrf.mxu0
        %v2613 = vadd.f32 0.0, %v2612
        %v2614 = vpop.f32.mrf.mxu0
        %2615 = vmatprep.mubr.f32.mxu0 0.0
        %2616 = vmatmul.mubr.f32.gmra.mxu0 %v2067
        %v2617 = vpop.f32.mrf.mxu0
        %v2618 = vadd.f32 0.0, %v2617
        %v2619 = vpop.f32.mrf.mxu0
        %2620 = vmatprep.mubr.f32.mxu0 0.0
        %2621 = vmatmul.mubr.f32.gmra.mxu0 %v2070
        %v2622 = vpop.f32.mrf.mxu0
        %v2623 = vadd.f32 0.0, %v2622
        %v2624 = vpop.f32.mrf.mxu0
        %2625 = vmatprep.mubr.f32.mxu0 0.0
        %2626 = vmatmul.mubr.f32.gmra.mxu0 %v2073
        %v2627 = vpop.f32.mrf.mxu0
        %v2628 = vadd.f32 0.0, %v2627
        %v2629 = vpop.f32.mrf.mxu0
        %2630 = vmatprep.mubr.f32.mxu0 0.0
        %2631 = vmatmul.mubr.f32.gmra.mxu0 %v2076
        %v2632 = vpop.f32.mrf.mxu0
        %v2633 = vadd.f32 0.0, %v2632
        %v2634 = vpop.f32.mrf.mxu0
        %2635 = vmatprep.mubr.f32.mxu0 0.0
        %2636 = vmatmul.mubr.f32.gmra.mxu0 %v2079
        %v2637 = vpop.f32.mrf.mxu0
        %v2638 = vadd.f32 0.0, %v2637
        %v2639 = vpop.f32.mrf.mxu0
        %2640 = vmatprep.mubr.f32.mxu0 0.0
        %2641 = vmatmul.mubr.f32.gmra.mxu0 %v2082
        %v2642 = vpop.f32.mrf.mxu0
        %v2643 = vadd.f32 0.0, %v2642
        %v2644 = vpop.f32.mrf.mxu0
        %2645 = vmatprep.mubr.f32.mxu0 0.0
        %2646 = vmatmul.mubr.f32.gmra.mxu0 %v2085
        %v2647 = vpop.f32.mrf.mxu0
        %v2648 = vadd.f32 0.0, %v2647
        %v2649 = vpop.f32.mrf.mxu0
        %2650 = vmatprep.mubr.f32.mxu0 0.0
        %2651 = vmatmul.mubr.f32.gmra.mxu0 %v2088
        %v2652 = vpop.f32.mrf.mxu0
        %v2653 = vadd.f32 0.0, %v2652
        %v2654 = vpop.f32.mrf.mxu0
        %2655 = vmatprep.mubr.f32.mxu0 0.0
        %2656 = vmatmul.mubr.f32.gmra.mxu0 %v2091
        %v2657 = vpop.f32.mrf.mxu0
        %v2658 = vadd.f32 0.0, %v2657
        %v2659 = vpop.f32.mrf.mxu0
        %2660 = vmatprep.mubr.f32.mxu0 0.0
        %2661 = vmatmul.mubr.f32.gmra.mxu0 %v2094
        %v2662 = vpop.f32.mrf.mxu0
        %v2663 = vadd.f32 0.0, %v2662
        %v2664 = vpop.f32.mrf.mxu0
        %2665 = vmatprep.mubr.f32.mxu0 0.0
        %2666 = vmatmul.mubr.f32.gmra.mxu0 %v2097
        %v2667 = vpop.f32.mrf.mxu0
        %v2668 = vadd.f32 0.0, %v2667
        %v2669 = vpop.f32.mrf.mxu0
        %2670 = vmatprep.mubr.f32.mxu0 0.0
        %2671 = vmatmul.mubr.f32.gmra.mxu0 %v2100
        %v2672 = vpop.f32.mrf.mxu0
        %v2673 = vadd.f32 0.0, %v2672
        %v2674 = vpop.f32.mrf.mxu0
        %2675 = vmatprep.mubr.f32.mxu0 0.0
        %2676 = vmatmul.mubr.f32.gmra.mxu0 %v2103
        %v2677 = vpop.f32.mrf.mxu0
        %v2678 = vadd.f32 0.0, %v2677
        %v2679 = vpop.f32.mrf.mxu0
        %2680 = vmatprep.mubr.f32.mxu0 0.0
        %2681 = vmatmul.mubr.f32.gmra.mxu0 %v2106
        %v2682 = vpop.f32.mrf.mxu0
        %v2683 = vadd.f32 0.0, %v2682
        %v2684 = vpop.f32.mrf.mxu0
        %2685 = vmatprep.mubr.f32.mxu0 0.0
        %2686 = vmatmul.mubr.f32.gmra.mxu0 %v2109
        %v2687 = vpop.f32.mrf.mxu0
        %v2688 = vadd.f32 0.0, %v2687
        %v2689 = vpop.f32.mrf.mxu0
        %2690 = vmatprep.mubr.f32.mxu0 0.0
        %2691 = vmatmul.mubr.f32.gmra.mxu0 %v2112
        %v2692 = vpop.f32.mrf.mxu0
        %v2693 = vadd.f32 0.0, %v2692
        %v2694 = vpop.f32.mrf.mxu0
        %2695 = vmatprep.mubr.f32.mxu0 0.0
        %2696 = vmatmul.mubr.f32.gmra.mxu0 %v2115
        %v2697 = vpop.f32.mrf.mxu0
        %v2698 = vadd.f32 0.0, %v2697
        %v2699 = vpop.f32.mrf.mxu0
        %2700 = vmatprep.mubr.f32.mxu0 0.0
        %2701 = vmatmul.mubr.f32.gmra.mxu0 %v2118
        %v2702 = vpop.f32.mrf.mxu0
        %v2703 = vadd.f32 0.0, %v2702
        %v2704 = vpop.f32.mrf.mxu0
        %2705 = vmatprep.mubr.f32.mxu0 0.0
        %2706 = vmatmul.mubr.f32.gmra.mxu0 %v2121
        %v2707 = vpop.f32.mrf.mxu0
        %v2708 = vadd.f32 0.0, %v2707
        %v2709 = vpop.f32.mrf.mxu0
        %2710 = vdwg.mxu0
        %v2711 = vrot.slane %v2190, 7
        %v2712 = vrot.slane %v2195, 7
        %v2713 = vrot.slane %v2200, 7
        %v2714 = vrot.slane %v2205, 7
        %v2715 = vrot.slane %v2210, 7
        %v2716 = vrot.slane %v2215, 7
        %v2717 = vrot.slane %v2220, 7
        %v2718 = vrot.slane %v2225, 7
        %v2719 = vrot.slane %v2230, 7
        %v2720 = vrot.slane %v2235, 7
        %v2721 = vrot.slane %v2240, 7
        %v2722 = vrot.slane %v2245, 7
        %v2723 = vrot.slane %v2250, 7
        %v2724 = vrot.slane %v2255, 7
        %v2725 = vrot.slane %v2260, 7
        %v2726 = vrot.slane %v2265, 7
        %v2727 = vrot.slane %v2270, 7
        %v2728 = vrot.slane %v2275, 7
        %v2729 = vrot.slane %v2280, 7
        %v2730 = vrot.slane %v2285, 7
        %v2731 = vrot.slane %v2290, 7
        %v2732 = vrot.slane %v2295, 7
        %v2733 = vrot.slane %v2300, 7
        %v2734 = vrot.slane %v2305, 7
        %v2735 = vrot.slane %v2310, 7
        %v2736 = vsel %vm1730, %v2734, %v2735
        %v2737 = vsel %vm1730, %v2733, %v2734
        %v2738 = vsel %vm1730, %v2732, %v2733
        %v2739 = vsel %vm1730, %v2731, %v2732
        %v2740 = vsel %vm1730, %v2730, %v2731
        %v2741 = vsel %vm1730, %v2729, %v2730
        %v2742 = vsel %vm1730, %v2728, %v2729
        %v2743 = vsel %vm1730, %v2727, %v2728
        %v2744 = vsel %vm1730, %v2726, %v2727
        %v2745 = vsel %vm1730, %v2725, %v2726
        %v2746 = vsel %vm1730, %v2724, %v2725
        %v2747 = vsel %vm1730, %v2723, %v2724
        %v2748 = vsel %vm1730, %v2722, %v2723
        %v2749 = vsel %vm1730, %v2721, %v2722
        %v2750 = vsel %vm1730, %v2720, %v2721
        %v2751 = vsel %vm1730, %v2719, %v2720
        %v2752 = vsel %vm1730, %v2718, %v2719
        %v2753 = vsel %vm1730, %v2717, %v2718
        %v2754 = vsel %vm1730, %v2716, %v2717
        %v2755 = vsel %vm1730, %v2715, %v2716
        %v2756 = vsel %vm1730, %v2714, %v2715
        %v2757 = vsel %vm1730, %v2713, %v2714
        %v2758 = vsel %vm1730, %v2712, %v2713
        %v2759 = vsel %vm1730, %v2711, %v2712
        %v2760 = vsel %vm1730, %v2735, %v2711
        %v2761 = vsel %vm1781, %v2760, 0.0
        %v2762 = vsel %vm1782, %v2759, 0.0
        %v2763 = vsel %vm1783, %v2758, 0.0
        %v2764 = vsel %vm1784, %v2757, 0.0
        %v2765 = vsel %vm1785, %v2756, 0.0
        %v2766 = vsel %vm1786, %v2755, 0.0
        %v2767 = vsel %vm1787, %v2754, 0.0
        %v2768 = vsel %vm1788, %v2753, 0.0
        %v2769 = vsel %vm1789, %v2752, 0.0
        %v2770 = vsel %vm1790, %v2751, 0.0
        %v2771 = vsel %vm1791, %v2750, 0.0
        %v2772 = vsel %vm1792, %v2749, 0.0
        %v2773 = vsel %vm1793, %v2748, 0.0
        %v2774 = vsel %vm1794, %v2747, 0.0
        %v2775 = vsel %vm1795, %v2746, 0.0
        %v2776 = vsel %vm1796, %v2745, 0.0
        %v2777 = vsel %vm1797, %v2744, 0.0
        %v2778 = vsel %vm1798, %v2743, 0.0
        %v2779 = vsel %vm1799, %v2742, 0.0
        %v2780 = vsel %vm1800, %v2741, 0.0
        %v2781 = vsel %vm1801, %v2740, 0.0
        %v2782 = vsel %vm1802, %v2739, 0.0
        %v2783 = vsel %vm1803, %v2738, 0.0
        %v2784 = vsel %vm1804, %v2737, 0.0
        %v2785 = vsel %vm1805, %v2736, 0.0
        %v2786 = vadd.f32 %v2761, %v2389
        %v2787 = vadd.f32 %v2762, %v2394
        %v2788 = vadd.f32 %v2763, %v2399
        %v2789 = vadd.f32 %v2764, %v2404
        %v2790 = vadd.f32 %v2765, %v2409
        %v2791 = vadd.f32 %v2766, %v2414
        %v2792 = vadd.f32 %v2767, %v2419
        %v2793 = vadd.f32 %v2768, %v2424
        %v2794 = vadd.f32 %v2769, %v2429
        %v2795 = vadd.f32 %v2770, %v2434
        %v2796 = vadd.f32 %v2771, %v2439
        %v2797 = vadd.f32 %v2772, %v2444
        %v2798 = vadd.f32 %v2773, %v2449
        %v2799 = vadd.f32 %v2774, %v2454
        %v2800 = vadd.f32 %v2775, %v2459
        %v2801 = vadd.f32 %v2776, %v2464
        %v2802 = vadd.f32 %v2777, %v2469
        %v2803 = vadd.f32 %v2778, %v2474
        %v2804 = vadd.f32 %v2779, %v2479
        %v2805 = vadd.f32 %v2780, %v2484
        %v2806 = vadd.f32 %v2781, %v2489
        %v2807 = vadd.f32 %v2782, %v2494
        %v2808 = vadd.f32 %v2783, %v2499
        %v2809 = vadd.f32 %v2784, %v2504
        %v2810 = vadd.f32 %v2785, %v2509
        %v2811 = vrot.slane %v2588, 1
        %v2812 = vrot.slane %v2593, 1
        %v2813 = vrot.slane %v2598, 1
        %v2814 = vrot.slane %v2603, 1
        %v2815 = vrot.slane %v2608, 1
        %v2816 = vrot.slane %v2613, 1
        %v2817 = vrot.slane %v2618, 1
        %v2818 = vrot.slane %v2623, 1
        %v2819 = vrot.slane %v2628, 1
        %v2820 = vrot.slane %v2633, 1
        %v2821 = vrot.slane %v2638, 1
        %v2822 = vrot.slane %v2643, 1
        %v2823 = vrot.slane %v2648, 1
        %v2824 = vrot.slane %v2653, 1
        %v2825 = vrot.slane %v2658, 1
        %v2826 = vrot.slane %v2663, 1
        %v2827 = vrot.slane %v2668, 1
        %v2828 = vrot.slane %v2673, 1
        %v2829 = vrot.slane %v2678, 1
        %v2830 = vrot.slane %v2683, 1
        %v2831 = vrot.slane %v2688, 1
        %v2832 = vrot.slane %v2693, 1
        %v2833 = vrot.slane %v2698, 1
        %v2834 = vrot.slane %v2703, 1
        %v2835 = vrot.slane %v2708, 1
        %v2836 = vsel %vm1881, %v2834, %v2835
        %v2837 = vsel %vm1881, %v2833, %v2834
        %v2838 = vsel %vm1881, %v2832, %v2833
        %v2839 = vsel %vm1881, %v2831, %v2832
        %v2840 = vsel %vm1881, %v2830, %v2831
        %v2841 = vsel %vm1881, %v2829, %v2830
        %v2842 = vsel %vm1881, %v2828, %v2829
        %v2843 = vsel %vm1881, %v2827, %v2828
        %v2844 = vsel %vm1881, %v2826, %v2827
        %v2845 = vsel %vm1881, %v2825, %v2826
        %v2846 = vsel %vm1881, %v2824, %v2825
        %v2847 = vsel %vm1881, %v2823, %v2824
        %v2848 = vsel %vm1881, %v2822, %v2823
        %v2849 = vsel %vm1881, %v2821, %v2822
        %v2850 = vsel %vm1881, %v2820, %v2821
        %v2851 = vsel %vm1881, %v2819, %v2820
        %v2852 = vsel %vm1881, %v2818, %v2819
        %v2853 = vsel %vm1881, %v2817, %v2818
        %v2854 = vsel %vm1881, %v2816, %v2817
        %v2855 = vsel %vm1881, %v2815, %v2816
        %v2856 = vsel %vm1881, %v2814, %v2815
        %v2857 = vsel %vm1881, %v2813, %v2814
        %v2858 = vsel %vm1881, %v2812, %v2813
        %v2859 = vsel %vm1881, %v2811, %v2812
        %v2860 = vsel %vm1881, %v2835, %v2811
        %v2861 = vsel %vm1932, %v2859, 0.0
        %v2862 = vsel %vm1933, %v2858, 0.0
        %v2863 = vsel %vm1934, %v2857, 0.0
        %v2864 = vsel %vm1935, %v2856, 0.0
        %v2865 = vsel %vm1936, %v2855, 0.0
        %v2866 = vsel %vm1937, %v2854, 0.0
        %v2867 = vsel %vm1938, %v2853, 0.0
        %v2868 = vsel %vm1939, %v2852, 0.0
        %v2869 = vsel %vm1940, %v2851, 0.0
        %v2870 = vsel %vm1941, %v2850, 0.0
        %v2871 = vsel %vm1942, %v2849, 0.0
        %v2872 = vsel %vm1943, %v2848, 0.0
        %v2873 = vsel %vm1944, %v2847, 0.0
        %v2874 = vsel %vm1945, %v2846, 0.0
        %v2875 = vsel %vm1946, %v2845, 0.0
        %v2876 = vsel %vm1947, %v2844, 0.0
        %v2877 = vsel %vm1948, %v2843, 0.0
        %v2878 = vsel %vm1949, %v2842, 0.0
        %v2879 = vsel %vm1950, %v2841, 0.0
        %v2880 = vsel %vm1951, %v2840, 0.0
        %v2881 = vsel %vm1952, %v2839, 0.0
        %v2882 = vsel %vm1953, %v2838, 0.0
        %v2883 = vsel %vm1954, %v2837, 0.0
        %v2884 = vsel %vm1955, %v2836, 0.0
        %v2885 = vsel %vm1956, %v2860, 0.0
        %v2886 = vadd.f32 %v2786, %v2861
        %v2887 = vadd.f32 %v2787, %v2862
        %v2888 = vadd.f32 %v2788, %v2863
        %v2889 = vadd.f32 %v2789, %v2864
        %v2890 = vadd.f32 %v2790, %v2865
        %v2891 = vadd.f32 %v2791, %v2866
        %v2892 = vadd.f32 %v2792, %v2867
        %v2893 = vadd.f32 %v2793, %v2868
        %v2894 = vadd.f32 %v2794, %v2869
        %v2895 = vadd.f32 %v2795, %v2870
        %v2896 = vadd.f32 %v2796, %v2871
        %v2897 = vadd.f32 %v2797, %v2872
        %v2898 = vadd.f32 %v2798, %v2873
        %v2899 = vadd.f32 %v2799, %v2874
        %v2900 = vadd.f32 %v2800, %v2875
        %v2901 = vadd.f32 %v2801, %v2876
        %v2902 = vadd.f32 %v2802, %v2877
        %v2903 = vadd.f32 %v2803, %v2878
        %v2904 = vadd.f32 %v2804, %v2879
        %v2905 = vadd.f32 %v2805, %v2880
        %v2906 = vadd.f32 %v2806, %v2881
        %v2907 = vadd.f32 %v2807, %v2882
        %v2908 = vadd.f32 %v2808, %v2883
        %v2909 = vadd.f32 %v2809, %v2884
        %v2910 = vadd.f32 %v2810, %v2885
        %v2911 = vld [vmem:[%s6] sm:$0x1]
        %v2913 = vlaneseq
        %v2914 = vshrl.u32 %v2913, 7
        %v2915 = vsub.s32 0, %v2914
        %v2916 = vrot.slane %v2911, %v2915
        %v2918 = vadd.f32 %v2886, %v2916
        %v2919 = vadd.f32 %v2887, %v2916
        %v2920 = vadd.f32 %v2888, %v2916
        %v2921 = vadd.f32 %v2889, %v2916
        %v2922 = vadd.f32 %v2890, %v2916
        %v2923 = vadd.f32 %v2891, %v2916
        %v2924 = vadd.f32 %v2892, %v2916
        %v2925 = vadd.f32 %v2893, %v2916
        %v2926 = vadd.f32 %v2894, %v2916
        %v2927 = vadd.f32 %v2895, %v2916
        %v2928 = vadd.f32 %v2896, %v2916
        %v2929 = vadd.f32 %v2897, %v2916
        %v2930 = vadd.f32 %v2898, %v2916
        %v2931 = vadd.f32 %v2899, %v2916
        %v2932 = vadd.f32 %v2900, %v2916
        %v2933 = vadd.f32 %v2901, %v2916
        %v2934 = vadd.f32 %v2902, %v2916
        %v2935 = vadd.f32 %v2903, %v2916
        %v2936 = vadd.f32 %v2904, %v2916
        %v2937 = vadd.f32 %v2905, %v2916
        %v2938 = vadd.f32 %v2906, %v2916
        %v2939 = vadd.f32 %v2907, %v2916
        %v2940 = vadd.f32 %v2908, %v2916
        %v2941 = vadd.f32 %v2909, %v2916
        %v2942 = vadd.f32 %v2910, %v2916
        %v2943 = vld [vmem:[%s7] sm:$0xff]
        %v2944 = vld [vmem:[%s7 + $0x8] sm:$0xff]
        %v2945 = vld [vmem:[%s7 + $0x10] sm:$0xff]
        %v2946 = vld [vmem:[%s7 + $0x18] sm:$0xff]
        %vm2947 = vcmask 261120
        %v2949 = vsel %vm2947, %v2918, 0
        %v2952 = vsel %vm2947, %v2919, 0
        %v2955 = vsel %vm2947, %v2920, 0
        %v2958 = vsel %vm2947, %v2921, 0
        %v2961 = vsel %vm2947, %v2922, 0
        %v2964 = vsel %vm2947, %v2923, 0
        %v2967 = vsel %vm2947, %v2924, 0
        %v2970 = vsel %vm2947, %v2925, 0
        %v2973 = vsel %vm2947, %v2926, 0
        %v2976 = vsel %vm2947, %v2927, 0
        %v2979 = vsel %vm2947, %v2928, 0
        %v2982 = vsel %vm2947, %v2929, 0
        %v2985 = vsel %vm2947, %v2930, 0
        %v2988 = vsel %vm2947, %v2931, 0
        %v2991 = vsel %vm2947, %v2932, 0
        %v2994 = vsel %vm2947, %v2933, 0
        %v2997 = vsel %vm2947, %v2934, 0
        %v3000 = vsel %vm2947, %v2935, 0
        %v3003 = vsel %vm2947, %v2936, 0
        %v3006 = vsel %vm2947, %v2937, 0
        %v3009 = vsel %vm2947, %v2938, 0
        %v3012 = vsel %vm2947, %v2939, 0
        %v3015 = vsel %vm2947, %v2940, 0
        %v3018 = vsel %vm2947, %v2941, 0
        %v3021 = vsel %vm2947, %v2942, 0
        %3023 = vmatprep.subr.mxu0 0.0
        %3024 = vmatpush1.msra.mxu0 0.0
        %3025 = vmatprep.subr.mxu0 0.0
        %3026 = vmatpush1.msra.mxu0 0.0
        %3027 = vmatprep.subr.mxu0 0.0
        %3028 = vmatpush1.msra.mxu0 0.0
        %3029 = vmatprep.subr.mxu0 0.0
        %3030 = vmatpush1.msra.mxu0 0.0
        %3031 = vmatprep.subr.mxu0 0.0
        %3032 = vmatpush1.msra.mxu0 0.0
        %3033 = vmatprep.subr.mxu0 0.0
        %3034 = vmatpush1.msra.mxu0 0.0
        %3035 = vmatprep.subr.mxu0 0.0
        %3036 = vmatpush1.msra.mxu0 0.0
        %3037 = vmatprep.subr.mxu0 0.0
        %3038 = vmatpush1.msra.mxu0 0.0
        %3039 = vmatprep.subr.mxu0 0.0
        %3040 = vmatpush1.msra.mxu0 0.0
        %3041 = vmatprep.subr.mxu0 0.0
        %3042 = vmatpush1.msra.mxu0 0.0
        %3043 = vmatprep.subr.mxu0 0.0
        %3044 = vmatpush1.msra.mxu0 0.0
        %3045 = vmatprep.subr.mxu0 0.0
        %3046 = vmatpush1.msra.mxu0 0.0
        %3047 = vmatprep.subr.mxu0 0.0
        %3048 = vmatpush1.msra.mxu0 %v2946
        %3049 = vmatprep.subr.mxu0 0.0
        %3050 = vmatpush1.msra.mxu0 %v2945
        %3051 = vmatprep.subr.mxu0 0.0
        %3052 = vmatpush1.msra.mxu0 %v2944
        %3053 = vmatprep.subr.mxu0 0.0
        %3054 = vmatpush1.msra.mxu0 %v2943
        %3055 = vmatprep.subr.mxu0 0.0
        %3056 = vmatpush2.msra.mxu0 0.0
        %3057 = vmatprep.subr.mxu0 0.0
        %3058 = vmatpush2.msra.mxu0 0.0
        %3059 = vmatprep.subr.mxu0 0.0
        %3060 = vmatpush2.msra.mxu0 0.0
        %3061 = vmatprep.subr.mxu0 0.0
        %3062 = vmatpush2.msra.mxu0 0.0
        %3063 = vmatprep.subr.mxu0 0.0
        %3064 = vmatpush2.msra.mxu0 0.0
        %3065 = vmatprep.subr.mxu0 0.0
        %3066 = vmatpush2.msra.mxu0 0.0
        %3067 = vmatprep.subr.mxu0 0.0
        %3068 = vmatpush2.msra.mxu0 0.0
        %3069 = vmatprep.subr.mxu0 0.0
        %3070 = vmatpush2.msra.mxu0 0.0
        %3071 = vmatprep.subr.mxu0 0.0
        %3072 = vmatpush2.msra.mxu0 0.0
        %3073 = vmatprep.subr.mxu0 0.0
        %3074 = vmatpush2.msra.mxu0 0.0
        %3075 = vmatprep.subr.mxu0 0.0
        %3076 = vmatpush2.msra.mxu0 0.0
        %3077 = vmatprep.subr.mxu0 0.0
        %3078 = vmatpush2.msra.mxu0 0.0
        %3079 = vmatprep.subr.mxu0 0.0
        %3080 = vmatpush2.msra.mxu0 0.0
        %3081 = vmatprep.subr.mxu0 0.0
        %3082 = vmatpush2.msra.mxu0 0.0
        %3083 = vmatprep.subr.mxu0 0.0
        %3084 = vmatpush2.msra.mxu0 0.0
        %3085 = vmatprep.subr.mxu0 0.0
        %3086 = vmatpush2.msra.mxu0 0.0
        %3087 = vmatprep.mubr.f32.mxu0 0.0
        %3088 = vmatmul.mubr.f32.gmra.mxu0 %v2949
        %v3089 = vpop.f32.mrf.mxu0
        %v3090 = vadd.f32 0.0, %v3089
        %v3091 = vpop.f32.mrf.mxu0
        %3092 = vmatprep.mubr.f32.mxu0 0.0
        %3093 = vmatmul.mubr.f32.gmra.mxu0 %v2952
        %v3094 = vpop.f32.mrf.mxu0
        %v3095 = vadd.f32 0.0, %v3094
        %v3096 = vpop.f32.mrf.mxu0
        %3097 = vmatprep.mubr.f32.mxu0 0.0
        %3098 = vmatmul.mubr.f32.gmra.mxu0 %v2955
        %v3099 = vpop.f32.mrf.mxu0
        %v3100 = vadd.f32 0.0, %v3099
        %v3101 = vpop.f32.mrf.mxu0
        %3102 = vmatprep.mubr.f32.mxu0 0.0
        %3103 = vmatmul.mubr.f32.gmra.mxu0 %v2958
        %v3104 = vpop.f32.mrf.mxu0
        %v3105 = vadd.f32 0.0, %v3104
        %v3106 = vpop.f32.mrf.mxu0
        %3107 = vmatprep.mubr.f32.mxu0 0.0
        %3108 = vmatmul.mubr.f32.gmra.mxu0 %v2961
        %v3109 = vpop.f32.mrf.mxu0
        %v3110 = vadd.f32 0.0, %v3109
        %v3111 = vpop.f32.mrf.mxu0
        %3112 = vmatprep.mubr.f32.mxu0 0.0
        %3113 = vmatmul.mubr.f32.gmra.mxu0 %v2964
        %v3114 = vpop.f32.mrf.mxu0
        %v3115 = vadd.f32 0.0, %v3114
        %v3116 = vpop.f32.mrf.mxu0
        %3117 = vmatprep.mubr.f32.mxu0 0.0
        %3118 = vmatmul.mubr.f32.gmra.mxu0 %v2967
        %v3119 = vpop.f32.mrf.mxu0
        %v3120 = vadd.f32 0.0, %v3119
        %v3121 = vpop.f32.mrf.mxu0
        %3122 = vmatprep.mubr.f32.mxu0 0.0
        %3123 = vmatmul.mubr.f32.gmra.mxu0 %v2970
        %v3124 = vpop.f32.mrf.mxu0
        %v3125 = vadd.f32 0.0, %v3124
        %v3126 = vpop.f32.mrf.mxu0
        %3127 = vmatprep.mubr.f32.mxu0 0.0
        %3128 = vmatmul.mubr.f32.gmra.mxu0 %v2973
        %v3129 = vpop.f32.mrf.mxu0
        %v3130 = vadd.f32 0.0, %v3129
        %v3131 = vpop.f32.mrf.mxu0
        %3132 = vmatprep.mubr.f32.mxu0 0.0
        %3133 = vmatmul.mubr.f32.gmra.mxu0 %v2976
        %v3134 = vpop.f32.mrf.mxu0
        %v3135 = vadd.f32 0.0, %v3134
        %v3136 = vpop.f32.mrf.mxu0
        %3137 = vmatprep.mubr.f32.mxu0 0.0
        %3138 = vmatmul.mubr.f32.gmra.mxu0 %v2979
        %v3139 = vpop.f32.mrf.mxu0
        %v3140 = vadd.f32 0.0, %v3139
        %v3141 = vpop.f32.mrf.mxu0
        %3142 = vmatprep.mubr.f32.mxu0 0.0
        %3143 = vmatmul.mubr.f32.gmra.mxu0 %v2982
        %v3144 = vpop.f32.mrf.mxu0
        %v3145 = vadd.f32 0.0, %v3144
        %v3146 = vpop.f32.mrf.mxu0
        %3147 = vmatprep.mubr.f32.mxu0 0.0
        %3148 = vmatmul.mubr.f32.gmra.mxu0 %v2985
        %v3149 = vpop.f32.mrf.mxu0
        %v3150 = vadd.f32 0.0, %v3149
        %v3151 = vpop.f32.mrf.mxu0
        %3152 = vmatprep.mubr.f32.mxu0 0.0
        %3153 = vmatmul.mubr.f32.gmra.mxu0 %v2988
        %v3154 = vpop.f32.mrf.mxu0
        %v3155 = vadd.f32 0.0, %v3154
        %v3156 = vpop.f32.mrf.mxu0
        %3157 = vmatprep.mubr.f32.mxu0 0.0
        %3158 = vmatmul.mubr.f32.gmra.mxu0 %v2991
        %v3159 = vpop.f32.mrf.mxu0
        %v3160 = vadd.f32 0.0, %v3159
        %v3161 = vpop.f32.mrf.mxu0
        %3162 = vmatprep.mubr.f32.mxu0 0.0
        %3163 = vmatmul.mubr.f32.gmra.mxu0 %v2994
        %v3164 = vpop.f32.mrf.mxu0
        %v3165 = vadd.f32 0.0, %v3164
        %v3166 = vpop.f32.mrf.mxu0
        %3167 = vmatprep.mubr.f32.mxu0 0.0
        %3168 = vmatmul.mubr.f32.gmra.mxu0 %v2997
        %v3169 = vpop.f32.mrf.mxu0
        %v3170 = vadd.f32 0.0, %v3169
        %v3171 = vpop.f32.mrf.mxu0
        %3172 = vmatprep.mubr.f32.mxu0 0.0
        %3173 = vmatmul.mubr.f32.gmra.mxu0 %v3000
        %v3174 = vpop.f32.mrf.mxu0
        %v3175 = vadd.f32 0.0, %v3174
        %v3176 = vpop.f32.mrf.mxu0
        %3177 = vmatprep.mubr.f32.mxu0 0.0
        %3178 = vmatmul.mubr.f32.gmra.mxu0 %v3003
        %v3179 = vpop.f32.mrf.mxu0
        %v3180 = vadd.f32 0.0, %v3179
        %v3181 = vpop.f32.mrf.mxu0
        %3182 = vmatprep.mubr.f32.mxu0 0.0
        %3183 = vmatmul.mubr.f32.gmra.mxu0 %v3006
        %v3184 = vpop.f32.mrf.mxu0
        %v3185 = vadd.f32 0.0, %v3184
        %v3186 = vpop.f32.mrf.mxu0
        %3187 = vmatprep.mubr.f32.mxu0 0.0
        %3188 = vmatmul.mubr.f32.gmra.mxu0 %v3009
        %v3189 = vpop.f32.mrf.mxu0
        %v3190 = vadd.f32 0.0, %v3189
        %v3191 = vpop.f32.mrf.mxu0
        %3192 = vmatprep.mubr.f32.mxu0 0.0
        %3193 = vmatmul.mubr.f32.gmra.mxu0 %v3012
        %v3194 = vpop.f32.mrf.mxu0
        %v3195 = vadd.f32 0.0, %v3194
        %v3196 = vpop.f32.mrf.mxu0
        %3197 = vmatprep.mubr.f32.mxu0 0.0
        %3198 = vmatmul.mubr.f32.gmra.mxu0 %v3015
        %v3199 = vpop.f32.mrf.mxu0
        %v3200 = vadd.f32 0.0, %v3199
        %v3201 = vpop.f32.mrf.mxu0
        %3202 = vmatprep.mubr.f32.mxu0 0.0
        %3203 = vmatmul.mubr.f32.gmra.mxu0 %v3018
        %v3204 = vpop.f32.mrf.mxu0
        %v3205 = vadd.f32 0.0, %v3204
        %v3206 = vpop.f32.mrf.mxu0
        %3207 = vmatprep.mubr.f32.mxu0 0.0
        %3208 = vmatmul.mubr.f32.gmra.mxu0 %v3021
        %v3209 = vpop.f32.mrf.mxu0
        %v3210 = vadd.f32 0.0, %v3209
        %v3211 = vpop.f32.mrf.mxu0
        %3212 = vdwg.mxu0
        %s3213 = scalar_lea.vmem %s7, 32
        %v3214 = vld [vmem:[%s3213] sm:$0xff]
        %v3215 = vld [vmem:[%s3213 + $0x8] sm:$0xff]
        %v3216 = vld [vmem:[%s3213 + $0x10] sm:$0xff]
        %v3217 = vld [vmem:[%s3213 + $0x18] sm:$0xff]
        %3218 = vmatprep.subr.mxu0 0.0
        %3219 = vmatpush1.msra.mxu0 0.0
        %3220 = vmatprep.subr.mxu0 0.0
        %3221 = vmatpush1.msra.mxu0 0.0
        %3222 = vmatprep.subr.mxu0 0.0
        %3223 = vmatpush1.msra.mxu0 0.0
        %3224 = vmatprep.subr.mxu0 0.0
        %3225 = vmatpush1.msra.mxu0 0.0
        %3226 = vmatprep.subr.mxu0 0.0
        %3227 = vmatpush1.msra.mxu0 0.0
        %3228 = vmatprep.subr.mxu0 0.0
        %3229 = vmatpush1.msra.mxu0 0.0
        %3230 = vmatprep.subr.mxu0 0.0
        %3231 = vmatpush1.msra.mxu0 0.0
        %3232 = vmatprep.subr.mxu0 0.0
        %3233 = vmatpush1.msra.mxu0 0.0
        %3234 = vmatprep.subr.mxu0 0.0
        %3235 = vmatpush1.msra.mxu0 0.0
        %3236 = vmatprep.subr.mxu0 0.0
        %3237 = vmatpush1.msra.mxu0 0.0
        %3238 = vmatprep.subr.mxu0 0.0
        %3239 = vmatpush1.msra.mxu0 0.0
        %3240 = vmatprep.subr.mxu0 0.0
        %3241 = vmatpush1.msra.mxu0 0.0
        %3242 = vmatprep.subr.mxu0 0.0
        %3243 = vmatpush1.msra.mxu0 %v3217
        %3244 = vmatprep.subr.mxu0 0.0
        %3245 = vmatpush1.msra.mxu0 %v3216
        %3246 = vmatprep.subr.mxu0 0.0
        %3247 = vmatpush1.msra.mxu0 %v3215
        %3248 = vmatprep.subr.mxu0 0.0
        %3249 = vmatpush1.msra.mxu0 %v3214
        %3250 = vmatprep.subr.mxu0 0.0
        %3251 = vmatpush2.msra.mxu0 0.0
        %3252 = vmatprep.subr.mxu0 0.0
        %3253 = vmatpush2.msra.mxu0 0.0
        %3254 = vmatprep.subr.mxu0 0.0
        %3255 = vmatpush2.msra.mxu0 0.0
        %3256 = vmatprep.subr.mxu0 0.0
        %3257 = vmatpush2.msra.mxu0 0.0
        %3258 = vmatprep.subr.mxu0 0.0
        %3259 = vmatpush2.msra.mxu0 0.0
        %3260 = vmatprep.subr.mxu0 0.0
        %3261 = vmatpush2.msra.mxu0 0.0
        %3262 = vmatprep.subr.mxu0 0.0
        %3263 = vmatpush2.msra.mxu0 0.0
        %3264 = vmatprep.subr.mxu0 0.0
        %3265 = vmatpush2.msra.mxu0 0.0
        %3266 = vmatprep.subr.mxu0 0.0
        %3267 = vmatpush2.msra.mxu0 0.0
        %3268 = vmatprep.subr.mxu0 0.0
        %3269 = vmatpush2.msra.mxu0 0.0
        %3270 = vmatprep.subr.mxu0 0.0
        %3271 = vmatpush2.msra.mxu0 0.0
        %3272 = vmatprep.subr.mxu0 0.0
        %3273 = vmatpush2.msra.mxu0 0.0
        %3274 = vmatprep.subr.mxu0 0.0
        %3275 = vmatpush2.msra.mxu0 0.0
        %3276 = vmatprep.subr.mxu0 0.0
        %3277 = vmatpush2.msra.mxu0 0.0
        %3278 = vmatprep.subr.mxu0 0.0
        %3279 = vmatpush2.msra.mxu0 0.0
        %3280 = vmatprep.subr.mxu0 0.0
        %3281 = vmatpush2.msra.mxu0 0.0
        %3282 = vmatprep.mubr.f32.mxu0 0.0
        %3283 = vmatmul.mubr.f32.gmra.mxu0 %v2949
        %v3284 = vpop.f32.mrf.mxu0
        %v3285 = vadd.f32 0.0, %v3284
        %v3286 = vpop.f32.mrf.mxu0
        %3287 = vmatprep.mubr.f32.mxu0 0.0
        %3288 = vmatmul.mubr.f32.gmra.mxu0 %v2952
        %v3289 = vpop.f32.mrf.mxu0
        %v3290 = vadd.f32 0.0, %v3289
        %v3291 = vpop.f32.mrf.mxu0
        %3292 = vmatprep.mubr.f32.mxu0 0.0
        %3293 = vmatmul.mubr.f32.gmra.mxu0 %v2955
        %v3294 = vpop.f32.mrf.mxu0
        %v3295 = vadd.f32 0.0, %v3294
        %v3296 = vpop.f32.mrf.mxu0
        %3297 = vmatprep.mubr.f32.mxu0 0.0
        %3298 = vmatmul.mubr.f32.gmra.mxu0 %v2958
        %v3299 = vpop.f32.mrf.mxu0
        %v3300 = vadd.f32 0.0, %v3299
        %v3301 = vpop.f32.mrf.mxu0
        %3302 = vmatprep.mubr.f32.mxu0 0.0
        %3303 = vmatmul.mubr.f32.gmra.mxu0 %v2961
        %v3304 = vpop.f32.mrf.mxu0
        %v3305 = vadd.f32 0.0, %v3304
        %v3306 = vpop.f32.mrf.mxu0
        %3307 = vmatprep.mubr.f32.mxu0 0.0
        %3308 = vmatmul.mubr.f32.gmra.mxu0 %v2964
        %v3309 = vpop.f32.mrf.mxu0
        %v3310 = vadd.f32 0.0, %v3309
        %v3311 = vpop.f32.mrf.mxu0
        %3312 = vmatprep.mubr.f32.mxu0 0.0
        %3313 = vmatmul.mubr.f32.gmra.mxu0 %v2967
        %v3314 = vpop.f32.mrf.mxu0
        %v3315 = vadd.f32 0.0, %v3314
        %v3316 = vpop.f32.mrf.mxu0
        %3317 = vmatprep.mubr.f32.mxu0 0.0
        %3318 = vmatmul.mubr.f32.gmra.mxu0 %v2970
        %v3319 = vpop.f32.mrf.mxu0
        %v3320 = vadd.f32 0.0, %v3319
        %v3321 = vpop.f32.mrf.mxu0
        %3322 = vmatprep.mubr.f32.mxu0 0.0
        %3323 = vmatmul.mubr.f32.gmra.mxu0 %v2973
        %v3324 = vpop.f32.mrf.mxu0
        %v3325 = vadd.f32 0.0, %v3324
        %v3326 = vpop.f32.mrf.mxu0
        %3327 = vmatprep.mubr.f32.mxu0 0.0
        %3328 = vmatmul.mubr.f32.gmra.mxu0 %v2976
        %v3329 = vpop.f32.mrf.mxu0
        %v3330 = vadd.f32 0.0, %v3329
        %v3331 = vpop.f32.mrf.mxu0
        %3332 = vmatprep.mubr.f32.mxu0 0.0
        %3333 = vmatmul.mubr.f32.gmra.mxu0 %v2979
        %v3334 = vpop.f32.mrf.mxu0
        %v3335 = vadd.f32 0.0, %v3334
        %v3336 = vpop.f32.mrf.mxu0
        %3337 = vmatprep.mubr.f32.mxu0 0.0
        %3338 = vmatmul.mubr.f32.gmra.mxu0 %v2982
        %v3339 = vpop.f32.mrf.mxu0
        %v3340 = vadd.f32 0.0, %v3339
        %v3341 = vpop.f32.mrf.mxu0
        %3342 = vmatprep.mubr.f32.mxu0 0.0
        %3343 = vmatmul.mubr.f32.gmra.mxu0 %v2985
        %v3344 = vpop.f32.mrf.mxu0
        %v3345 = vadd.f32 0.0, %v3344
        %v3346 = vpop.f32.mrf.mxu0
        %3347 = vmatprep.mubr.f32.mxu0 0.0
        %3348 = vmatmul.mubr.f32.gmra.mxu0 %v2988
        %v3349 = vpop.f32.mrf.mxu0
        %v3350 = vadd.f32 0.0, %v3349
        %v3351 = vpop.f32.mrf.mxu0
        %3352 = vmatprep.mubr.f32.mxu0 0.0
        %3353 = vmatmul.mubr.f32.gmra.mxu0 %v2991
        %v3354 = vpop.f32.mrf.mxu0
        %v3355 = vadd.f32 0.0, %v3354
        %v3356 = vpop.f32.mrf.mxu0
        %3357 = vmatprep.mubr.f32.mxu0 0.0
        %3358 = vmatmul.mubr.f32.gmra.mxu0 %v2994
        %v3359 = vpop.f32.mrf.mxu0
        %v3360 = vadd.f32 0.0, %v3359
        %v3361 = vpop.f32.mrf.mxu0
        %3362 = vmatprep.mubr.f32.mxu0 0.0
        %3363 = vmatmul.mubr.f32.gmra.mxu0 %v2997
        %v3364 = vpop.f32.mrf.mxu0
        %v3365 = vadd.f32 0.0, %v3364
        %v3366 = vpop.f32.mrf.mxu0
        %3367 = vmatprep.mubr.f32.mxu0 0.0
        %3368 = vmatmul.mubr.f32.gmra.mxu0 %v3000
        %v3369 = vpop.f32.mrf.mxu0
        %v3370 = vadd.f32 0.0, %v3369
        %v3371 = vpop.f32.mrf.mxu0
        %3372 = vmatprep.mubr.f32.mxu0 0.0
        %3373 = vmatmul.mubr.f32.gmra.mxu0 %v3003
        %v3374 = vpop.f32.mrf.mxu0
        %v3375 = vadd.f32 0.0, %v3374
        %v3376 = vpop.f32.mrf.mxu0
        %3377 = vmatprep.mubr.f32.mxu0 0.0
        %3378 = vmatmul.mubr.f32.gmra.mxu0 %v3006
        %v3379 = vpop.f32.mrf.mxu0
        %v3380 = vadd.f32 0.0, %v3379
        %v3381 = vpop.f32.mrf.mxu0
        %3382 = vmatprep.mubr.f32.mxu0 0.0
        %3383 = vmatmul.mubr.f32.gmra.mxu0 %v3009
        %v3384 = vpop.f32.mrf.mxu0
        %v3385 = vadd.f32 0.0, %v3384
        %v3386 = vpop.f32.mrf.mxu0
        %3387 = vmatprep.mubr.f32.mxu0 0.0
        %3388 = vmatmul.mubr.f32.gmra.mxu0 %v3012
        %v3389 = vpop.f32.mrf.mxu0
        %v3390 = vadd.f32 0.0, %v3389
        %v3391 = vpop.f32.mrf.mxu0
        %3392 = vmatprep.mubr.f32.mxu0 0.0
        %3393 = vmatmul.mubr.f32.gmra.mxu0 %v3015
        %v3394 = vpop.f32.mrf.mxu0
        %v3395 = vadd.f32 0.0, %v3394
        %v3396 = vpop.f32.mrf.mxu0
        %3397 = vmatprep.mubr.f32.mxu0 0.0
        %3398 = vmatmul.mubr.f32.gmra.mxu0 %v3018
        %v3399 = vpop.f32.mrf.mxu0
        %v3400 = vadd.f32 0.0, %v3399
        %v3401 = vpop.f32.mrf.mxu0
        %3402 = vmatprep.mubr.f32.mxu0 0.0
        %3403 = vmatmul.mubr.f32.gmra.mxu0 %v3021
        %v3404 = vpop.f32.mrf.mxu0
        %v3405 = vadd.f32 0.0, %v3404
        %v3406 = vpop.f32.mrf.mxu0
        %3407 = vdwg.mxu0
        %s3408 = scalar_lea.vmem %s7, 64
        %v3409 = vld [vmem:[%s3408] sm:$0xff]
        %v3410 = vld [vmem:[%s3408 + $0x8] sm:$0xff]
        %v3411 = vld [vmem:[%s3408 + $0x10] sm:$0xff]
        %v3412 = vld [vmem:[%s3408 + $0x18] sm:$0xff]
        %3413 = vmatprep.subr.mxu0 0.0
        %3414 = vmatpush1.msra.mxu0 0.0
        %3415 = vmatprep.subr.mxu0 0.0
        %3416 = vmatpush1.msra.mxu0 0.0
        %3417 = vmatprep.subr.mxu0 0.0
        %3418 = vmatpush1.msra.mxu0 0.0
        %3419 = vmatprep.subr.mxu0 0.0
        %3420 = vmatpush1.msra.mxu0 0.0
        %3421 = vmatprep.subr.mxu0 0.0
        %3422 = vmatpush1.msra.mxu0 0.0
        %3423 = vmatprep.subr.mxu0 0.0
        %3424 = vmatpush1.msra.mxu0 0.0
        %3425 = vmatprep.subr.mxu0 0.0
        %3426 = vmatpush1.msra.mxu0 0.0
        %3427 = vmatprep.subr.mxu0 0.0
        %3428 = vmatpush1.msra.mxu0 0.0
        %3429 = vmatprep.subr.mxu0 0.0
        %3430 = vmatpush1.msra.mxu0 0.0
        %3431 = vmatprep.subr.mxu0 0.0
        %3432 = vmatpush1.msra.mxu0 0.0
        %3433 = vmatprep.subr.mxu0 0.0
        %3434 = vmatpush1.msra.mxu0 0.0
        %3435 = vmatprep.subr.mxu0 0.0
        %3436 = vmatpush1.msra.mxu0 0.0
        %3437 = vmatprep.subr.mxu0 0.0
        %3438 = vmatpush1.msra.mxu0 %v3412
        %3439 = vmatprep.subr.mxu0 0.0
        %3440 = vmatpush1.msra.mxu0 %v3411
        %3441 = vmatprep.subr.mxu0 0.0
        %3442 = vmatpush1.msra.mxu0 %v3410
        %3443 = vmatprep.subr.mxu0 0.0
        %3444 = vmatpush1.msra.mxu0 %v3409
        %3445 = vmatprep.subr.mxu0 0.0
        %3446 = vmatpush2.msra.mxu0 0.0
        %3447 = vmatprep.subr.mxu0 0.0
        %3448 = vmatpush2.msra.mxu0 0.0
        %3449 = vmatprep.subr.mxu0 0.0
        %3450 = vmatpush2.msra.mxu0 0.0
        %3451 = vmatprep.subr.mxu0 0.0
        %3452 = vmatpush2.msra.mxu0 0.0
        %3453 = vmatprep.subr.mxu0 0.0
        %3454 = vmatpush2.msra.mxu0 0.0
        %3455 = vmatprep.subr.mxu0 0.0
        %3456 = vmatpush2.msra.mxu0 0.0
        %3457 = vmatprep.subr.mxu0 0.0
        %3458 = vmatpush2.msra.mxu0 0.0
        %3459 = vmatprep.subr.mxu0 0.0
        %3460 = vmatpush2.msra.mxu0 0.0
        %3461 = vmatprep.subr.mxu0 0.0
        %3462 = vmatpush2.msra.mxu0 0.0
        %3463 = vmatprep.subr.mxu0 0.0
        %3464 = vmatpush2.msra.mxu0 0.0
        %3465 = vmatprep.subr.mxu0 0.0
        %3466 = vmatpush2.msra.mxu0 0.0
        %3467 = vmatprep.subr.mxu0 0.0
        %3468 = vmatpush2.msra.mxu0 0.0
        %3469 = vmatprep.subr.mxu0 0.0
        %3470 = vmatpush2.msra.mxu0 0.0
        %3471 = vmatprep.subr.mxu0 0.0
        %3472 = vmatpush2.msra.mxu0 0.0
        %3473 = vmatprep.subr.mxu0 0.0
        %3474 = vmatpush2.msra.mxu0 0.0
        %3475 = vmatprep.subr.mxu0 0.0
        %3476 = vmatpush2.msra.mxu0 0.0
        %3477 = vmatprep.mubr.f32.mxu0 0.0
        %3478 = vmatmul.mubr.f32.gmra.mxu0 %v2949
        %v3479 = vpop.f32.mrf.mxu0
        %v3480 = vadd.f32 0.0, %v3479
        %v3481 = vpop.f32.mrf.mxu0
        %3482 = vmatprep.mubr.f32.mxu0 0.0
        %3483 = vmatmul.mubr.f32.gmra.mxu0 %v2952
        %v3484 = vpop.f32.mrf.mxu0
        %v3485 = vadd.f32 0.0, %v3484
        %v3486 = vpop.f32.mrf.mxu0
        %3487 = vmatprep.mubr.f32.mxu0 0.0
        %3488 = vmatmul.mubr.f32.gmra.mxu0 %v2955
        %v3489 = vpop.f32.mrf.mxu0
        %v3490 = vadd.f32 0.0, %v3489
        %v3491 = vpop.f32.mrf.mxu0
        %3492 = vmatprep.mubr.f32.mxu0 0.0
        %3493 = vmatmul.mubr.f32.gmra.mxu0 %v2958
        %v3494 = vpop.f32.mrf.mxu0
        %v3495 = vadd.f32 0.0, %v3494
        %v3496 = vpop.f32.mrf.mxu0
        %3497 = vmatprep.mubr.f32.mxu0 0.0
        %3498 = vmatmul.mubr.f32.gmra.mxu0 %v2961
        %v3499 = vpop.f32.mrf.mxu0
        %v3500 = vadd.f32 0.0, %v3499
        %v3501 = vpop.f32.mrf.mxu0
        %3502 = vmatprep.mubr.f32.mxu0 0.0
        %3503 = vmatmul.mubr.f32.gmra.mxu0 %v2964
        %v3504 = vpop.f32.mrf.mxu0
        %v3505 = vadd.f32 0.0, %v3504
        %v3506 = vpop.f32.mrf.mxu0
        %3507 = vmatprep.mubr.f32.mxu0 0.0
        %3508 = vmatmul.mubr.f32.gmra.mxu0 %v2967
        %v3509 = vpop.f32.mrf.mxu0
        %v3510 = vadd.f32 0.0, %v3509
        %v3511 = vpop.f32.mrf.mxu0
        %3512 = vmatprep.mubr.f32.mxu0 0.0
        %3513 = vmatmul.mubr.f32.gmra.mxu0 %v2970
        %v3514 = vpop.f32.mrf.mxu0
        %v3515 = vadd.f32 0.0, %v3514
        %v3516 = vpop.f32.mrf.mxu0
        %3517 = vmatprep.mubr.f32.mxu0 0.0
        %3518 = vmatmul.mubr.f32.gmra.mxu0 %v2973
        %v3519 = vpop.f32.mrf.mxu0
        %v3520 = vadd.f32 0.0, %v3519
        %v3521 = vpop.f32.mrf.mxu0
        %3522 = vmatprep.mubr.f32.mxu0 0.0
        %3523 = vmatmul.mubr.f32.gmra.mxu0 %v2976
        %v3524 = vpop.f32.mrf.mxu0
        %v3525 = vadd.f32 0.0, %v3524
        %v3526 = vpop.f32.mrf.mxu0
        %3527 = vmatprep.mubr.f32.mxu0 0.0
        %3528 = vmatmul.mubr.f32.gmra.mxu0 %v2979
        %v3529 = vpop.f32.mrf.mxu0
        %v3530 = vadd.f32 0.0, %v3529
        %v3531 = vpop.f32.mrf.mxu0
        %3532 = vmatprep.mubr.f32.mxu0 0.0
        %3533 = vmatmul.mubr.f32.gmra.mxu0 %v2982
        %v3534 = vpop.f32.mrf.mxu0
        %v3535 = vadd.f32 0.0, %v3534
        %v3536 = vpop.f32.mrf.mxu0
        %3537 = vmatprep.mubr.f32.mxu0 0.0
        %3538 = vmatmul.mubr.f32.gmra.mxu0 %v2985
        %v3539 = vpop.f32.mrf.mxu0
        %v3540 = vadd.f32 0.0, %v3539
        %v3541 = vpop.f32.mrf.mxu0
        %3542 = vmatprep.mubr.f32.mxu0 0.0
        %3543 = vmatmul.mubr.f32.gmra.mxu0 %v2988
        %v3544 = vpop.f32.mrf.mxu0
        %v3545 = vadd.f32 0.0, %v3544
        %v3546 = vpop.f32.mrf.mxu0
        %3547 = vmatprep.mubr.f32.mxu0 0.0
        %3548 = vmatmul.mubr.f32.gmra.mxu0 %v2991
        %v3549 = vpop.f32.mrf.mxu0
        %v3550 = vadd.f32 0.0, %v3549
        %v3551 = vpop.f32.mrf.mxu0
        %3552 = vmatprep.mubr.f32.mxu0 0.0
        %3553 = vmatmul.mubr.f32.gmra.mxu0 %v2994
        %v3554 = vpop.f32.mrf.mxu0
        %v3555 = vadd.f32 0.0, %v3554
        %v3556 = vpop.f32.mrf.mxu0
        %3557 = vmatprep.mubr.f32.mxu0 0.0
        %3558 = vmatmul.mubr.f32.gmra.mxu0 %v2997
        %v3559 = vpop.f32.mrf.mxu0
        %v3560 = vadd.f32 0.0, %v3559
        %v3561 = vpop.f32.mrf.mxu0
        %3562 = vmatprep.mubr.f32.mxu0 0.0
        %3563 = vmatmul.mubr.f32.gmra.mxu0 %v3000
        %v3564 = vpop.f32.mrf.mxu0
        %v3565 = vadd.f32 0.0, %v3564
        %v3566 = vpop.f32.mrf.mxu0
        %3567 = vmatprep.mubr.f32.mxu0 0.0
        %3568 = vmatmul.mubr.f32.gmra.mxu0 %v3003
        %v3569 = vpop.f32.mrf.mxu0
        %v3570 = vadd.f32 0.0, %v3569
        %v3571 = vpop.f32.mrf.mxu0
        %3572 = vmatprep.mubr.f32.mxu0 0.0
        %3573 = vmatmul.mubr.f32.gmra.mxu0 %v3006
        %v3574 = vpop.f32.mrf.mxu0
        %v3575 = vadd.f32 0.0, %v3574
        %v3576 = vpop.f32.mrf.mxu0
        %3577 = vmatprep.mubr.f32.mxu0 0.0
        %3578 = vmatmul.mubr.f32.gmra.mxu0 %v3009
        %v3579 = vpop.f32.mrf.mxu0
        %v3580 = vadd.f32 0.0, %v3579
        %v3581 = vpop.f32.mrf.mxu0
        %3582 = vmatprep.mubr.f32.mxu0 0.0
        %3583 = vmatmul.mubr.f32.gmra.mxu0 %v3012
        %v3584 = vpop.f32.mrf.mxu0
        %v3585 = vadd.f32 0.0, %v3584
        %v3586 = vpop.f32.mrf.mxu0
        %3587 = vmatprep.mubr.f32.mxu0 0.0
        %3588 = vmatmul.mubr.f32.gmra.mxu0 %v3015
        %v3589 = vpop.f32.mrf.mxu0
        %v3590 = vadd.f32 0.0, %v3589
        %v3591 = vpop.f32.mrf.mxu0
        %3592 = vmatprep.mubr.f32.mxu0 0.0
        %3593 = vmatmul.mubr.f32.gmra.mxu0 %v3018
        %v3594 = vpop.f32.mrf.mxu0
        %v3595 = vadd.f32 0.0, %v3594
        %v3596 = vpop.f32.mrf.mxu0
        %3597 = vmatprep.mubr.f32.mxu0 0.0
        %3598 = vmatmul.mubr.f32.gmra.mxu0 %v3021
        %v3599 = vpop.f32.mrf.mxu0
        %v3600 = vadd.f32 0.0, %v3599
        %v3601 = vpop.f32.mrf.mxu0
        %3602 = vdwg.mxu0
        %v3603 = vrot.slane %v3090, 7
        %v3604 = vrot.slane %v3095, 7
        %v3605 = vrot.slane %v3100, 7
        %v3606 = vrot.slane %v3105, 7
        %v3607 = vrot.slane %v3110, 7
        %v3608 = vrot.slane %v3115, 7
        %v3609 = vrot.slane %v3120, 7
        %v3610 = vrot.slane %v3125, 7
        %v3611 = vrot.slane %v3130, 7
        %v3612 = vrot.slane %v3135, 7
        %v3613 = vrot.slane %v3140, 7
        %v3614 = vrot.slane %v3145, 7
        %v3615 = vrot.slane %v3150, 7
        %v3616 = vrot.slane %v3155, 7
        %v3617 = vrot.slane %v3160, 7
        %v3618 = vrot.slane %v3165, 7
        %v3619 = vrot.slane %v3170, 7
        %v3620 = vrot.slane %v3175, 7
        %v3621 = vrot.slane %v3180, 7
        %v3622 = vrot.slane %v3185, 7
        %v3623 = vrot.slane %v3190, 7
        %v3624 = vrot.slane %v3195, 7
        %v3625 = vrot.slane %v3200, 7
        %v3626 = vrot.slane %v3205, 7
        %v3627 = vrot.slane %v3210, 7
        %v3628 = vsel %vm1730, %v3626, %v3627
        %v3629 = vsel %vm1730, %v3625, %v3626
        %v3630 = vsel %vm1730, %v3624, %v3625
        %v3631 = vsel %vm1730, %v3623, %v3624
        %v3632 = vsel %vm1730, %v3622, %v3623
        %v3633 = vsel %vm1730, %v3621, %v3622
        %v3634 = vsel %vm1730, %v3620, %v3621
        %v3635 = vsel %vm1730, %v3619, %v3620
        %v3636 = vsel %vm1730, %v3618, %v3619
        %v3637 = vsel %vm1730, %v3617, %v3618
        %v3638 = vsel %vm1730, %v3616, %v3617
        %v3639 = vsel %vm1730, %v3615, %v3616
        %v3640 = vsel %vm1730, %v3614, %v3615
        %v3641 = vsel %vm1730, %v3613, %v3614
        %v3642 = vsel %vm1730, %v3612, %v3613
        %v3643 = vsel %vm1730, %v3611, %v3612
        %v3644 = vsel %vm1730, %v3610, %v3611
        %v3645 = vsel %vm1730, %v3609, %v3610
        %v3646 = vsel %vm1730, %v3608, %v3609
        %v3647 = vsel %vm1730, %v3607, %v3608
        %v3648 = vsel %vm1730, %v3606, %v3607
        %v3649 = vsel %vm1730, %v3605, %v3606
        %v3650 = vsel %vm1730, %v3604, %v3605
        %v3651 = vsel %vm1730, %v3603, %v3604
        %v3652 = vsel %vm1730, %v3627, %v3603
        %v3653 = vsel %vm1781, %v3652, 0.0
        %v3654 = vsel %vm1782, %v3651, 0.0
        %v3655 = vsel %vm1783, %v3650, 0.0
        %v3656 = vsel %vm1784, %v3649, 0.0
        %v3657 = vsel %vm1785, %v3648, 0.0
        %v3658 = vsel %vm1786, %v3647, 0.0
        %v3659 = vsel %vm1787, %v3646, 0.0
        %v3660 = vsel %vm1788, %v3645, 0.0
        %v3661 = vsel %vm1789, %v3644, 0.0
        %v3662 = vsel %vm1790, %v3643, 0.0
        %v3663 = vsel %vm1791, %v3642, 0.0
        %v3664 = vsel %vm1792, %v3641, 0.0
        %v3665 = vsel %vm1793, %v3640, 0.0
        %v3666 = vsel %vm1794, %v3639, 0.0
        %v3667 = vsel %vm1795, %v3638, 0.0
        %v3668 = vsel %vm1796, %v3637, 0.0
        %v3669 = vsel %vm1797, %v3636, 0.0
        %v3670 = vsel %vm1798, %v3635, 0.0
        %v3671 = vsel %vm1799, %v3634, 0.0
        %v3672 = vsel %vm1800, %v3633, 0.0
        %v3673 = vsel %vm1801, %v3632, 0.0
        %v3674 = vsel %vm1802, %v3631, 0.0
        %v3675 = vsel %vm1803, %v3630, 0.0
        %v3676 = vsel %vm1804, %v3629, 0.0
        %v3677 = vsel %vm1805, %v3628, 0.0
        %v3678 = vadd.f32 %v3653, %v3285
        %v3679 = vadd.f32 %v3654, %v3290
        %v3680 = vadd.f32 %v3655, %v3295
        %v3681 = vadd.f32 %v3656, %v3300
        %v3682 = vadd.f32 %v3657, %v3305
        %v3683 = vadd.f32 %v3658, %v3310
        %v3684 = vadd.f32 %v3659, %v3315
        %v3685 = vadd.f32 %v3660, %v3320
        %v3686 = vadd.f32 %v3661, %v3325
        %v3687 = vadd.f32 %v3662, %v3330
        %v3688 = vadd.f32 %v3663, %v3335
        %v3689 = vadd.f32 %v3664, %v3340
        %v3690 = vadd.f32 %v3665, %v3345
        %v3691 = vadd.f32 %v3666, %v3350
        %v3692 = vadd.f32 %v3667, %v3355
        %v3693 = vadd.f32 %v3668, %v3360
        %v3694 = vadd.f32 %v3669, %v3365
        %v3695 = vadd.f32 %v3670, %v3370
        %v3696 = vadd.f32 %v3671, %v3375
        %v3697 = vadd.f32 %v3672, %v3380
        %v3698 = vadd.f32 %v3673, %v3385
        %v3699 = vadd.f32 %v3674, %v3390
        %v3700 = vadd.f32 %v3675, %v3395
        %v3701 = vadd.f32 %v3676, %v3400
        %v3702 = vadd.f32 %v3677, %v3405
        %v3703 = vrot.slane %v3480, 1
        %v3704 = vrot.slane %v3485, 1
        %v3705 = vrot.slane %v3490, 1
        %v3706 = vrot.slane %v3495, 1
        %v3707 = vrot.slane %v3500, 1
        %v3708 = vrot.slane %v3505, 1
        %v3709 = vrot.slane %v3510, 1
        %v3710 = vrot.slane %v3515, 1
        %v3711 = vrot.slane %v3520, 1
        %v3712 = vrot.slane %v3525, 1
        %v3713 = vrot.slane %v3530, 1
        %v3714 = vrot.slane %v3535, 1
        %v3715 = vrot.slane %v3540, 1
        %v3716 = vrot.slane %v3545, 1
        %v3717 = vrot.slane %v3550, 1
        %v3718 = vrot.slane %v3555, 1
        %v3719 = vrot.slane %v3560, 1
        %v3720 = vrot.slane %v3565, 1
        %v3721 = vrot.slane %v3570, 1
        %v3722 = vrot.slane %v3575, 1
        %v3723 = vrot.slane %v3580, 1
        %v3724 = vrot.slane %v3585, 1
        %v3725 = vrot.slane %v3590, 1
        %v3726 = vrot.slane %v3595, 1
        %v3727 = vrot.slane %v3600, 1
        %v3728 = vsel %vm1881, %v3726, %v3727
        %v3729 = vsel %vm1881, %v3725, %v3726
        %v3730 = vsel %vm1881, %v3724, %v3725
        %v3731 = vsel %vm1881, %v3723, %v3724
        %v3732 = vsel %vm1881, %v3722, %v3723
        %v3733 = vsel %vm1881, %v3721, %v3722
        %v3734 = vsel %vm1881, %v3720, %v3721
        %v3735 = vsel %vm1881, %v3719, %v3720
        %v3736 = vsel %vm1881, %v3718, %v3719
        %v3737 = vsel %vm1881, %v3717, %v3718
        %v3738 = vsel %vm1881, %v3716, %v3717
        %v3739 = vsel %vm1881, %v3715, %v3716
        %v3740 = vsel %vm1881, %v3714, %v3715
        %v3741 = vsel %vm1881, %v3713, %v3714
        %v3742 = vsel %vm1881, %v3712, %v3713
        %v3743 = vsel %vm1881, %v3711, %v3712
        %v3744 = vsel %vm1881, %v3710, %v3711
        %v3745 = vsel %vm1881, %v3709, %v3710
        %v3746 = vsel %vm1881, %v3708, %v3709
        %v3747 = vsel %vm1881, %v3707, %v3708
        %v3748 = vsel %vm1881, %v3706, %v3707
        %v3749 = vsel %vm1881, %v3705, %v3706
        %v3750 = vsel %vm1881, %v3704, %v3705
        %v3751 = vsel %vm1881, %v3703, %v3704
        %v3752 = vsel %vm1881, %v3727, %v3703
        %v3753 = vsel %vm1932, %v3751, 0.0
        %v3754 = vsel %vm1933, %v3750, 0.0
        %v3755 = vsel %vm1934, %v3749, 0.0
        %v3756 = vsel %vm1935, %v3748, 0.0
        %v3757 = vsel %vm1936, %v3747, 0.0
        %v3758 = vsel %vm1937, %v3746, 0.0
        %v3759 = vsel %vm1938, %v3745, 0.0
        %v3760 = vsel %vm1939, %v3744, 0.0
        %v3761 = vsel %vm1940, %v3743, 0.0
        %v3762 = vsel %vm1941, %v3742, 0.0
        %v3763 = vsel %vm1942, %v3741, 0.0
        %v3764 = vsel %vm1943, %v3740, 0.0
        %v3765 = vsel %vm1944, %v3739, 0.0
        %v3766 = vsel %vm1945, %v3738, 0.0
        %v3767 = vsel %vm1946, %v3737, 0.0
        %v3768 = vsel %vm1947, %v3736, 0.0
        %v3769 = vsel %vm1948, %v3735, 0.0
        %v3770 = vsel %vm1949, %v3734, 0.0
        %v3771 = vsel %vm1950, %v3733, 0.0
        %v3772 = vsel %vm1951, %v3732, 0.0
        %v3773 = vsel %vm1952, %v3731, 0.0
        %v3774 = vsel %vm1953, %v3730, 0.0
        %v3775 = vsel %vm1954, %v3729, 0.0
        %v3776 = vsel %vm1955, %v3728, 0.0
        %v3777 = vsel %vm1956, %v3752, 0.0
        %v3778 = vadd.f32 %v3678, %v3753
        %v3779 = vadd.f32 %v3679, %v3754
        %v3780 = vadd.f32 %v3680, %v3755
        %v3781 = vadd.f32 %v3681, %v3756
        %v3782 = vadd.f32 %v3682, %v3757
        %v3783 = vadd.f32 %v3683, %v3758
        %v3784 = vadd.f32 %v3684, %v3759
        %v3785 = vadd.f32 %v3685, %v3760
        %v3786 = vadd.f32 %v3686, %v3761
        %v3787 = vadd.f32 %v3687, %v3762
        %v3788 = vadd.f32 %v3688, %v3763
        %v3789 = vadd.f32 %v3689, %v3764
        %v3790 = vadd.f32 %v3690, %v3765
        %v3791 = vadd.f32 %v3691, %v3766
        %v3792 = vadd.f32 %v3692, %v3767
        %v3793 = vadd.f32 %v3693, %v3768
        %v3794 = vadd.f32 %v3694, %v3769
        %v3795 = vadd.f32 %v3695, %v3770
        %v3796 = vadd.f32 %v3696, %v3771
        %v3797 = vadd.f32 %v3697, %v3772
        %v3798 = vadd.f32 %v3698, %v3773
        %v3799 = vadd.f32 %v3699, %v3774
        %v3800 = vadd.f32 %v3700, %v3775
        %v3801 = vadd.f32 %v3701, %v3776
        %v3802 = vadd.f32 %v3702, %v3777
        %v3803 = vld [vmem:[%s8] sm:$0x1]
        %v3805 = vlaneseq
        %v3806 = vshrl.u32 %v3805, 7
        %v3807 = vsub.s32 0, %v3806
        %v3808 = vrot.slane %v3803, %v3807
        %v3810 = vadd.f32 %v3778, %v3808
        %v3811 = vadd.f32 %v3779, %v3808
        %v3812 = vadd.f32 %v3780, %v3808
        %v3813 = vadd.f32 %v3781, %v3808
        %v3814 = vadd.f32 %v3782, %v3808
        %v3815 = vadd.f32 %v3783, %v3808
        %v3816 = vadd.f32 %v3784, %v3808
        %v3817 = vadd.f32 %v3785, %v3808
        %v3818 = vadd.f32 %v3786, %v3808
        %v3819 = vadd.f32 %v3787, %v3808
        %v3820 = vadd.f32 %v3788, %v3808
        %v3821 = vadd.f32 %v3789, %v3808
        %v3822 = vadd.f32 %v3790, %v3808
        %v3823 = vadd.f32 %v3791, %v3808
        %v3824 = vadd.f32 %v3792, %v3808
        %v3825 = vadd.f32 %v3793, %v3808
        %v3826 = vadd.f32 %v3794, %v3808
        %v3827 = vadd.f32 %v3795, %v3808
        %v3828 = vadd.f32 %v3796, %v3808
        %v3829 = vadd.f32 %v3797, %v3808
        %v3830 = vadd.f32 %v3798, %v3808
        %v3831 = vadd.f32 %v3799, %v3808
        %v3832 = vadd.f32 %v3800, %v3808
        %v3833 = vadd.f32 %v3801, %v3808
        %v3834 = vadd.f32 %v3802, %v3808
        %3835 = vst [vmem:[%s326] sm:$0xff] %v3810
        %3836 = vst [vmem:[%s326 + $0x8] sm:$0xff] %v3811
        %3837 = vst [vmem:[%s326 + $0x10] sm:$0xff] %v3812
        %3838 = vst [vmem:[%s326 + $0x18] sm:$0xff] %v3813
        %3839 = vst [vmem:[%s326 + $0x20] sm:$0xff] %v3814
        %3840 = vst [vmem:[%s326 + $0x28] sm:$0xff] %v3815
        %3841 = vst [vmem:[%s326 + $0x30] sm:$0xff] %v3816
        %3842 = vst [vmem:[%s326 + $0x38] sm:$0xff] %v3817
        %3843 = vst [vmem:[%s326 + $0x40] sm:$0xff] %v3818
        %3844 = vst [vmem:[%s326 + $0x48] sm:$0xff] %v3819
        %3845 = vst [vmem:[%s326 + $0x50] sm:$0xff] %v3820
        %3846 = vst [vmem:[%s326 + $0x58] sm:$0xff] %v3821
        %3847 = vst [vmem:[%s326 + $0x60] sm:$0xff] %v3822
        %3848 = vst [vmem:[%s326 + $0x68] sm:$0xff] %v3823
        %3849 = vst [vmem:[%s326 + $0x70] sm:$0xff] %v3824
        %3850 = vst [vmem:[%s326 + $0x78] sm:$0xff] %v3825
        %3851 = vst [vmem:[%s326 + $0x80] sm:$0xff] %v3826
        %3852 = vst [vmem:[%s326 + $0x88] sm:$0xff] %v3827
        %3853 = vst [vmem:[%s326 + $0x90] sm:$0xff] %v3828
        %3854 = vst [vmem:[%s326 + $0x98] sm:$0xff] %v3829
        %3855 = vst [vmem:[%s326 + $0xa0] sm:$0xff] %v3830
        %3856 = vst [vmem:[%s326 + $0xa8] sm:$0xff] %v3831
        %3857 = vst [vmem:[%s326 + $0xb0] sm:$0xff] %v3832
        %3858 = vst [vmem:[%s326 + $0xb8] sm:$0xff] %v3833
        %3859 = vst [vmem:[%s326 + $0xc0] sm:$0xff] %v3834
        %s3860 = sand.u32 %s225, 1
        %s3861 = scalar_lea.sflag [#allocation3], %s3860
        %s3862 = sand.u32 %s225, 1
        %s3863 = smul.addr %s3862, 200
        %s3864 = scalar_lea.vmem [#allocation2], %s3863
        // Predicated region
        $region57: #{tpu_custom_call.1} parent=55 // pred_check
          %p3865 = pneg %p235
        $region58: #{tpu_custom_call.1} parent=55 // pred_check_branch
          %3867 = sbr.rel (%p3865) target = $region60
        $region59: #{tpu_custom_call.1} parent=55 // pred_region
          %s3868 = smul.u32 25, %s23
          %s3870 = ssub.s32 3200, 3200
          %3871 = vsyncadd %s3861, %s3870
          %s3872 = smul.addr %s3868, 128
          %s3873 = scalar_lea.hbm %s9, %s3872
          %s3874 = sshll.u32 %s3864, 4
          %s3875 = int_to_ptr.vmem [resolvable:$true] %s3874
          %3880 = dma.vmem_to_hbm [thread:$0]  %s3875, 3200, %s3873, %s3861, 128, 128, 8
        $region60: #{tpu_custom_call.1} parent=55 // pred_fallthru
          _
      $region56: #{tpu_custom_call.1} parent=5 // pred_fallthru
        _
      %p3881 = scmp.le.s32.totalorder 2, %s18
      // Predicated region
      $region61: #{tpu_custom_call.1} parent=5 // pred_check
        %p3882 = pneg %p3881
      $region62: #{tpu_custom_call.1} parent=5 // pred_check_branch
        %3884 = sbr.rel (%p3882) target = $region64
      $region63: #{tpu_custom_call.1} parent=5 // pred_region
        %s3885 = ssub.s32 %s18, 2
        // Predicated region
        $region65: #{tpu_custom_call.1} parent=63 // pred_check
          %p3886 = pneg %p241
        $region66: #{tpu_custom_call.1} parent=63 // pred_check_branch
          %3888 = sbr.rel (%p3886) target = $region68
        $region67: #{tpu_custom_call.1} parent=63 // pred_region
          %s3889 = sand.u32 %s226, 1
          %s3890 = scalar_lea.sflag [#allocation3], %s3889
          %s3891 = sand.u32 %s226, 1
          %s3892 = smul.addr %s3891, 200
          %s3893 = scalar_lea.vmem [#allocation2], %s3892
          %3894 = dma.done %s3890, 3200
        $region68: #{tpu_custom_call.1} parent=63 // pred_fallthru
          _
      $region64: #{tpu_custom_call.1} parent=5 // pred_fallthru
        _
    $region6: #{tpu_custom_call.1} parent=1 // loop_footer
      %s22 = sadd.s32 1, %s18
    $region7: #{tpu_custom_call.1} parent=1 // loop_footer_branch
      %17 = sbr.rel target = $region3
    $region8: #{tpu_custom_call.1} parent=1 // loop_exit
      _
    %3895 = vsyncpa [#allocation3], 1
    %s3896 = scalar_lea.sflag [#allocation3], 1
    %3897 = vsyncpa %s3896, 1

</llo_original>
